<compile_context>
chip_gen: v7x
topology: tpu7x:2x2x1
jax: 0.10.0
libtpu: 0.0.40
codegen_flags: <defaults>
</compile_context>

<pallas_src>
import functools

import jax
import jax.numpy as jnp
import numpy as np
from jax.experimental import pallas as pl
from jax.experimental.pallas import tpu as pltpu


# ----------------------------- Pallas kernel ------------------------------- #

def birnn_kernel(*refs, seq_len, batch, hidden, num_layers):
    """Fused: num_layers x bidirectional LSTM + final fc, one invocation."""
    T, Bp, H = seq_len, batch, hidden
    G2, G8 = 2 * H, 8 * H

    x_ref = refs[0]
    layer_refs = refs[1:1 + 3 * num_layers]          # (wih, wblk, b) per layer
    fcw_ref = refs[1 + 3 * num_layers]
    fcb_ref = refs[2 + 3 * num_layers]
    logits_ref = refs[3 + 3 * num_layers]
    zx_scr = refs[4 + 3 * num_layers]                # (T*Bp, 8H) hoisted x-proj
    seq_scr = refs[5 + 3 * num_layers]               # (T*Bp, 2H) inter-layer act

    # Interleaved gate layout: [i_f i_b | f_f f_b | g_f g_b | o_f o_b].
    fwd8 = (jax.lax.broadcasted_iota(jnp.int32, (1, G8), 1) % G2) < H
    fwd2 = jax.lax.broadcasted_iota(jnp.int32, (1, G2), 1) < H

    h = jnp.zeros((Bp, G2), jnp.float32)
    h_at_last_time = h
    for layer in range(num_layers):
        wih_ref = layer_refs[3 * layer]              # (Din, 8H) interleaved
        wblk_ref = layer_refs[3 * layer + 1]         # (2H, 8H) block-diagonal
        b_ref = layer_refs[3 * layer + 2]            # (1, 8H)
        last = layer == num_layers - 1

        xin = x_ref[...] if layer == 0 else seq_scr[...]      # (T*Bp, Din)

        # Hoisted input projection for ALL timesteps and BOTH directions:
        # one (T*Bp, Din) @ (Din, 8H) MXU matmul, bias folded in.
        zx = jnp.dot(xin, wih_ref[...],
                     preferred_element_type=jnp.float32) + b_ref[...]

        # Pre-flip the backward gate columns along time so every recurrence
        # step reads a single contiguous, sublane-aligned (Bp, 8H) row block.
        for t in range(T):
            rf, rb = t * Bp, (T - 1 - t) * Bp
            zx_scr[rf:rf + Bp, :] = jnp.where(
                fwd8, zx[rf:rf + Bp, :], zx[rb:rb + Bp, :])

        wblk = wblk_ref[...]                         # hoisted out of the loop
        h = jnp.zeros((Bp, G2), jnp.float32)
        c = jnp.zeros((Bp, G2), jnp.float32)
        for s in range(T):                           # unrolled: T is static
            r = s * Bp
            # One recurrent matmul for both directions (block-diag W_hh).
            z = zx_scr[r:r + Bp, :] + jnp.dot(
                h, wblk, preferred_element_type=jnp.float32)
            gi = jax.nn.sigmoid(z[:, 0:G2])
            gf = jax.nn.sigmoid(z[:, G2:2 * G2])
            gg = jnp.tanh(z[:, 2 * G2:3 * G2])
            go = jax.nn.sigmoid(z[:, 3 * G2:4 * G2])
            c = gf * c + gi * gg
            h = go * jnp.tanh(c)
            if not last:
                rb = (T - 1 - s) * Bp
                seq_scr[r:r + Bp, 0:H] = h[:, 0:H]       # fwd h of time s
                seq_scr[rb:rb + Bp, H:G2] = h[:, H:G2]   # bwd h of time T-1-s
            elif s == 0:
                h_at_last_time = h           # bwd half == h_b at time T-1

    # out[:, -1, :] == [h_f(T-1) | h_b(T-1)]  ->  single K=2H fc matmul.
    last_cat = jnp.where(fwd2, h, h_at_last_time)          # (Bp, 2H)
    logits_ref[...] = (jnp.dot(last_cat, fcw_ref[...],
                               preferred_element_type=jnp.float32)
                       + fcb_ref[...])


# ------------------------------ Pallas wrapper ------------------------------ #

def birnn_forward(kparams, tokens, hidden_size, num_layers):
    B, T = tokens.shape
    H = hidden_size
    E = kparams["embed"].shape[1]
    V = kparams["fc_w_t"].shape[1]
    Bp = ((B + 7) // 8) * 8                  # pad batch to f32 sublane count

    # TODO(synk): embedding gather (data-dependent lookup) stays in plain JAX.
    ids = jnp.reshape(jnp.transpose(tokens), (-1,))               # time-major
    x = jnp.take(kparams["embed"], ids, axis=0).astype(jnp.float32)  # (T*B, E)
    if Bp != B:
        x = jnp.pad(x.reshape(T, B, E), ((0, 0), (0, Bp - B), (0, 0)))
    x = x.reshape(T * Bp, E)

    inputs = [x]
    for lp in kparams["layers"]:
        inputs += [lp["wih"], lp["wblk"], lp["b"]]
    inputs += [kparams["fc_w_t"], kparams["fc_b"]]

    kernel = functools.partial(birnn_kernel, seq_len=T, batch=Bp,
                               hidden=H, num_layers=num_layers)
    logits = pl.pallas_call(
        kernel,
        out_shape=jax.ShapeDtypeStruct((Bp, V), jnp.float32),
        scratch_shapes=[pltpu.VMEM((T * Bp, 8 * H), jnp.float32),
                        pltpu.VMEM((T * Bp, 2 * H), jnp.float32)],
    )(*inputs)
    return logits[:B]                                             # (B, vocab)


# --------------------------- Param init / packing --------------------------- #

def init_raw_params(key, vocab_size, embed_size, hidden_size, num_layers):
    """PyTorch-layout parameters (used directly by the pure-JAX reference)."""
    H = hidden_size
    k = 1.0 / np.sqrt(H)
    keys = iter(jax.random.split(key, 1 + num_layers * 2 * 4 + 2))

    raw = {"embed": jax.random.normal(next(keys), (vocab_size, embed_size),
                                      jnp.float32)}
    lstm = []
    for layer in range(num_layers):
        in_size = embed_size if layer == 0 else 2 * H
        lp = {}
        for d in ("fwd", "bwd"):
            wih = jax.random.uniform(next(keys), (4 * H, in_size), jnp.float32, -k, k)
            whh = jax.random.uniform(next(keys), (4 * H, H), jnp.float32, -k, k)
            bih = jax.random.uniform(next(keys), (4 * H,), jnp.float32, -k, k)
            bhh = jax.random.uniform(next(keys), (4 * H,), jnp.float32, -k, k)
            lp[d] = (wih, whh, bih, bhh)
        lstm.append(lp)
    raw["lstm"] = lstm
    kf = 1.0 / np.sqrt(2 * H)
    raw["fc_w"] = jax.random.uniform(next(keys), (vocab_size, 2 * H), jnp.float32, -kf, kf)
    raw["fc_b"] = jax.random.uniform(next(keys), (vocab_size,), jnp.float32, -kf, kf)
    return raw


def _interleave_gate_cols(a_f, a_b, H):
    """[i f g o]-ordered fwd/bwd columns -> [i_f i_b | f_f f_b | g_f g_b | o_f o_b]."""
    lead = a_f.shape[:-1]
    af = a_f.reshape(lead + (4, H))
    ab = a_b.reshape(lead + (4, H))
    return jnp.stack([af, ab], axis=-2).reshape(lead + (8 * H,))


def pack_params(raw, hidden_size):
    """One-time weight repacking into the kernel layout (no per-forward work)."""
    H = hidden_size
    layers = []
    for lp in raw["lstm"]:
        wih_f, whh_f, bih_f, bhh_f = lp["fwd"]
        wih_b, whh_b, bih_b, bhh_b = lp["bwd"]
        wih = _interleave_gate_cols(wih_f.T, wih_b.T, H)             # (Din, 8H)
        b = _interleave_gate_cols((bih_f + bhh_f)[None, :],
                                  (bih_b + bhh_b)[None, :], H)       # (1, 8H)
        zeros = jnp.zeros((H, 4 * H), jnp.float32)
        wblk = jnp.concatenate(
            [_interleave_gate_cols(whh_f.T, zeros, H),
             _interleave_gate_cols(zeros, whh_b.T, H)], axis=0)      # (2H, 8H)
        layers.append({"wih": wih, "wblk": wblk, "b": b})
    return {"embed": raw["embed"], "layers": layers,
            "fc_w_t": raw["fc_w"].T, "fc_b": raw["fc_b"][None, :]}


# ------------------------------- Pure-JAX ref ------------------------------- #

def _lstm_dir_ref(x_seq, wih, whh, bih, bhh, H):
    hp = jax.lax.Precision.HIGHEST

    def step(carry, x_t):
        h, c = carry
        z = (jnp.dot(x_t, wih.T, precision=hp)
             + jnp.dot(h, whh.T, precision=hp) + bih + bhh)
        i = jax.nn.sigmoid(z[:, :H])
        f = jax.nn.sigmoid(z[:, H:2 * H])
        g = jnp.tanh(z[:, 2 * H:3 * H])
        o = jax.nn.sigmoid(z[:, 3 * H:])
        c = f * c + i * g
        h = o * jnp.tanh(c)
        return (h, c), h

    B = x_seq.shape[1]
    h0 = jnp.zeros((B, H), jnp.float32)
    c0 = jnp.zeros((B, H), jnp.float32)
    _, hs = jax.lax.scan(step, (h0, c0), x_seq)
    return hs


def birnn_forward_ref(raw, tokens, hidden_size, num_layers):
    H = hidden_size
    emb = jnp.take(raw["embed"], tokens, axis=0)
    x = jnp.transpose(emb, (1, 0, 2)).astype(jnp.float32)     # (T, B, E)
    for layer in range(num_layers):
        lp = raw["lstm"][layer]
        fwd = _lstm_dir_ref(x, *lp["fwd"], H)
        bwd = jnp.flip(_lstm_dir_ref(jnp.flip(x, axis=0), *lp["bwd"], H), axis=0)
        x = jnp.concatenate([fwd, bwd], axis=-1)
    last = x[-1]
    hp = jax.lax.Precision.HIGHEST
    return jnp.dot(last, raw["fc_w"].T, precision=hp) + raw["fc_b"]


# ----------------------------------- main ----------------------------------- #

if __name__ == "__main__":
    vocab_size, embed_size, hidden_size, num_layers = 128, 32, 32, 2
    B, T = 2, 8

    key = jax.random.PRNGKey(0)
    k_tok, k_par = jax.random.split(key)
    tokens = jax.random.randint(k_tok, (B, T), 0, vocab_size, dtype=jnp.int32)

    raw = init_raw_params(k_par, vocab_size, embed_size, hidden_size, num_layers)
    kparams = pack_params(raw, hidden_size)          # precomputed once

    fwd = jax.jit(birnn_forward, static_argnums=(2, 3))
    out = jax.block_until_ready(fwd(kparams, tokens, hidden_size, num_layers))
    assert out.shape == (B, vocab_size), out.shape

    ref = birnn_forward_ref(raw, tokens, hidden_size, num_layers)
    np.testing.assert_allclose(np.asarray(out), np.asarray(ref),
                               atol=1e-2, rtol=1e-2)
    print("KERNEL_OK")
</pallas_src>

<mosaic_0001>
module attributes {stable_mosaic.version = 11 : i64} {
  func.func @birnn_kernel(%arg0: memref<64x32xf32, #tpu.memory_space<vmem>>, %arg1: memref<32x256xf32, #tpu.memory_space<vmem>>, %arg2: memref<64x256xf32, #tpu.memory_space<vmem>>, %arg3: memref<1x256xf32, #tpu.memory_space<vmem>>, %arg4: memref<64x256xf32, #tpu.memory_space<vmem>>, %arg5: memref<64x256xf32, #tpu.memory_space<vmem>>, %arg6: memref<1x256xf32, #tpu.memory_space<vmem>>, %arg7: memref<64x128xf32, #tpu.memory_space<vmem>>, %arg8: memref<1x128xf32, #tpu.memory_space<vmem>>, %arg9: memref<8x128xf32, #tpu.memory_space<vmem>>, %arg10: memref<64x256xf32, #tpu.memory_space<vmem>>, %arg11: memref<64x64xf32, #tpu.memory_space<vmem>>) attributes {dimension_semantics = [], scalar_prefetch = 0 : i64, scratch_operands = 2 : i64, tpu.core_type = #tpu.core_type<tc>} {
    %0 = tpu.iota {dimensions = array<i32: 1>} : vector<1x256xi32>
    %c64_i32 = arith.constant 64 : i32
    %c0_i32 = arith.constant 0 : i32
    %1 = arith.cmpi eq, %c64_i32, %c0_i32 : i32
    %c1_i32 = arith.constant 1 : i32
    %2 = arith.select %1, %c1_i32, %c64_i32 : i32
    %3 = vector.broadcast %2 : i32 to vector<1x256xi32>
    %4 = arith.remsi %0, %3 : vector<1x256xi32>
    %c0_i32_0 = arith.constant 0 : i32
    %5 = vector.broadcast %c0_i32_0 : i32 to vector<1x256xi32>
    %6 = arith.cmpi ne, %4, %5 : vector<1x256xi32>
    %c0_i32_1 = arith.constant 0 : i32
    %7 = vector.broadcast %c0_i32_1 : i32 to vector<1x256xi32>
    %8 = arith.cmpi slt, %4, %7 : vector<1x256xi32>
    %c0_i32_2 = arith.constant 0 : i32
    %9 = arith.cmpi slt, %2, %c0_i32_2 : i32
    %10 = vector.broadcast %9 : i1 to vector<1x256xi1>
    %11 = vector.broadcast %10 : vector<1x256xi1> to vector<1x256xi1>
    %12 = arith.xori %8, %11 : vector<1x256xi1>
    %13 = arith.andi %12, %6 : vector<1x256xi1>
    %14 = vector.broadcast %2 : i32 to vector<1x256xi32>
    %15 = arith.addi %4, %14 : vector<1x256xi32>
    %16 = arith.select %13, %15, %4 : vector<1x256xi1>, vector<1x256xi32>
    %c32_i32 = arith.constant 32 : i32
    %17 = vector.broadcast %c32_i32 : i32 to vector<1x256xi32>
    %18 = arith.cmpi slt, %16, %17 : vector<1x256xi32>
    %19 = tpu.iota {dimensions = array<i32: 1>} : vector<1x64xi32>
    %c32_i32_3 = arith.constant 32 : i32
    %20 = vector.broadcast %c32_i32_3 : i32 to vector<1x64xi32>
    %21 = arith.cmpi slt, %19, %20 : vector<1x64xi32>
    %c0 = arith.constant 0 : index
    %c0_4 = arith.constant 0 : index
    %22 = vector.load %arg0[%c0, %c0_4] : memref<64x32xf32, #tpu.memory_space<vmem>>, vector<64x32xf32>
    %c0_5 = arith.constant 0 : index
    %c0_6 = arith.constant 0 : index
    %23 = vector.load %arg1[%c0_5, %c0_6] : memref<32x256xf32, #tpu.memory_space<vmem>>, vector<32x256xf32>
    %cst = arith.constant dense<0.000000e+00> : vector<64x256xf32>
    %24 = tpu.matmul %22, %23, %cst {dimension_numbers = #tpu.dot_dimension_numbers<[1], [0], [0], [1], [0, 0, 1, 1], [], []>} : vector<64x32xf32>, vector<32x256xf32>, vector<64x256xf32> -> vector<64x256xf32>
    %c0_7 = arith.constant 0 : index
    %c0_8 = arith.constant 0 : index
    %25 = vector.load %arg3[%c0_7, %c0_8] : memref<1x256xf32, #tpu.memory_space<vmem>>, vector<1x256xf32>
    %26 = vector.broadcast %25 : vector<1x256xf32> to vector<64x256xf32>
    %27 = arith.addf %24, %26 : vector<64x256xf32>
    %28 = vector.extract_strided_slice %27 {offsets = [0, 0], sizes = [8, 256], strides = [1, 1]} : vector<64x256xf32> to vector<8x256xf32>
    %29 = vector.extract_strided_slice %27 {offsets = [56, 0], sizes = [8, 256], strides = [1, 1]} : vector<64x256xf32> to vector<8x256xf32>
    %30 = vector.shape_cast %18 : vector<1x256xi1> to vector<1x256xi1>
    %31 = vector.broadcast %30 : vector<1x256xi1> to vector<8x256xi1>
    %32 = arith.select %31, %28, %29 : vector<8x256xi1>, vector<8x256xf32>
    %c0_9 = arith.constant 0 : index
    %c0_10 = arith.constant 0 : index
    %33 = vector.load %arg10[%c0_9, %c0_10] : memref<64x256xf32, #tpu.memory_space<vmem>>, vector<8x256xf32>
    tpu.vector_store %arg10[%c0_9, %c0_10], %32 {strides = array<i32>} : memref<64x256xf32, #tpu.memory_space<vmem>>, vector<8x256xf32>,
    %34 = vector.extract_strided_slice %27 {offsets = [8, 0], sizes = [8, 256], strides = [1, 1]} : vector<64x256xf32> to vector<8x256xf32>
    %35 = vector.extract_strided_slice %27 {offsets = [48, 0], sizes = [8, 256], strides = [1, 1]} : vector<64x256xf32> to vector<8x256xf32>
    %36 = vector.shape_cast %18 : vector<1x256xi1> to vector<1x256xi1>
    %37 = vector.broadcast %36 : vector<1x256xi1> to vector<8x256xi1>
    %38 = arith.select %37, %34, %35 : vector<8x256xi1>, vector<8x256xf32>
    %c8 = arith.constant 8 : index
    %c0_11 = arith.constant 0 : index
    %39 = vector.load %arg10[%c8, %c0_11] : memref<64x256xf32, #tpu.memory_space<vmem>>, vector<8x256xf32>
    tpu.vector_store %arg10[%c8, %c0_11], %38 {strides = array<i32>} : memref<64x256xf32, #tpu.memory_space<vmem>>, vector<8x256xf32>,
    %40 = vector.extract_strided_slice %27 {offsets = [16, 0], sizes = [8, 256], strides = [1, 1]} : vector<64x256xf32> to vector<8x256xf32>
    %41 = vector.extract_strided_slice %27 {offsets = [40, 0], sizes = [8, 256], strides = [1, 1]} : vector<64x256xf32> to vector<8x256xf32>
    %42 = vector.shape_cast %18 : vector<1x256xi1> to vector<1x256xi1>
    %43 = vector.broadcast %42 : vector<1x256xi1> to vector<8x256xi1>
    %44 = arith.select %43, %40, %41 : vector<8x256xi1>, vector<8x256xf32>
    %c16 = arith.constant 16 : index
    %c0_12 = arith.constant 0 : index
    %45 = vector.load %arg10[%c16, %c0_12] : memref<64x256xf32, #tpu.memory_space<vmem>>, vector<8x256xf32>
    tpu.vector_store %arg10[%c16, %c0_12], %44 {strides = array<i32>} : memref<64x256xf32, #tpu.memory_space<vmem>>, vector<8x256xf32>,
    %46 = vector.extract_strided_slice %27 {offsets = [24, 0], sizes = [8, 256], strides = [1, 1]} : vector<64x256xf32> to vector<8x256xf32>
    %47 = vector.extract_strided_slice %27 {offsets = [32, 0], sizes = [8, 256], strides = [1, 1]} : vector<64x256xf32> to vector<8x256xf32>
    %48 = vector.shape_cast %18 : vector<1x256xi1> to vector<1x256xi1>
    %49 = vector.broadcast %48 : vector<1x256xi1> to vector<8x256xi1>
    %50 = arith.select %49, %46, %47 : vector<8x256xi1>, vector<8x256xf32>
    %c24 = arith.constant 24 : index
    %c0_13 = arith.constant 0 : index
    %51 = vector.load %arg10[%c24, %c0_13] : memref<64x256xf32, #tpu.memory_space<vmem>>, vector<8x256xf32>
    tpu.vector_store %arg10[%c24, %c0_13], %50 {strides = array<i32>} : memref<64x256xf32, #tpu.memory_space<vmem>>, vector<8x256xf32>,
    %52 = vector.extract_strided_slice %27 {offsets = [32, 0], sizes = [8, 256], strides = [1, 1]} : vector<64x256xf32> to vector<8x256xf32>
    %53 = vector.extract_strided_slice %27 {offsets = [24, 0], sizes = [8, 256], strides = [1, 1]} : vector<64x256xf32> to vector<8x256xf32>
    %54 = vector.shape_cast %18 : vector<1x256xi1> to vector<1x256xi1>
    %55 = vector.broadcast %54 : vector<1x256xi1> to vector<8x256xi1>
    %56 = arith.select %55, %52, %53 : vector<8x256xi1>, vector<8x256xf32>
    %c32 = arith.constant 32 : index
    %c0_14 = arith.constant 0 : index
    %57 = vector.load %arg10[%c32, %c0_14] : memref<64x256xf32, #tpu.memory_space<vmem>>, vector<8x256xf32>
    tpu.vector_store %arg10[%c32, %c0_14], %56 {strides = array<i32>} : memref<64x256xf32, #tpu.memory_space<vmem>>, vector<8x256xf32>,
    %58 = vector.extract_strided_slice %27 {offsets = [40, 0], sizes = [8, 256], strides = [1, 1]} : vector<64x256xf32> to vector<8x256xf32>
    %59 = vector.extract_strided_slice %27 {offsets = [16, 0], sizes = [8, 256], strides = [1, 1]} : vector<64x256xf32> to vector<8x256xf32>
    %60 = vector.shape_cast %18 : vector<1x256xi1> to vector<1x256xi1>
    %61 = vector.broadcast %60 : vector<1x256xi1> to vector<8x256xi1>
    %62 = arith.select %61, %58, %59 : vector<8x256xi1>, vector<8x256xf32>
    %c40 = arith.constant 40 : index
    %c0_15 = arith.constant 0 : index
    %63 = vector.load %arg10[%c40, %c0_15] : memref<64x256xf32, #tpu.memory_space<vmem>>, vector<8x256xf32>
    tpu.vector_store %arg10[%c40, %c0_15], %62 {strides = array<i32>} : memref<64x256xf32, #tpu.memory_space<vmem>>, vector<8x256xf32>,
    %64 = vector.extract_strided_slice %27 {offsets = [48, 0], sizes = [8, 256], strides = [1, 1]} : vector<64x256xf32> to vector<8x256xf32>
    %65 = vector.extract_strided_slice %27 {offsets = [8, 0], sizes = [8, 256], strides = [1, 1]} : vector<64x256xf32> to vector<8x256xf32>
    %66 = vector.shape_cast %18 : vector<1x256xi1> to vector<1x256xi1>
    %67 = vector.broadcast %66 : vector<1x256xi1> to vector<8x256xi1>
    %68 = arith.select %67, %64, %65 : vector<8x256xi1>, vector<8x256xf32>
    %c48 = arith.constant 48 : index
    %c0_16 = arith.constant 0 : index
    %69 = vector.load %arg10[%c48, %c0_16] : memref<64x256xf32, #tpu.memory_space<vmem>>, vector<8x256xf32>
    tpu.vector_store %arg10[%c48, %c0_16], %68 {strides = array<i32>} : memref<64x256xf32, #tpu.memory_space<vmem>>, vector<8x256xf32>,
    %70 = vector.extract_strided_slice %27 {offsets = [56, 0], sizes = [8, 256], strides = [1, 1]} : vector<64x256xf32> to vector<8x256xf32>
    %71 = vector.extract_strided_slice %27 {offsets = [0, 0], sizes = [8, 256], strides = [1, 1]} : vector<64x256xf32> to vector<8x256xf32>
    %72 = vector.shape_cast %18 : vector<1x256xi1> to vector<1x256xi1>
    %73 = vector.broadcast %72 : vector<1x256xi1> to vector<8x256xi1>
    %74 = arith.select %73, %70, %71 : vector<8x256xi1>, vector<8x256xf32>
    %c56 = arith.constant 56 : index
    %c0_17 = arith.constant 0 : index
    %75 = vector.load %arg10[%c56, %c0_17] : memref<64x256xf32, #tpu.memory_space<vmem>>, vector<8x256xf32>
    tpu.vector_store %arg10[%c56, %c0_17], %74 {strides = array<i32>} : memref<64x256xf32, #tpu.memory_space<vmem>>, vector<8x256xf32>,
    %c0_18 = arith.constant 0 : index
    %c0_19 = arith.constant 0 : index
    %76 = vector.load %arg2[%c0_18, %c0_19] : memref<64x256xf32, #tpu.memory_space<vmem>>, vector<64x256xf32>
    %cst_20 = arith.constant 0.000000e+00 : f32
    %77 = vector.broadcast %cst_20 : f32 to vector<8x64xf32>
    %cst_21 = arith.constant 0.000000e+00 : f32
    %78 = vector.broadcast %cst_21 : f32 to vector<8x64xf32>
    %c0_22 = arith.constant 0 : index
    %c0_23 = arith.constant 0 : index
    %79 = vector.load %arg10[%c0_22, %c0_23] : memref<64x256xf32, #tpu.memory_space<vmem>>, vector<8x256xf32>
    %cst_24 = arith.constant dense<0.000000e+00> : vector<8x256xf32>
    %80 = tpu.matmul %77, %76, %cst_24 {dimension_numbers = #tpu.dot_dimension_numbers<[1], [0], [0], [1], [0, 0, 1, 1], [], []>} : vector<8x64xf32>, vector<64x256xf32>, vector<8x256xf32> -> vector<8x256xf32>
    %81 = arith.addf %79, %80 : vector<8x256xf32>
    %82 = vector.extract_strided_slice %81 {offsets = [0, 0], sizes = [8, 64], strides = [1, 1]} : vector<8x256xf32> to vector<8x64xf32>
    %83 = arith.negf %82 : vector<8x64xf32>
    %84 = math.exp %83 : vector<8x64xf32>
    %cst_25 = arith.constant 1.000000e+00 : f32
    %85 = vector.broadcast %cst_25 : f32 to vector<8x64xf32>
    %86 = arith.addf %85, %84 : vector<8x64xf32>
    %87 = arith.divf %85, %86 : vector<8x64xf32>
    %88 = vector.extract_strided_slice %81 {offsets = [0, 64], sizes = [8, 64], strides = [1, 1]} : vector<8x256xf32> to vector<8x64xf32>
    %89 = arith.negf %88 : vector<8x64xf32>
    %90 = math.exp %89 : vector<8x64xf32>
    %cst_26 = arith.constant 1.000000e+00 : f32
    %91 = vector.broadcast %cst_26 : f32 to vector<8x64xf32>
    %92 = arith.addf %91, %90 : vector<8x64xf32>
    %93 = arith.divf %91, %92 : vector<8x64xf32>
    %94 = vector.extract_strided_slice %81 {offsets = [0, 128], sizes = [8, 64], strides = [1, 1]} : vector<8x256xf32> to vector<8x64xf32>
    %95 = math.tanh %94 : vector<8x64xf32>
    %96 = vector.extract_strided_slice %81 {offsets = [0, 192], sizes = [8, 64], strides = [1, 1]} : vector<8x256xf32> to vector<8x64xf32>
    %97 = arith.negf %96 : vector<8x64xf32>
    %98 = math.exp %97 : vector<8x64xf32>
    %cst_27 = arith.constant 1.000000e+00 : f32
    %99 = vector.broadcast %cst_27 : f32 to vector<8x64xf32>
    %100 = arith.addf %99, %98 : vector<8x64xf32>
    %101 = arith.divf %99, %100 : vector<8x64xf32>
    %102 = arith.mulf %93, %78 : vector<8x64xf32>
    %103 = arith.mulf %87, %95 : vector<8x64xf32>
    %104 = arith.addf %102, %103 : vector<8x64xf32>
    %105 = math.tanh %104 : vector<8x64xf32>
    %106 = arith.mulf %101, %105 : vector<8x64xf32>
    %107 = vector.extract_strided_slice %106 {offsets = [0, 0], sizes = [8, 32], strides = [1, 1]} : vector<8x64xf32> to vector<8x32xf32>
    %c0_28 = arith.constant 0 : index
    %c0_29 = arith.constant 0 : index
    %108 = vector.load %arg11[%c0_28, %c0_29] : memref<64x64xf32, #tpu.memory_space<vmem>>, vector<8x32xf32>
    tpu.vector_store %arg11[%c0_28, %c0_29], %107 {strides = array<i32>} : memref<64x64xf32, #tpu.memory_space<vmem>>, vector<8x32xf32>,
    %109 = vector.extract_strided_slice %106 {offsets = [0, 32], sizes = [8, 32], strides = [1, 1]} : vector<8x64xf32> to vector<8x32xf32>
    %c56_30 = arith.constant 56 : index
    %c32_31 = arith.constant 32 : index
    %110 = vector.load %arg11[%c56_30, %c32_31] : memref<64x64xf32, #tpu.memory_space<vmem>>, vector<8x32xf32>
    tpu.vector_store %arg11[%c56_30, %c32_31], %109 {strides = array<i32>} : memref<64x64xf32, #tpu.memory_space<vmem>>, vector<8x32xf32>,
    %c8_32 = arith.constant 8 : index
    %c0_33 = arith.constant 0 : index
    %111 = vector.load %arg10[%c8_32, %c0_33] : memref<64x256xf32, #tpu.memory_space<vmem>>, vector<8x256xf32>
    %cst_34 = arith.constant dense<0.000000e+00> : vector<8x256xf32>
    %112 = tpu.matmul %106, %76, %cst_34 {dimension_numbers = #tpu.dot_dimension_numbers<[1], [0], [0], [1], [0, 0, 1, 1], [], []>} : vector<8x64xf32>, vector<64x256xf32>, vector<8x256xf32> -> vector<8x256xf32>
    %113 = arith.addf %111, %112 : vector<8x256xf32>
    %114 = vector.extract_strided_slice %113 {offsets = [0, 0], sizes = [8, 64], strides = [1, 1]} : vector<8x256xf32> to vector<8x64xf32>
    %115 = arith.negf %114 : vector<8x64xf32>
    %116 = math.exp %115 : vector<8x64xf32>
    %cst_35 = arith.constant 1.000000e+00 : f32
    %117 = vector.broadcast %cst_35 : f32 to vector<8x64xf32>
    %118 = arith.addf %117, %116 : vector<8x64xf32>
    %119 = arith.divf %117, %118 : vector<8x64xf32>
    %120 = vector.extract_strided_slice %113 {offsets = [0, 64], sizes = [8, 64], strides = [1, 1]} : vector<8x256xf32> to vector<8x64xf32>
    %121 = arith.negf %120 : vector<8x64xf32>
    %122 = math.exp %121 : vector<8x64xf32>
    %cst_36 = arith.constant 1.000000e+00 : f32
    %123 = vector.broadcast %cst_36 : f32 to vector<8x64xf32>
    %124 = arith.addf %123, %122 : vector<8x64xf32>
    %125 = arith.divf %123, %124 : vector<8x64xf32>
    %126 = vector.extract_strided_slice %113 {offsets = [0, 128], sizes = [8, 64], strides = [1, 1]} : vector<8x256xf32> to vector<8x64xf32>
    %127 = math.tanh %126 : vector<8x64xf32>
    %128 = vector.extract_strided_slice %113 {offsets = [0, 192], sizes = [8, 64], strides = [1, 1]} : vector<8x256xf32> to vector<8x64xf32>
    %129 = arith.negf %128 : vector<8x64xf32>
    %130 = math.exp %129 : vector<8x64xf32>
    %cst_37 = arith.constant 1.000000e+00 : f32
    %131 = vector.broadcast %cst_37 : f32 to vector<8x64xf32>
    %132 = arith.addf %131, %130 : vector<8x64xf32>
    %133 = arith.divf %131, %132 : vector<8x64xf32>
    %134 = arith.mulf %125, %104 : vector<8x64xf32>
    %135 = arith.mulf %119, %127 : vector<8x64xf32>
    %136 = arith.addf %134, %135 : vector<8x64xf32>
    %137 = math.tanh %136 : vector<8x64xf32>
    %138 = arith.mulf %133, %137 : vector<8x64xf32>
    %139 = vector.extract_strided_slice %138 {offsets = [0, 0], sizes = [8, 32], strides = [1, 1]} : vector<8x64xf32> to vector<8x32xf32>
    %c8_38 = arith.constant 8 : index
    %c0_39 = arith.constant 0 : index
    %140 = vector.load %arg11[%c8_38, %c0_39] : memref<64x64xf32, #tpu.memory_space<vmem>>, vector<8x32xf32>
    tpu.vector_store %arg11[%c8_38, %c0_39], %139 {strides = array<i32>} : memref<64x64xf32, #tpu.memory_space<vmem>>, vector<8x32xf32>,
    %141 = vector.extract_strided_slice %138 {offsets = [0, 32], sizes = [8, 32], strides = [1, 1]} : vector<8x64xf32> to vector<8x32xf32>
    %c48_40 = arith.constant 48 : index
    %c32_41 = arith.constant 32 : index
    %142 = vector.load %arg11[%c48_40, %c32_41] : memref<64x64xf32, #tpu.memory_space<vmem>>, vector<8x32xf32>
    tpu.vector_store %arg11[%c48_40, %c32_41], %141 {strides = array<i32>} : memref<64x64xf32, #tpu.memory_space<vmem>>, vector<8x32xf32>,
    %c16_42 = arith.constant 16 : index
    %c0_43 = arith.constant 0 : index
    %143 = vector.load %arg10[%c16_42, %c0_43] : memref<64x256xf32, #tpu.memory_space<vmem>>, vector<8x256xf32>
    %cst_44 = arith.constant dense<0.000000e+00> : vector<8x256xf32>
    %144 = tpu.matmul %138, %76, %cst_44 {dimension_numbers = #tpu.dot_dimension_numbers<[1], [0], [0], [1], [0, 0, 1, 1], [], []>} : vector<8x64xf32>, vector<64x256xf32>, vector<8x256xf32> -> vector<8x256xf32>
    %145 = arith.addf %143, %144 : vector<8x256xf32>
    %146 = vector.extract_strided_slice %145 {offsets = [0, 0], sizes = [8, 64], strides = [1, 1]} : vector<8x256xf32> to vector<8x64xf32>
    %147 = arith.negf %146 : vector<8x64xf32>
    %148 = math.exp %147 : vector<8x64xf32>
    %cst_45 = arith.constant 1.000000e+00 : f32
    %149 = vector.broadcast %cst_45 : f32 to vector<8x64xf32>
    %150 = arith.addf %149, %148 : vector<8x64xf32>
    %151 = arith.divf %149, %150 : vector<8x64xf32>
    %152 = vector.extract_strided_slice %145 {offsets = [0, 64], sizes = [8, 64], strides = [1, 1]} : vector<8x256xf32> to vector<8x64xf32>
    %153 = arith.negf %152 : vector<8x64xf32>
    %154 = math.exp %153 : vector<8x64xf32>
    %cst_46 = arith.constant 1.000000e+00 : f32
    %155 = vector.broadcast %cst_46 : f32 to vector<8x64xf32>
    %156 = arith.addf %155, %154 : vector<8x64xf32>
    %157 = arith.divf %155, %156 : vector<8x64xf32>
    %158 = vector.extract_strided_slice %145 {offsets = [0, 128], sizes = [8, 64], strides = [1, 1]} : vector<8x256xf32> to vector<8x64xf32>
    %159 = math.tanh %158 : vector<8x64xf32>
    %160 = vector.extract_strided_slice %145 {offsets = [0, 192], sizes = [8, 64], strides = [1, 1]} : vector<8x256xf32> to vector<8x64xf32>
    %161 = arith.negf %160 : vector<8x64xf32>
    %162 = math.exp %161 : vector<8x64xf32>
    %cst_47 = arith.constant 1.000000e+00 : f32
    %163 = vector.broadcast %cst_47 : f32 to vector<8x64xf32>
    %164 = arith.addf %163, %162 : vector<8x64xf32>
    %165 = arith.divf %163, %164 : vector<8x64xf32>
    %166 = arith.mulf %157, %136 : vector<8x64xf32>
    %167 = arith.mulf %151, %159 : vector<8x64xf32>
    %168 = arith.addf %166, %167 : vector<8x64xf32>
    %169 = math.tanh %168 : vector<8x64xf32>
    %170 = arith.mulf %165, %169 : vector<8x64xf32>
    %171 = vector.extract_strided_slice %170 {offsets = [0, 0], sizes = [8, 32], strides = [1, 1]} : vector<8x64xf32> to vector<8x32xf32>
    %c16_48 = arith.constant 16 : index
    %c0_49 = arith.constant 0 : index
    %172 = vector.load %arg11[%c16_48, %c0_49] : memref<64x64xf32, #tpu.memory_space<vmem>>, vector<8x32xf32>
    tpu.vector_store %arg11[%c16_48, %c0_49], %171 {strides = array<i32>} : memref<64x64xf32, #tpu.memory_space<vmem>>, vector<8x32xf32>,
    %173 = vector.extract_strided_slice %170 {offsets = [0, 32], sizes = [8, 32], strides = [1, 1]} : vector<8x64xf32> to vector<8x32xf32>
    %c40_50 = arith.constant 40 : index
    %c32_51 = arith.constant 32 : index
    %174 = vector.load %arg11[%c40_50, %c32_51] : memref<64x64xf32, #tpu.memory_space<vmem>>, vector<8x32xf32>
    tpu.vector_store %arg11[%c40_50, %c32_51], %173 {strides = array<i32>} : memref<64x64xf32, #tpu.memory_space<vmem>>, vector<8x32xf32>,
    %c24_52 = arith.constant 24 : index
    %c0_53 = arith.constant 0 : index
    %175 = vector.load %arg10[%c24_52, %c0_53] : memref<64x256xf32, #tpu.memory_space<vmem>>, vector<8x256xf32>
    %cst_54 = arith.constant dense<0.000000e+00> : vector<8x256xf32>
    %176 = tpu.matmul %170, %76, %cst_54 {dimension_numbers = #tpu.dot_dimension_numbers<[1], [0], [0], [1], [0, 0, 1, 1], [], []>} : vector<8x64xf32>, vector<64x256xf32>, vector<8x256xf32> -> vector<8x256xf32>
    %177 = arith.addf %175, %176 : vector<8x256xf32>
    %178 = vector.extract_strided_slice %177 {offsets = [0, 0], sizes = [8, 64], strides = [1, 1]} : vector<8x256xf32> to vector<8x64xf32>
    %179 = arith.negf %178 : vector<8x64xf32>
    %180 = math.exp %179 : vector<8x64xf32>
    %cst_55 = arith.constant 1.000000e+00 : f32
    %181 = vector.broadcast %cst_55 : f32 to vector<8x64xf32>
    %182 = arith.addf %181, %180 : vector<8x64xf32>
    %183 = arith.divf %181, %182 : vector<8x64xf32>
    %184 = vector.extract_strided_slice %177 {offsets = [0, 64], sizes = [8, 64], strides = [1, 1]} : vector<8x256xf32> to vector<8x64xf32>
    %185 = arith.negf %184 : vector<8x64xf32>
    %186 = math.exp %185 : vector<8x64xf32>
    %cst_56 = arith.constant 1.000000e+00 : f32
    %187 = vector.broadcast %cst_56 : f32 to vector<8x64xf32>
    %188 = arith.addf %187, %186 : vector<8x64xf32>
    %189 = arith.divf %187, %188 : vector<8x64xf32>
    %190 = vector.extract_strided_slice %177 {offsets = [0, 128], sizes = [8, 64], strides = [1, 1]} : vector<8x256xf32> to vector<8x64xf32>
    %191 = math.tanh %190 : vector<8x64xf32>
    %192 = vector.extract_strided_slice %177 {offsets = [0, 192], sizes = [8, 64], strides = [1, 1]} : vector<8x256xf32> to vector<8x64xf32>
    %193 = arith.negf %192 : vector<8x64xf32>
    %194 = math.exp %193 : vector<8x64xf32>
    %cst_57 = arith.constant 1.000000e+00 : f32
    %195 = vector.broadcast %cst_57 : f32 to vector<8x64xf32>
    %196 = arith.addf %195, %194 : vector<8x64xf32>
    %197 = arith.divf %195, %196 : vector<8x64xf32>
    %198 = arith.mulf %189, %168 : vector<8x64xf32>
    %199 = arith.mulf %183, %191 : vector<8x64xf32>
    %200 = arith.addf %198, %199 : vector<8x64xf32>
    %201 = math.tanh %200 : vector<8x64xf32>
    %202 = arith.mulf %197, %201 : vector<8x64xf32>
    %203 = vector.extract_strided_slice %202 {offsets = [0, 0], sizes = [8, 32], strides = [1, 1]} : vector<8x64xf32> to vector<8x32xf32>
    %c24_58 = arith.constant 24 : index
    %c0_59 = arith.constant 0 : index
    %204 = vector.load %arg11[%c24_58, %c0_59] : memref<64x64xf32, #tpu.memory_space<vmem>>, vector<8x32xf32>
    tpu.vector_store %arg11[%c24_58, %c0_59], %203 {strides = array<i32>} : memref<64x64xf32, #tpu.memory_space<vmem>>, vector<8x32xf32>,
    %205 = vector.extract_strided_slice %202 {offsets = [0, 32], sizes = [8, 32], strides = [1, 1]} : vector<8x64xf32> to vector<8x32xf32>
    %c32_60 = arith.constant 32 : index
    %c32_61 = arith.constant 32 : index
    %206 = vector.load %arg11[%c32_60, %c32_61] : memref<64x64xf32, #tpu.memory_space<vmem>>, vector<8x32xf32>
    tpu.vector_store %arg11[%c32_60, %c32_61], %205 {strides = array<i32>} : memref<64x64xf32, #tpu.memory_space<vmem>>, vector<8x32xf32>,
    %c32_62 = arith.constant 32 : index
    %c0_63 = arith.constant 0 : index
    %207 = vector.load %arg10[%c32_62, %c0_63] : memref<64x256xf32, #tpu.memory_space<vmem>>, vector<8x256xf32>
    %cst_64 = arith.constant dense<0.000000e+00> : vector<8x256xf32>
    %208 = tpu.matmul %202, %76, %cst_64 {dimension_numbers = #tpu.dot_dimension_numbers<[1], [0], [0], [1], [0, 0, 1, 1], [], []>} : vector<8x64xf32>, vector<64x256xf32>, vector<8x256xf32> -> vector<8x256xf32>
    %209 = arith.addf %207, %208 : vector<8x256xf32>
    %210 = vector.extract_strided_slice %209 {offsets = [0, 0], sizes = [8, 64], strides = [1, 1]} : vector<8x256xf32> to vector<8x64xf32>
    %211 = arith.negf %210 : vector<8x64xf32>
    %212 = math.exp %211 : vector<8x64xf32>
    %cst_65 = arith.constant 1.000000e+00 : f32
    %213 = vector.broadcast %cst_65 : f32 to vector<8x64xf32>
    %214 = arith.addf %213, %212 : vector<8x64xf32>
    %215 = arith.divf %213, %214 : vector<8x64xf32>
    %216 = vector.extract_strided_slice %209 {offsets = [0, 64], sizes = [8, 64], strides = [1, 1]} : vector<8x256xf32> to vector<8x64xf32>
    %217 = arith.negf %216 : vector<8x64xf32>
    %218 = math.exp %217 : vector<8x64xf32>
    %cst_66 = arith.constant 1.000000e+00 : f32
    %219 = vector.broadcast %cst_66 : f32 to vector<8x64xf32>
    %220 = arith.addf %219, %218 : vector<8x64xf32>
    %221 = arith.divf %219, %220 : vector<8x64xf32>
    %222 = vector.extract_strided_slice %209 {offsets = [0, 128], sizes = [8, 64], strides = [1, 1]} : vector<8x256xf32> to vector<8x64xf32>
    %223 = math.tanh %222 : vector<8x64xf32>
    %224 = vector.extract_strided_slice %209 {offsets = [0, 192], sizes = [8, 64], strides = [1, 1]} : vector<8x256xf32> to vector<8x64xf32>
    %225 = arith.negf %224 : vector<8x64xf32>
    %226 = math.exp %225 : vector<8x64xf32>
    %cst_67 = arith.constant 1.000000e+00 : f32
    %227 = vector.broadcast %cst_67 : f32 to vector<8x64xf32>
    %228 = arith.addf %227, %226 : vector<8x64xf32>
    %229 = arith.divf %227, %228 : vector<8x64xf32>
    %230 = arith.mulf %221, %200 : vector<8x64xf32>
    %231 = arith.mulf %215, %223 : vector<8x64xf32>
    %232 = arith.addf %230, %231 : vector<8x64xf32>
    %233 = math.tanh %232 : vector<8x64xf32>
    %234 = arith.mulf %229, %233 : vector<8x64xf32>
    %235 = vector.extract_strided_slice %234 {offsets = [0, 0], sizes = [8, 32], strides = [1, 1]} : vector<8x64xf32> to vector<8x32xf32>
    %c32_68 = arith.constant 32 : index
    %c0_69 = arith.constant 0 : index
    %236 = vector.load %arg11[%c32_68, %c0_69] : memref<64x64xf32, #tpu.memory_space<vmem>>, vector<8x32xf32>
    tpu.vector_store %arg11[%c32_68, %c0_69], %235 {strides = array<i32>} : memref<64x64xf32, #tpu.memory_space<vmem>>, vector<8x32xf32>,
    %237 = vector.extract_strided_slice %234 {offsets = [0, 32], sizes = [8, 32], strides = [1, 1]} : vector<8x64xf32> to vector<8x32xf32>
    %c24_70 = arith.constant 24 : index
    %c32_71 = arith.constant 32 : index
    %238 = vector.load %arg11[%c24_70, %c32_71] : memref<64x64xf32, #tpu.memory_space<vmem>>, vector<8x32xf32>
    tpu.vector_store %arg11[%c24_70, %c32_71], %237 {strides = array<i32>} : memref<64x64xf32, #tpu.memory_space<vmem>>, vector<8x32xf32>,
    %c40_72 = arith.constant 40 : index
    %c0_73 = arith.constant 0 : index
    %239 = vector.load %arg10[%c40_72, %c0_73] : memref<64x256xf32, #tpu.memory_space<vmem>>, vector<8x256xf32>
    %cst_74 = arith.constant dense<0.000000e+00> : vector<8x256xf32>
    %240 = tpu.matmul %234, %76, %cst_74 {dimension_numbers = #tpu.dot_dimension_numbers<[1], [0], [0], [1], [0, 0, 1, 1], [], []>} : vector<8x64xf32>, vector<64x256xf32>, vector<8x256xf32> -> vector<8x256xf32>
    %241 = arith.addf %239, %240 : vector<8x256xf32>
    %242 = vector.extract_strided_slice %241 {offsets = [0, 0], sizes = [8, 64], strides = [1, 1]} : vector<8x256xf32> to vector<8x64xf32>
    %243 = arith.negf %242 : vector<8x64xf32>
    %244 = math.exp %243 : vector<8x64xf32>
    %cst_75 = arith.constant 1.000000e+00 : f32
    %245 = vector.broadcast %cst_75 : f32 to vector<8x64xf32>
    %246 = arith.addf %245, %244 : vector<8x64xf32>
    %247 = arith.divf %245, %246 : vector<8x64xf32>
    %248 = vector.extract_strided_slice %241 {offsets = [0, 64], sizes = [8, 64], strides = [1, 1]} : vector<8x256xf32> to vector<8x64xf32>
    %249 = arith.negf %248 : vector<8x64xf32>
    %250 = math.exp %249 : vector<8x64xf32>
    %cst_76 = arith.constant 1.000000e+00 : f32
    %251 = vector.broadcast %cst_76 : f32 to vector<8x64xf32>
    %252 = arith.addf %251, %250 : vector<8x64xf32>
    %253 = arith.divf %251, %252 : vector<8x64xf32>
    %254 = vector.extract_strided_slice %241 {offsets = [0, 128], sizes = [8, 64], strides = [1, 1]} : vector<8x256xf32> to vector<8x64xf32>
    %255 = math.tanh %254 : vector<8x64xf32>
    %256 = vector.extract_strided_slice %241 {offsets = [0, 192], sizes = [8, 64], strides = [1, 1]} : vector<8x256xf32> to vector<8x64xf32>
    %257 = arith.negf %256 : vector<8x64xf32>
    %258 = math.exp %257 : vector<8x64xf32>
    %cst_77 = arith.constant 1.000000e+00 : f32
    %259 = vector.broadcast %cst_77 : f32 to vector<8x64xf32>
    %260 = arith.addf %259, %258 : vector<8x64xf32>
    %261 = arith.divf %259, %260 : vector<8x64xf32>
    %262 = arith.mulf %253, %232 : vector<8x64xf32>
    %263 = arith.mulf %247, %255 : vector<8x64xf32>
    %264 = arith.addf %262, %263 : vector<8x64xf32>
    %265 = math.tanh %264 : vector<8x64xf32>
    %266 = arith.mulf %261, %265 : vector<8x64xf32>
    %267 = vector.extract_strided_slice %266 {offsets = [0, 0], sizes = [8, 32], strides = [1, 1]} : vector<8x64xf32> to vector<8x32xf32>
    %c40_78 = arith.constant 40 : index
    %c0_79 = arith.constant 0 : index
    %268 = vector.load %arg11[%c40_78, %c0_79] : memref<64x64xf32, #tpu.memory_space<vmem>>, vector<8x32xf32>
    tpu.vector_store %arg11[%c40_78, %c0_79], %267 {strides = array<i32>} : memref<64x64xf32, #tpu.memory_space<vmem>>, vector<8x32xf32>,
    %269 = vector.extract_strided_slice %266 {offsets = [0, 32], sizes = [8, 32], strides = [1, 1]} : vector<8x64xf32> to vector<8x32xf32>
    %c16_80 = arith.constant 16 : index
    %c32_81 = arith.constant 32 : index
    %270 = vector.load %arg11[%c16_80, %c32_81] : memref<64x64xf32, #tpu.memory_space<vmem>>, vector<8x32xf32>
    tpu.vector_store %arg11[%c16_80, %c32_81], %269 {strides = array<i32>} : memref<64x64xf32, #tpu.memory_space<vmem>>, vector<8x32xf32>,
    %c48_82 = arith.constant 48 : index
    %c0_83 = arith.constant 0 : index
    %271 = vector.load %arg10[%c48_82, %c0_83] : memref<64x256xf32, #tpu.memory_space<vmem>>, vector<8x256xf32>
    %cst_84 = arith.constant dense<0.000000e+00> : vector<8x256xf32>
    %272 = tpu.matmul %266, %76, %cst_84 {dimension_numbers = #tpu.dot_dimension_numbers<[1], [0], [0], [1], [0, 0, 1, 1], [], []>} : vector<8x64xf32>, vector<64x256xf32>, vector<8x256xf32> -> vector<8x256xf32>
    %273 = arith.addf %271, %272 : vector<8x256xf32>
    %274 = vector.extract_strided_slice %273 {offsets = [0, 0], sizes = [8, 64], strides = [1, 1]} : vector<8x256xf32> to vector<8x64xf32>
    %275 = arith.negf %274 : vector<8x64xf32>
    %276 = math.exp %275 : vector<8x64xf32>
    %cst_85 = arith.constant 1.000000e+00 : f32
    %277 = vector.broadcast %cst_85 : f32 to vector<8x64xf32>
    %278 = arith.addf %277, %276 : vector<8x64xf32>
    %279 = arith.divf %277, %278 : vector<8x64xf32>
    %280 = vector.extract_strided_slice %273 {offsets = [0, 64], sizes = [8, 64], strides = [1, 1]} : vector<8x256xf32> to vector<8x64xf32>
    %281 = arith.negf %280 : vector<8x64xf32>
    %282 = math.exp %281 : vector<8x64xf32>
    %cst_86 = arith.constant 1.000000e+00 : f32
    %283 = vector.broadcast %cst_86 : f32 to vector<8x64xf32>
    %284 = arith.addf %283, %282 : vector<8x64xf32>
    %285 = arith.divf %283, %284 : vector<8x64xf32>
    %286 = vector.extract_strided_slice %273 {offsets = [0, 128], sizes = [8, 64], strides = [1, 1]} : vector<8x256xf32> to vector<8x64xf32>
    %287 = math.tanh %286 : vector<8x64xf32>
    %288 = vector.extract_strided_slice %273 {offsets = [0, 192], sizes = [8, 64], strides = [1, 1]} : vector<8x256xf32> to vector<8x64xf32>
    %289 = arith.negf %288 : vector<8x64xf32>
    %290 = math.exp %289 : vector<8x64xf32>
    %cst_87 = arith.constant 1.000000e+00 : f32
    %291 = vector.broadcast %cst_87 : f32 to vector<8x64xf32>
    %292 = arith.addf %291, %290 : vector<8x64xf32>
    %293 = arith.divf %291, %292 : vector<8x64xf32>
    %294 = arith.mulf %285, %264 : vector<8x64xf32>
    %295 = arith.mulf %279, %287 : vector<8x64xf32>
    %296 = arith.addf %294, %295 : vector<8x64xf32>
    %297 = math.tanh %296 : vector<8x64xf32>
    %298 = arith.mulf %293, %297 : vector<8x64xf32>
    %299 = vector.extract_strided_slice %298 {offsets = [0, 0], sizes = [8, 32], strides = [1, 1]} : vector<8x64xf32> to vector<8x32xf32>
    %c48_88 = arith.constant 48 : index
    %c0_89 = arith.constant 0 : index
    %300 = vector.load %arg11[%c48_88, %c0_89] : memref<64x64xf32, #tpu.memory_space<vmem>>, vector<8x32xf32>
    tpu.vector_store %arg11[%c48_88, %c0_89], %299 {strides = array<i32>} : memref<64x64xf32, #tpu.memory_space<vmem>>, vector<8x32xf32>,
    %301 = vector.extract_strided_slice %298 {offsets = [0, 32], sizes = [8, 32], strides = [1, 1]} : vector<8x64xf32> to vector<8x32xf32>
    %c8_90 = arith.constant 8 : index
    %c32_91 = arith.constant 32 : index
    %302 = vector.load %arg11[%c8_90, %c32_91] : memref<64x64xf32, #tpu.memory_space<vmem>>, vector<8x32xf32>
    tpu.vector_store %arg11[%c8_90, %c32_91], %301 {strides = array<i32>} : memref<64x64xf32, #tpu.memory_space<vmem>>, vector<8x32xf32>,
    %c56_92 = arith.constant 56 : index
    %c0_93 = arith.constant 0 : index
    %303 = vector.load %arg10[%c56_92, %c0_93] : memref<64x256xf32, #tpu.memory_space<vmem>>, vector<8x256xf32>
    %cst_94 = arith.constant dense<0.000000e+00> : vector<8x256xf32>
    %304 = tpu.matmul %298, %76, %cst_94 {dimension_numbers = #tpu.dot_dimension_numbers<[1], [0], [0], [1], [0, 0, 1, 1], [], []>} : vector<8x64xf32>, vector<64x256xf32>, vector<8x256xf32> -> vector<8x256xf32>
    %305 = arith.addf %303, %304 : vector<8x256xf32>
    %306 = vector.extract_strided_slice %305 {offsets = [0, 0], sizes = [8, 64], strides = [1, 1]} : vector<8x256xf32> to vector<8x64xf32>
    %307 = arith.negf %306 : vector<8x64xf32>
    %308 = math.exp %307 : vector<8x64xf32>
    %cst_95 = arith.constant 1.000000e+00 : f32
    %309 = vector.broadcast %cst_95 : f32 to vector<8x64xf32>
    %310 = arith.addf %309, %308 : vector<8x64xf32>
    %311 = arith.divf %309, %310 : vector<8x64xf32>
    %312 = vector.extract_strided_slice %305 {offsets = [0, 64], sizes = [8, 64], strides = [1, 1]} : vector<8x256xf32> to vector<8x64xf32>
    %313 = arith.negf %312 : vector<8x64xf32>
    %314 = math.exp %313 : vector<8x64xf32>
    %cst_96 = arith.constant 1.000000e+00 : f32
    %315 = vector.broadcast %cst_96 : f32 to vector<8x64xf32>
    %316 = arith.addf %315, %314 : vector<8x64xf32>
    %317 = arith.divf %315, %316 : vector<8x64xf32>
    %318 = vector.extract_strided_slice %305 {offsets = [0, 128], sizes = [8, 64], strides = [1, 1]} : vector<8x256xf32> to vector<8x64xf32>
    %319 = math.tanh %318 : vector<8x64xf32>
    %320 = vector.extract_strided_slice %305 {offsets = [0, 192], sizes = [8, 64], strides = [1, 1]} : vector<8x256xf32> to vector<8x64xf32>
    %321 = arith.negf %320 : vector<8x64xf32>
    %322 = math.exp %321 : vector<8x64xf32>
    %cst_97 = arith.constant 1.000000e+00 : f32
    %323 = vector.broadcast %cst_97 : f32 to vector<8x64xf32>
    %324 = arith.addf %323, %322 : vector<8x64xf32>
    %325 = arith.divf %323, %324 : vector<8x64xf32>
    %326 = arith.mulf %317, %296 : vector<8x64xf32>
    %327 = arith.mulf %311, %319 : vector<8x64xf32>
    %328 = arith.addf %326, %327 : vector<8x64xf32>
    %329 = math.tanh %328 : vector<8x64xf32>
    %330 = arith.mulf %325, %329 : vector<8x64xf32>
    %331 = vector.extract_strided_slice %330 {offsets = [0, 0], sizes = [8, 32], strides = [1, 1]} : vector<8x64xf32> to vector<8x32xf32>
    %c56_98 = arith.constant 56 : index
    %c0_99 = arith.constant 0 : index
    %332 = vector.load %arg11[%c56_98, %c0_99] : memref<64x64xf32, #tpu.memory_space<vmem>>, vector<8x32xf32>
    tpu.vector_store %arg11[%c56_98, %c0_99], %331 {strides = array<i32>} : memref<64x64xf32, #tpu.memory_space<vmem>>, vector<8x32xf32>,
    %333 = vector.extract_strided_slice %330 {offsets = [0, 32], sizes = [8, 32], strides = [1, 1]} : vector<8x64xf32> to vector<8x32xf32>
    %c0_100 = arith.constant 0 : index
    %c32_101 = arith.constant 32 : index
    %334 = vector.load %arg11[%c0_100, %c32_101] : memref<64x64xf32, #tpu.memory_space<vmem>>, vector<8x32xf32>
    tpu.vector_store %arg11[%c0_100, %c32_101], %333 {strides = array<i32>} : memref<64x64xf32, #tpu.memory_space<vmem>>, vector<8x32xf32>,
    %c0_102 = arith.constant 0 : index
    %c0_103 = arith.constant 0 : index
    %335 = vector.load %arg11[%c0_102, %c0_103] : memref<64x64xf32, #tpu.memory_space<vmem>>, vector<64x64xf32>
    %c0_104 = arith.constant 0 : index
    %c0_105 = arith.constant 0 : index
    %336 = vector.load %arg4[%c0_104, %c0_105] : memref<64x256xf32, #tpu.memory_space<vmem>>, vector<64x256xf32>
    %cst_106 = arith.constant dense<0.000000e+00> : vector<64x256xf32>
    %337 = tpu.matmul %335, %336, %cst_106 {dimension_numbers = #tpu.dot_dimension_numbers<[1], [0], [0], [1], [0, 0, 1, 1], [], []>} : vector<64x64xf32>, vector<64x256xf32>, vector<64x256xf32> -> vector<64x256xf32>
    %c0_107 = arith.constant 0 : index
    %c0_108 = arith.constant 0 : index
    %338 = vector.load %arg6[%c0_107, %c0_108] : memref<1x256xf32, #tpu.memory_space<vmem>>, vector<1x256xf32>
    %339 = vector.broadcast %338 : vector<1x256xf32> to vector<64x256xf32>
    %340 = arith.addf %337, %339 : vector<64x256xf32>
    %341 = vector.extract_strided_slice %340 {offsets = [0, 0], sizes = [8, 256], strides = [1, 1]} : vector<64x256xf32> to vector<8x256xf32>
    %342 = vector.extract_strided_slice %340 {offsets = [56, 0], sizes = [8, 256], strides = [1, 1]} : vector<64x256xf32> to vector<8x256xf32>
    %343 = vector.shape_cast %18 : vector<1x256xi1> to vector<1x256xi1>
    %344 = vector.broadcast %343 : vector<1x256xi1> to vector<8x256xi1>
    %345 = arith.select %344, %341, %342 : vector<8x256xi1>, vector<8x256xf32>
    %c0_109 = arith.constant 0 : index
    %c0_110 = arith.constant 0 : index
    %346 = vector.load %arg10[%c0_109, %c0_110] : memref<64x256xf32, #tpu.memory_space<vmem>>, vector<8x256xf32>
    tpu.vector_store %arg10[%c0_109, %c0_110], %345 {strides = array<i32>} : memref<64x256xf32, #tpu.memory_space<vmem>>, vector<8x256xf32>,
    %347 = vector.extract_strided_slice %340 {offsets = [8, 0], sizes = [8, 256], strides = [1, 1]} : vector<64x256xf32> to vector<8x256xf32>
    %348 = vector.extract_strided_slice %340 {offsets = [48, 0], sizes = [8, 256], strides = [1, 1]} : vector<64x256xf32> to vector<8x256xf32>
    %349 = vector.shape_cast %18 : vector<1x256xi1> to vector<1x256xi1>
    %350 = vector.broadcast %349 : vector<1x256xi1> to vector<8x256xi1>
    %351 = arith.select %350, %347, %348 : vector<8x256xi1>, vector<8x256xf32>
    %c8_111 = arith.constant 8 : index
    %c0_112 = arith.constant 0 : index
    %352 = vector.load %arg10[%c8_111, %c0_112] : memref<64x256xf32, #tpu.memory_space<vmem>>, vector<8x256xf32>
    tpu.vector_store %arg10[%c8_111, %c0_112], %351 {strides = array<i32>} : memref<64x256xf32, #tpu.memory_space<vmem>>, vector<8x256xf32>,
    %353 = vector.extract_strided_slice %340 {offsets = [16, 0], sizes = [8, 256], strides = [1, 1]} : vector<64x256xf32> to vector<8x256xf32>
    %354 = vector.extract_strided_slice %340 {offsets = [40, 0], sizes = [8, 256], strides = [1, 1]} : vector<64x256xf32> to vector<8x256xf32>
    %355 = vector.shape_cast %18 : vector<1x256xi1> to vector<1x256xi1>
    %356 = vector.broadcast %355 : vector<1x256xi1> to vector<8x256xi1>
    %357 = arith.select %356, %353, %354 : vector<8x256xi1>, vector<8x256xf32>
    %c16_113 = arith.constant 16 : index
    %c0_114 = arith.constant 0 : index
    %358 = vector.load %arg10[%c16_113, %c0_114] : memref<64x256xf32, #tpu.memory_space<vmem>>, vector<8x256xf32>
    tpu.vector_store %arg10[%c16_113, %c0_114], %357 {strides = array<i32>} : memref<64x256xf32, #tpu.memory_space<vmem>>, vector<8x256xf32>,
    %359 = vector.extract_strided_slice %340 {offsets = [24, 0], sizes = [8, 256], strides = [1, 1]} : vector<64x256xf32> to vector<8x256xf32>
    %360 = vector.extract_strided_slice %340 {offsets = [32, 0], sizes = [8, 256], strides = [1, 1]} : vector<64x256xf32> to vector<8x256xf32>
    %361 = vector.shape_cast %18 : vector<1x256xi1> to vector<1x256xi1>
    %362 = vector.broadcast %361 : vector<1x256xi1> to vector<8x256xi1>
    %363 = arith.select %362, %359, %360 : vector<8x256xi1>, vector<8x256xf32>
    %c24_115 = arith.constant 24 : index
    %c0_116 = arith.constant 0 : index
    %364 = vector.load %arg10[%c24_115, %c0_116] : memref<64x256xf32, #tpu.memory_space<vmem>>, vector<8x256xf32>
    tpu.vector_store %arg10[%c24_115, %c0_116], %363 {strides = array<i32>} : memref<64x256xf32, #tpu.memory_space<vmem>>, vector<8x256xf32>,
    %365 = vector.extract_strided_slice %340 {offsets = [32, 0], sizes = [8, 256], strides = [1, 1]} : vector<64x256xf32> to vector<8x256xf32>
    %366 = vector.extract_strided_slice %340 {offsets = [24, 0], sizes = [8, 256], strides = [1, 1]} : vector<64x256xf32> to vector<8x256xf32>
    %367 = vector.shape_cast %18 : vector<1x256xi1> to vector<1x256xi1>
    %368 = vector.broadcast %367 : vector<1x256xi1> to vector<8x256xi1>
    %369 = arith.select %368, %365, %366 : vector<8x256xi1>, vector<8x256xf32>
    %c32_117 = arith.constant 32 : index
    %c0_118 = arith.constant 0 : index
    %370 = vector.load %arg10[%c32_117, %c0_118] : memref<64x256xf32, #tpu.memory_space<vmem>>, vector<8x256xf32>
    tpu.vector_store %arg10[%c32_117, %c0_118], %369 {strides = array<i32>} : memref<64x256xf32, #tpu.memory_space<vmem>>, vector<8x256xf32>,
    %371 = vector.extract_strided_slice %340 {offsets = [40, 0], sizes = [8, 256], strides = [1, 1]} : vector<64x256xf32> to vector<8x256xf32>
    %372 = vector.extract_strided_slice %340 {offsets = [16, 0], sizes = [8, 256], strides = [1, 1]} : vector<64x256xf32> to vector<8x256xf32>
    %373 = vector.shape_cast %18 : vector<1x256xi1> to vector<1x256xi1>
    %374 = vector.broadcast %373 : vector<1x256xi1> to vector<8x256xi1>
    %375 = arith.select %374, %371, %372 : vector<8x256xi1>, vector<8x256xf32>
    %c40_119 = arith.constant 40 : index
    %c0_120 = arith.constant 0 : index
    %376 = vector.load %arg10[%c40_119, %c0_120] : memref<64x256xf32, #tpu.memory_space<vmem>>, vector<8x256xf32>
    tpu.vector_store %arg10[%c40_119, %c0_120], %375 {strides = array<i32>} : memref<64x256xf32, #tpu.memory_space<vmem>>, vector<8x256xf32>,
    %377 = vector.extract_strided_slice %340 {offsets = [48, 0], sizes = [8, 256], strides = [1, 1]} : vector<64x256xf32> to vector<8x256xf32>
    %378 = vector.extract_strided_slice %340 {offsets = [8, 0], sizes = [8, 256], strides = [1, 1]} : vector<64x256xf32> to vector<8x256xf32>
    %379 = vector.shape_cast %18 : vector<1x256xi1> to vector<1x256xi1>
    %380 = vector.broadcast %379 : vector<1x256xi1> to vector<8x256xi1>
    %381 = arith.select %380, %377, %378 : vector<8x256xi1>, vector<8x256xf32>
    %c48_121 = arith.constant 48 : index
    %c0_122 = arith.constant 0 : index
    %382 = vector.load %arg10[%c48_121, %c0_122] : memref<64x256xf32, #tpu.memory_space<vmem>>, vector<8x256xf32>
    tpu.vector_store %arg10[%c48_121, %c0_122], %381 {strides = array<i32>} : memref<64x256xf32, #tpu.memory_space<vmem>>, vector<8x256xf32>,
    %383 = vector.extract_strided_slice %340 {offsets = [56, 0], sizes = [8, 256], strides = [1, 1]} : vector<64x256xf32> to vector<8x256xf32>
    %384 = vector.extract_strided_slice %340 {offsets = [0, 0], sizes = [8, 256], strides = [1, 1]} : vector<64x256xf32> to vector<8x256xf32>
    %385 = vector.shape_cast %18 : vector<1x256xi1> to vector<1x256xi1>
    %386 = vector.broadcast %385 : vector<1x256xi1> to vector<8x256xi1>
    %387 = arith.select %386, %383, %384 : vector<8x256xi1>, vector<8x256xf32>
    %c56_123 = arith.constant 56 : index
    %c0_124 = arith.constant 0 : index
    %388 = vector.load %arg10[%c56_123, %c0_124] : memref<64x256xf32, #tpu.memory_space<vmem>>, vector<8x256xf32>
    tpu.vector_store %arg10[%c56_123, %c0_124], %387 {strides = array<i32>} : memref<64x256xf32, #tpu.memory_space<vmem>>, vector<8x256xf32>,
    %c0_125 = arith.constant 0 : index
    %c0_126 = arith.constant 0 : index
    %389 = vector.load %arg5[%c0_125, %c0_126] : memref<64x256xf32, #tpu.memory_space<vmem>>, vector<64x256xf32>
    %cst_127 = arith.constant 0.000000e+00 : f32
    %390 = vector.broadcast %cst_127 : f32 to vector<8x64xf32>
    %cst_128 = arith.constant 0.000000e+00 : f32
    %391 = vector.broadcast %cst_128 : f32 to vector<8x64xf32>
    %c0_129 = arith.constant 0 : index
    %c0_130 = arith.constant 0 : index
    %392 = vector.load %arg10[%c0_129, %c0_130] : memref<64x256xf32, #tpu.memory_space<vmem>>, vector<8x256xf32>
    %cst_131 = arith.constant dense<0.000000e+00> : vector<8x256xf32>
    %393 = tpu.matmul %390, %389, %cst_131 {dimension_numbers = #tpu.dot_dimension_numbers<[1], [0], [0], [1], [0, 0, 1, 1], [], []>} : vector<8x64xf32>, vector<64x256xf32>, vector<8x256xf32> -> vector<8x256xf32>
    %394 = arith.addf %392, %393 : vector<8x256xf32>
    %395 = vector.extract_strided_slice %394 {offsets = [0, 0], sizes = [8, 64], strides = [1, 1]} : vector<8x256xf32> to vector<8x64xf32>
    %396 = arith.negf %395 : vector<8x64xf32>
    %397 = math.exp %396 : vector<8x64xf32>
    %cst_132 = arith.constant 1.000000e+00 : f32
    %398 = vector.broadcast %cst_132 : f32 to vector<8x64xf32>
    %399 = arith.addf %398, %397 : vector<8x64xf32>
    %400 = arith.divf %398, %399 : vector<8x64xf32>
    %401 = vector.extract_strided_slice %394 {offsets = [0, 64], sizes = [8, 64], strides = [1, 1]} : vector<8x256xf32> to vector<8x64xf32>
    %402 = arith.negf %401 : vector<8x64xf32>
    %403 = math.exp %402 : vector<8x64xf32>
    %cst_133 = arith.constant 1.000000e+00 : f32
    %404 = vector.broadcast %cst_133 : f32 to vector<8x64xf32>
    %405 = arith.addf %404, %403 : vector<8x64xf32>
    %406 = arith.divf %404, %405 : vector<8x64xf32>
    %407 = vector.extract_strided_slice %394 {offsets = [0, 128], sizes = [8, 64], strides = [1, 1]} : vector<8x256xf32> to vector<8x64xf32>
    %408 = math.tanh %407 : vector<8x64xf32>
    %409 = vector.extract_strided_slice %394 {offsets = [0, 192], sizes = [8, 64], strides = [1, 1]} : vector<8x256xf32> to vector<8x64xf32>
    %410 = arith.negf %409 : vector<8x64xf32>
    %411 = math.exp %410 : vector<8x64xf32>
    %cst_134 = arith.constant 1.000000e+00 : f32
    %412 = vector.broadcast %cst_134 : f32 to vector<8x64xf32>
    %413 = arith.addf %412, %411 : vector<8x64xf32>
    %414 = arith.divf %412, %413 : vector<8x64xf32>
    %415 = arith.mulf %406, %391 : vector<8x64xf32>
    %416 = arith.mulf %400, %408 : vector<8x64xf32>
    %417 = arith.addf %415, %416 : vector<8x64xf32>
    %418 = math.tanh %417 : vector<8x64xf32>
    %419 = arith.mulf %414, %418 : vector<8x64xf32>
    %c8_135 = arith.constant 8 : index
    %c0_136 = arith.constant 0 : index
    %420 = vector.load %arg10[%c8_135, %c0_136] : memref<64x256xf32, #tpu.memory_space<vmem>>, vector<8x256xf32>
    %cst_137 = arith.constant dense<0.000000e+00> : vector<8x256xf32>
    %421 = tpu.matmul %419, %389, %cst_137 {dimension_numbers = #tpu.dot_dimension_numbers<[1], [0], [0], [1], [0, 0, 1, 1], [], []>} : vector<8x64xf32>, vector<64x256xf32>, vector<8x256xf32> -> vector<8x256xf32>
    %422 = arith.addf %420, %421 : vector<8x256xf32>
    %423 = vector.extract_strided_slice %422 {offsets = [0, 0], sizes = [8, 64], strides = [1, 1]} : vector<8x256xf32> to vector<8x64xf32>
    %424 = arith.negf %423 : vector<8x64xf32>
    %425 = math.exp %424 : vector<8x64xf32>
    %cst_138 = arith.constant 1.000000e+00 : f32
    %426 = vector.broadcast %cst_138 : f32 to vector<8x64xf32>
    %427 = arith.addf %426, %425 : vector<8x64xf32>
    %428 = arith.divf %426, %427 : vector<8x64xf32>
    %429 = vector.extract_strided_slice %422 {offsets = [0, 64], sizes = [8, 64], strides = [1, 1]} : vector<8x256xf32> to vector<8x64xf32>
    %430 = arith.negf %429 : vector<8x64xf32>
    %431 = math.exp %430 : vector<8x64xf32>
    %cst_139 = arith.constant 1.000000e+00 : f32
    %432 = vector.broadcast %cst_139 : f32 to vector<8x64xf32>
    %433 = arith.addf %432, %431 : vector<8x64xf32>
    %434 = arith.divf %432, %433 : vector<8x64xf32>
    %435 = vector.extract_strided_slice %422 {offsets = [0, 128], sizes = [8, 64], strides = [1, 1]} : vector<8x256xf32> to vector<8x64xf32>
    %436 = math.tanh %435 : vector<8x64xf32>
    %437 = vector.extract_strided_slice %422 {offsets = [0, 192], sizes = [8, 64], strides = [1, 1]} : vector<8x256xf32> to vector<8x64xf32>
    %438 = arith.negf %437 : vector<8x64xf32>
    %439 = math.exp %438 : vector<8x64xf32>
    %cst_140 = arith.constant 1.000000e+00 : f32
    %440 = vector.broadcast %cst_140 : f32 to vector<8x64xf32>
    %441 = arith.addf %440, %439 : vector<8x64xf32>
    %442 = arith.divf %440, %441 : vector<8x64xf32>
    %443 = arith.mulf %434, %417 : vector<8x64xf32>
    %444 = arith.mulf %428, %436 : vector<8x64xf32>
    %445 = arith.addf %443, %444 : vector<8x64xf32>
    %446 = math.tanh %445 : vector<8x64xf32>
    %447 = arith.mulf %442, %446 : vector<8x64xf32>
    %c16_141 = arith.constant 16 : index
    %c0_142 = arith.constant 0 : index
    %448 = vector.load %arg10[%c16_141, %c0_142] : memref<64x256xf32, #tpu.memory_space<vmem>>, vector<8x256xf32>
    %cst_143 = arith.constant dense<0.000000e+00> : vector<8x256xf32>
    %449 = tpu.matmul %447, %389, %cst_143 {dimension_numbers = #tpu.dot_dimension_numbers<[1], [0], [0], [1], [0, 0, 1, 1], [], []>} : vector<8x64xf32>, vector<64x256xf32>, vector<8x256xf32> -> vector<8x256xf32>
    %450 = arith.addf %448, %449 : vector<8x256xf32>
    %451 = vector.extract_strided_slice %450 {offsets = [0, 0], sizes = [8, 64], strides = [1, 1]} : vector<8x256xf32> to vector<8x64xf32>
    %452 = arith.negf %451 : vector<8x64xf32>
    %453 = math.exp %452 : vector<8x64xf32>
    %cst_144 = arith.constant 1.000000e+00 : f32
    %454 = vector.broadcast %cst_144 : f32 to vector<8x64xf32>
    %455 = arith.addf %454, %453 : vector<8x64xf32>
    %456 = arith.divf %454, %455 : vector<8x64xf32>
    %457 = vector.extract_strided_slice %450 {offsets = [0, 64], sizes = [8, 64], strides = [1, 1]} : vector<8x256xf32> to vector<8x64xf32>
    %458 = arith.negf %457 : vector<8x64xf32>
    %459 = math.exp %458 : vector<8x64xf32>
    %cst_145 = arith.constant 1.000000e+00 : f32
    %460 = vector.broadcast %cst_145 : f32 to vector<8x64xf32>
    %461 = arith.addf %460, %459 : vector<8x64xf32>
    %462 = arith.divf %460, %461 : vector<8x64xf32>
    %463 = vector.extract_strided_slice %450 {offsets = [0, 128], sizes = [8, 64], strides = [1, 1]} : vector<8x256xf32> to vector<8x64xf32>
    %464 = math.tanh %463 : vector<8x64xf32>
    %465 = vector.extract_strided_slice %450 {offsets = [0, 192], sizes = [8, 64], strides = [1, 1]} : vector<8x256xf32> to vector<8x64xf32>
    %466 = arith.negf %465 : vector<8x64xf32>
    %467 = math.exp %466 : vector<8x64xf32>
    %cst_146 = arith.constant 1.000000e+00 : f32
    %468 = vector.broadcast %cst_146 : f32 to vector<8x64xf32>
    %469 = arith.addf %468, %467 : vector<8x64xf32>
    %470 = arith.divf %468, %469 : vector<8x64xf32>
    %471 = arith.mulf %462, %445 : vector<8x64xf32>
    %472 = arith.mulf %456, %464 : vector<8x64xf32>
    %473 = arith.addf %471, %472 : vector<8x64xf32>
    %474 = math.tanh %473 : vector<8x64xf32>
    %475 = arith.mulf %470, %474 : vector<8x64xf32>
    %c24_147 = arith.constant 24 : index
    %c0_148 = arith.constant 0 : index
    %476 = vector.load %arg10[%c24_147, %c0_148] : memref<64x256xf32, #tpu.memory_space<vmem>>, vector<8x256xf32>
    %cst_149 = arith.constant dense<0.000000e+00> : vector<8x256xf32>
    %477 = tpu.matmul %475, %389, %cst_149 {dimension_numbers = #tpu.dot_dimension_numbers<[1], [0], [0], [1], [0, 0, 1, 1], [], []>} : vector<8x64xf32>, vector<64x256xf32>, vector<8x256xf32> -> vector<8x256xf32>
    %478 = arith.addf %476, %477 : vector<8x256xf32>
    %479 = vector.extract_strided_slice %478 {offsets = [0, 0], sizes = [8, 64], strides = [1, 1]} : vector<8x256xf32> to vector<8x64xf32>
    %480 = arith.negf %479 : vector<8x64xf32>
    %481 = math.exp %480 : vector<8x64xf32>
    %cst_150 = arith.constant 1.000000e+00 : f32
    %482 = vector.broadcast %cst_150 : f32 to vector<8x64xf32>
    %483 = arith.addf %482, %481 : vector<8x64xf32>
    %484 = arith.divf %482, %483 : vector<8x64xf32>
    %485 = vector.extract_strided_slice %478 {offsets = [0, 64], sizes = [8, 64], strides = [1, 1]} : vector<8x256xf32> to vector<8x64xf32>
    %486 = arith.negf %485 : vector<8x64xf32>
    %487 = math.exp %486 : vector<8x64xf32>
    %cst_151 = arith.constant 1.000000e+00 : f32
    %488 = vector.broadcast %cst_151 : f32 to vector<8x64xf32>
    %489 = arith.addf %488, %487 : vector<8x64xf32>
    %490 = arith.divf %488, %489 : vector<8x64xf32>
    %491 = vector.extract_strided_slice %478 {offsets = [0, 128], sizes = [8, 64], strides = [1, 1]} : vector<8x256xf32> to vector<8x64xf32>
    %492 = math.tanh %491 : vector<8x64xf32>
    %493 = vector.extract_strided_slice %478 {offsets = [0, 192], sizes = [8, 64], strides = [1, 1]} : vector<8x256xf32> to vector<8x64xf32>
    %494 = arith.negf %493 : vector<8x64xf32>
    %495 = math.exp %494 : vector<8x64xf32>
    %cst_152 = arith.constant 1.000000e+00 : f32
    %496 = vector.broadcast %cst_152 : f32 to vector<8x64xf32>
    %497 = arith.addf %496, %495 : vector<8x64xf32>
    %498 = arith.divf %496, %497 : vector<8x64xf32>
    %499 = arith.mulf %490, %473 : vector<8x64xf32>
    %500 = arith.mulf %484, %492 : vector<8x64xf32>
    %501 = arith.addf %499, %500 : vector<8x64xf32>
    %502 = math.tanh %501 : vector<8x64xf32>
    %503 = arith.mulf %498, %502 : vector<8x64xf32>
    %c32_153 = arith.constant 32 : index
    %c0_154 = arith.constant 0 : index
    %504 = vector.load %arg10[%c32_153, %c0_154] : memref<64x256xf32, #tpu.memory_space<vmem>>, vector<8x256xf32>
    %cst_155 = arith.constant dense<0.000000e+00> : vector<8x256xf32>
    %505 = tpu.matmul %503, %389, %cst_155 {dimension_numbers = #tpu.dot_dimension_numbers<[1], [0], [0], [1], [0, 0, 1, 1], [], []>} : vector<8x64xf32>, vector<64x256xf32>, vector<8x256xf32> -> vector<8x256xf32>
    %506 = arith.addf %504, %505 : vector<8x256xf32>
    %507 = vector.extract_strided_slice %506 {offsets = [0, 0], sizes = [8, 64], strides = [1, 1]} : vector<8x256xf32> to vector<8x64xf32>
    %508 = arith.negf %507 : vector<8x64xf32>
    %509 = math.exp %508 : vector<8x64xf32>
    %cst_156 = arith.constant 1.000000e+00 : f32
    %510 = vector.broadcast %cst_156 : f32 to vector<8x64xf32>
    %511 = arith.addf %510, %509 : vector<8x64xf32>
    %512 = arith.divf %510, %511 : vector<8x64xf32>
    %513 = vector.extract_strided_slice %506 {offsets = [0, 64], sizes = [8, 64], strides = [1, 1]} : vector<8x256xf32> to vector<8x64xf32>
    %514 = arith.negf %513 : vector<8x64xf32>
    %515 = math.exp %514 : vector<8x64xf32>
    %cst_157 = arith.constant 1.000000e+00 : f32
    %516 = vector.broadcast %cst_157 : f32 to vector<8x64xf32>
    %517 = arith.addf %516, %515 : vector<8x64xf32>
    %518 = arith.divf %516, %517 : vector<8x64xf32>
    %519 = vector.extract_strided_slice %506 {offsets = [0, 128], sizes = [8, 64], strides = [1, 1]} : vector<8x256xf32> to vector<8x64xf32>
    %520 = math.tanh %519 : vector<8x64xf32>
    %521 = vector.extract_strided_slice %506 {offsets = [0, 192], sizes = [8, 64], strides = [1, 1]} : vector<8x256xf32> to vector<8x64xf32>
    %522 = arith.negf %521 : vector<8x64xf32>
    %523 = math.exp %522 : vector<8x64xf32>
    %cst_158 = arith.constant 1.000000e+00 : f32
    %524 = vector.broadcast %cst_158 : f32 to vector<8x64xf32>
    %525 = arith.addf %524, %523 : vector<8x64xf32>
    %526 = arith.divf %524, %525 : vector<8x64xf32>
    %527 = arith.mulf %518, %501 : vector<8x64xf32>
    %528 = arith.mulf %512, %520 : vector<8x64xf32>
    %529 = arith.addf %527, %528 : vector<8x64xf32>
    %530 = math.tanh %529 : vector<8x64xf32>
    %531 = arith.mulf %526, %530 : vector<8x64xf32>
    %c40_159 = arith.constant 40 : index
    %c0_160 = arith.constant 0 : index
    %532 = vector.load %arg10[%c40_159, %c0_160] : memref<64x256xf32, #tpu.memory_space<vmem>>, vector<8x256xf32>
    %cst_161 = arith.constant dense<0.000000e+00> : vector<8x256xf32>
    %533 = tpu.matmul %531, %389, %cst_161 {dimension_numbers = #tpu.dot_dimension_numbers<[1], [0], [0], [1], [0, 0, 1, 1], [], []>} : vector<8x64xf32>, vector<64x256xf32>, vector<8x256xf32> -> vector<8x256xf32>
    %534 = arith.addf %532, %533 : vector<8x256xf32>
    %535 = vector.extract_strided_slice %534 {offsets = [0, 0], sizes = [8, 64], strides = [1, 1]} : vector<8x256xf32> to vector<8x64xf32>
    %536 = arith.negf %535 : vector<8x64xf32>
    %537 = math.exp %536 : vector<8x64xf32>
    %cst_162 = arith.constant 1.000000e+00 : f32
    %538 = vector.broadcast %cst_162 : f32 to vector<8x64xf32>
    %539 = arith.addf %538, %537 : vector<8x64xf32>
    %540 = arith.divf %538, %539 : vector<8x64xf32>
    %541 = vector.extract_strided_slice %534 {offsets = [0, 64], sizes = [8, 64], strides = [1, 1]} : vector<8x256xf32> to vector<8x64xf32>
    %542 = arith.negf %541 : vector<8x64xf32>
    %543 = math.exp %542 : vector<8x64xf32>
    %cst_163 = arith.constant 1.000000e+00 : f32
    %544 = vector.broadcast %cst_163 : f32 to vector<8x64xf32>
    %545 = arith.addf %544, %543 : vector<8x64xf32>
    %546 = arith.divf %544, %545 : vector<8x64xf32>
    %547 = vector.extract_strided_slice %534 {offsets = [0, 128], sizes = [8, 64], strides = [1, 1]} : vector<8x256xf32> to vector<8x64xf32>
    %548 = math.tanh %547 : vector<8x64xf32>
    %549 = vector.extract_strided_slice %534 {offsets = [0, 192], sizes = [8, 64], strides = [1, 1]} : vector<8x256xf32> to vector<8x64xf32>
    %550 = arith.negf %549 : vector<8x64xf32>
    %551 = math.exp %550 : vector<8x64xf32>
    %cst_164 = arith.constant 1.000000e+00 : f32
    %552 = vector.broadcast %cst_164 : f32 to vector<8x64xf32>
    %553 = arith.addf %552, %551 : vector<8x64xf32>
    %554 = arith.divf %552, %553 : vector<8x64xf32>
    %555 = arith.mulf %546, %529 : vector<8x64xf32>
    %556 = arith.mulf %540, %548 : vector<8x64xf32>
    %557 = arith.addf %555, %556 : vector<8x64xf32>
    %558 = math.tanh %557 : vector<8x64xf32>
    %559 = arith.mulf %554, %558 : vector<8x64xf32>
    %c48_165 = arith.constant 48 : index
    %c0_166 = arith.constant 0 : index
    %560 = vector.load %arg10[%c48_165, %c0_166] : memref<64x256xf32, #tpu.memory_space<vmem>>, vector<8x256xf32>
    %cst_167 = arith.constant dense<0.000000e+00> : vector<8x256xf32>
    %561 = tpu.matmul %559, %389, %cst_167 {dimension_numbers = #tpu.dot_dimension_numbers<[1], [0], [0], [1], [0, 0, 1, 1], [], []>} : vector<8x64xf32>, vector<64x256xf32>, vector<8x256xf32> -> vector<8x256xf32>
    %562 = arith.addf %560, %561 : vector<8x256xf32>
    %563 = vector.extract_strided_slice %562 {offsets = [0, 0], sizes = [8, 64], strides = [1, 1]} : vector<8x256xf32> to vector<8x64xf32>
    %564 = arith.negf %563 : vector<8x64xf32>
    %565 = math.exp %564 : vector<8x64xf32>
    %cst_168 = arith.constant 1.000000e+00 : f32
    %566 = vector.broadcast %cst_168 : f32 to vector<8x64xf32>
    %567 = arith.addf %566, %565 : vector<8x64xf32>
    %568 = arith.divf %566, %567 : vector<8x64xf32>
    %569 = vector.extract_strided_slice %562 {offsets = [0, 64], sizes = [8, 64], strides = [1, 1]} : vector<8x256xf32> to vector<8x64xf32>
    %570 = arith.negf %569 : vector<8x64xf32>
    %571 = math.exp %570 : vector<8x64xf32>
    %cst_169 = arith.constant 1.000000e+00 : f32
    %572 = vector.broadcast %cst_169 : f32 to vector<8x64xf32>
    %573 = arith.addf %572, %571 : vector<8x64xf32>
    %574 = arith.divf %572, %573 : vector<8x64xf32>
    %575 = vector.extract_strided_slice %562 {offsets = [0, 128], sizes = [8, 64], strides = [1, 1]} : vector<8x256xf32> to vector<8x64xf32>
    %576 = math.tanh %575 : vector<8x64xf32>
    %577 = vector.extract_strided_slice %562 {offsets = [0, 192], sizes = [8, 64], strides = [1, 1]} : vector<8x256xf32> to vector<8x64xf32>
    %578 = arith.negf %577 : vector<8x64xf32>
    %579 = math.exp %578 : vector<8x64xf32>
    %cst_170 = arith.constant 1.000000e+00 : f32
    %580 = vector.broadcast %cst_170 : f32 to vector<8x64xf32>
    %581 = arith.addf %580, %579 : vector<8x64xf32>
    %582 = arith.divf %580, %581 : vector<8x64xf32>
    %583 = arith.mulf %574, %557 : vector<8x64xf32>
    %584 = arith.mulf %568, %576 : vector<8x64xf32>
    %585 = arith.addf %583, %584 : vector<8x64xf32>
    %586 = math.tanh %585 : vector<8x64xf32>
    %587 = arith.mulf %582, %586 : vector<8x64xf32>
    %c56_171 = arith.constant 56 : index
    %c0_172 = arith.constant 0 : index
    %588 = vector.load %arg10[%c56_171, %c0_172] : memref<64x256xf32, #tpu.memory_space<vmem>>, vector<8x256xf32>
    %cst_173 = arith.constant dense<0.000000e+00> : vector<8x256xf32>
    %589 = tpu.matmul %587, %389, %cst_173 {dimension_numbers = #tpu.dot_dimension_numbers<[1], [0], [0], [1], [0, 0, 1, 1], [], []>} : vector<8x64xf32>, vector<64x256xf32>, vector<8x256xf32> -> vector<8x256xf32>
    %590 = arith.addf %588, %589 : vector<8x256xf32>
    %591 = vector.extract_strided_slice %590 {offsets = [0, 0], sizes = [8, 64], strides = [1, 1]} : vector<8x256xf32> to vector<8x64xf32>
    %592 = arith.negf %591 : vector<8x64xf32>
    %593 = math.exp %592 : vector<8x64xf32>
    %cst_174 = arith.constant 1.000000e+00 : f32
    %594 = vector.broadcast %cst_174 : f32 to vector<8x64xf32>
    %595 = arith.addf %594, %593 : vector<8x64xf32>
    %596 = arith.divf %594, %595 : vector<8x64xf32>
    %597 = vector.extract_strided_slice %590 {offsets = [0, 64], sizes = [8, 64], strides = [1, 1]} : vector<8x256xf32> to vector<8x64xf32>
    %598 = arith.negf %597 : vector<8x64xf32>
    %599 = math.exp %598 : vector<8x64xf32>
    %cst_175 = arith.constant 1.000000e+00 : f32
    %600 = vector.broadcast %cst_175 : f32 to vector<8x64xf32>
    %601 = arith.addf %600, %599 : vector<8x64xf32>
    %602 = arith.divf %600, %601 : vector<8x64xf32>
    %603 = vector.extract_strided_slice %590 {offsets = [0, 128], sizes = [8, 64], strides = [1, 1]} : vector<8x256xf32> to vector<8x64xf32>
    %604 = math.tanh %603 : vector<8x64xf32>
    %605 = vector.extract_strided_slice %590 {offsets = [0, 192], sizes = [8, 64], strides = [1, 1]} : vector<8x256xf32> to vector<8x64xf32>
    %606 = arith.negf %605 : vector<8x64xf32>
    %607 = math.exp %606 : vector<8x64xf32>
    %cst_176 = arith.constant 1.000000e+00 : f32
    %608 = vector.broadcast %cst_176 : f32 to vector<8x64xf32>
    %609 = arith.addf %608, %607 : vector<8x64xf32>
    %610 = arith.divf %608, %609 : vector<8x64xf32>
    %611 = arith.mulf %602, %585 : vector<8x64xf32>
    %612 = arith.mulf %596, %604 : vector<8x64xf32>
    %613 = arith.addf %611, %612 : vector<8x64xf32>
    %614 = math.tanh %613 : vector<8x64xf32>
    %615 = arith.mulf %610, %614 : vector<8x64xf32>
    %616 = vector.shape_cast %21 : vector<1x64xi1> to vector<1x64xi1>
    %617 = vector.broadcast %616 : vector<1x64xi1> to vector<8x64xi1>
    %618 = arith.select %617, %615, %419 : vector<8x64xi1>, vector<8x64xf32>
    %c0_177 = arith.constant 0 : index
    %c0_178 = arith.constant 0 : index
    %619 = vector.load %arg7[%c0_177, %c0_178] : memref<64x128xf32, #tpu.memory_space<vmem>>, vector<64x128xf32>
    %cst_179 = arith.constant dense<0.000000e+00> : vector<8x128xf32>
    %620 = tpu.matmul %618, %619, %cst_179 {dimension_numbers = #tpu.dot_dimension_numbers<[1], [0], [0], [1], [0, 0, 1, 1], [], []>} : vector<8x64xf32>, vector<64x128xf32>, vector<8x128xf32> -> vector<8x128xf32>
    %c0_180 = arith.constant 0 : index
    %c0_181 = arith.constant 0 : index
    %621 = vector.load %arg8[%c0_180, %c0_181] : memref<1x128xf32, #tpu.memory_space<vmem>>, vector<1x128xf32>
    %622 = vector.broadcast %621 : vector<1x128xf32> to vector<8x128xf32>
    %623 = arith.addf %620, %622 : vector<8x128xf32>
    %c0_182 = arith.constant 0 : index
    %c0_183 = arith.constant 0 : index
    %624 = vector.load %arg9[%c0_182, %c0_183] : memref<8x128xf32, #tpu.memory_space<vmem>>, vector<8x128xf32>
    tpu.vector_store %arg9[%c0_182, %c0_183], %623 {strides = array<i32>} : memref<8x128xf32, #tpu.memory_space<vmem>>, vector<8x128xf32>,
    return
  }
}

</mosaic_0001>

<llo_original>
// kernel: birnn_forward.1
$region0: #{birnn_forward.1}
  #allocation0 [shape = 'u32[]', space=smem, size = 0x4, offset = 0x4, fixed_abs, tag = 'smem constant byte address 0x4 - core index']
  #allocation1 [shape = 'u32[144,128]{1,0:T(1,128)}', space=vmem, size = 0x12000, scoped, tag = 'internal scratch']
  #allocation2 [shape = 'f32[64,256]{1,0:T(8,128)}', space=vmem, size = 0x10000, scoped, tag = 'scratch operand']
  #allocation3 [shape = 'f32[64,64]{1,0:T(8,128)}', space=vmem, size = 0x8000, scoped, tag = 'scratch operand']
  %s0 = inlined_call_operand.vmem [shape: f32[64,32], index: 0, kind: input, shape index: {}]
  %s1 = inlined_call_operand.vmem [shape: f32[32,256], index: 1, kind: input, shape index: {}]
  %s2 = inlined_call_operand.vmem [shape: f32[64,256], index: 2, kind: input, shape index: {}]
  %s3 = inlined_call_operand.vmem [shape: f32[1,256], index: 3, kind: input, shape index: {}]
  %s4 = inlined_call_operand.vmem [shape: f32[64,256], index: 4, kind: input, shape index: {}]
  %s5 = inlined_call_operand.vmem [shape: f32[64,256], index: 5, kind: input, shape index: {}]
  %s6 = inlined_call_operand.vmem [shape: f32[1,256], index: 6, kind: input, shape index: {}]
  %s7 = inlined_call_operand.hbm [shape: f32[64,128], index: 7, kind: input, shape index: {}]
  %s8 = inlined_call_operand.vmem [shape: f32[1,128], index: 8, kind: input, shape index: {}]
  %s9 = inlined_call_operand.vmem [shape: f32[8,128], index: 9, kind: output, shape index: {}]
  %s10 = sld [smem:[#allocation0]]
  $region50: #{birnn_forward.1} parent=0
    _
  %s12 = ssub.s32 1, %s10
  %s13 = scalar_select 0, %s12, %s10
  $region1: #{birnn_forward.1} parent=0
    #allocation4 [shape = 'u8[32768]{0}', space=vmem, size = 0x8000, scoped, tag = 'input window, operand 7, single buffered']
    #allocation5 [shape = 's32[1]{0}', space=sflag, size = 0x4, scoped, tag = 'scoped memory for birnn_forward.1']
    %14 = vsyncpa [#allocation5], 0
    // Predicated region
    $region2: #{birnn_forward.1} parent=1 // pred_check
      _
    $region3: #{birnn_forward.1} parent=1 // pred_check_branch
      %16 = sbr.rel (0) target = $region5
    $region4: #{birnn_forward.1} parent=1 // pred_region
      _
    $region5: #{birnn_forward.1} parent=1 // pred_fallthru
      _
    // Predicated region
    $region6: #{birnn_forward.1} parent=1 // pred_check
      _
    $region7: #{birnn_forward.1} parent=1 // pred_check_branch
      %18 = sbr.rel (0) target = $region9
    $region8: #{birnn_forward.1} parent=1 // pred_region
      _
    $region9: #{birnn_forward.1} parent=1 // pred_fallthru
      _
    // Predicated region
    $region10: #{birnn_forward.1} parent=1 // pred_check
      _
    $region11: #{birnn_forward.1} parent=1 // pred_check_branch
      %20 = sbr.rel (0) target = $region13
    $region12: #{birnn_forward.1} parent=1 // pred_region
      _
    $region13: #{birnn_forward.1} parent=1 // pred_fallthru
      _
    // Predicated region
    $region14: #{birnn_forward.1} parent=1 // pred_check
      _
    $region15: #{birnn_forward.1} parent=1 // pred_check_branch
      %22 = sbr.rel (0) target = $region17
    $region16: #{birnn_forward.1} parent=1 // pred_region
      _
    $region17: #{birnn_forward.1} parent=1 // pred_fallthru
      _
    // Predicated region
    $region18: #{birnn_forward.1} parent=1 // pred_check
      _
    $region19: #{birnn_forward.1} parent=1 // pred_check_branch
      %24 = sbr.rel (0) target = $region21
    $region20: #{birnn_forward.1} parent=1 // pred_region
      _
    $region21: #{birnn_forward.1} parent=1 // pred_fallthru
      _
    // Predicated region
    $region22: #{birnn_forward.1} parent=1 // pred_check
      _
    $region23: #{birnn_forward.1} parent=1 // pred_check_branch
      %26 = sbr.rel (0) target = $region25
    $region24: #{birnn_forward.1} parent=1 // pred_region
      _
    $region25: #{birnn_forward.1} parent=1 // pred_fallthru
      _
    // Predicated region
    $region26: #{birnn_forward.1} parent=1 // pred_check
      _
    $region27: #{birnn_forward.1} parent=1 // pred_check_branch
      %28 = sbr.rel (0) target = $region29
    $region28: #{birnn_forward.1} parent=1 // pred_region
      _
    $region29: #{birnn_forward.1} parent=1 // pred_fallthru
      _
    // Predicated region
    $region30: #{birnn_forward.1} parent=1 // pred_check
      _
    $region31: #{birnn_forward.1} parent=1 // pred_check_branch
      %30 = sbr.rel (0) target = $region33
    $region32: #{birnn_forward.1} parent=1 // pred_region
      %s32 = ssub.s32 1024, 1024
      %33 = vsyncadd [#allocation5], %s32
      %s34 = sshll.u32 [#allocation4], 4
      %s35 = int_to_ptr.vmem [resolvable:$true] %s34
      %40 = dma.hbm_to_vmem [thread:$0]  %s7, 1024, %s35, [#allocation5], 128, 128, 8
    $region33: #{birnn_forward.1} parent=1 // pred_fallthru
      _
    // Predicated region
    $region34: #{birnn_forward.1} parent=1 // pred_check
      _
    $region35: #{birnn_forward.1} parent=1 // pred_check_branch
      %42 = sbr.rel (0) target = $region37
    $region36: #{birnn_forward.1} parent=1 // pred_region
      _
    $region37: #{birnn_forward.1} parent=1 // pred_fallthru
      _
    // Predicated region
    $region38: #{birnn_forward.1} parent=1 // pred_check
      _
    $region39: #{birnn_forward.1} parent=1 // pred_check_branch
      %44 = sbr.rel (0) target = $region41
    $region40: #{birnn_forward.1} parent=1 // pred_region
      %45 = dma.done [#allocation5], 1024
    $region41: #{birnn_forward.1} parent=1 // pred_fallthru
      _
    %v46 = vlaneseq
    %v47 = vand.u32 %v46, 127
    %v48 = vadd.s32 %v47, 128
    %vm49 = vcmp.lt.s32.totalorder %v47, 0
    %v50 = vsub.s32 0, %v47
    %v51 = vsel %vm49, %v50, %v47
    %v52 = vshrl.u32 %v51, 6
    %v53 = vand.u32 %v51, 63
    %v54 = vsub.s32 0, %v53
    %v55 = vsel %vm49, %v54, %v53
    %vm56 = vcmp.lt.s32.totalorder %v48, 0
    %v57 = vsub.s32 0, %v48
    %v58 = vsel %vm56, %v57, %v48
    %v59 = vshrl.u32 %v58, 6
    %v60 = vand.u32 %v58, 63
    %v61 = vsub.s32 0, %v60
    %v62 = vsel %vm56, %v61, %v60
    %vm63 = vcmp.ne.s32.totalorder %v55, 0
    %vm64 = vcmp.ne.s32.totalorder %v62, 0
    %vm65 = vcmp.lt.s32.totalorder %v55, 0
    %vm66 = vcmp.lt.s32.totalorder %v62, 0
    %vm67 = vmand %vm65, %vm63
    %vm68 = vmand %vm66, %vm64
    %v69 = vadd.s32 %v55, 64
    %v70 = vadd.s32 %v62, 64
    %v71 = vsel %vm67, %v69, %v55
    %v72 = vsel %vm68, %v70, %v62
    %vm73 = vcmp.lt.s32.totalorder %v71, 32
    %vm74 = vcmp.lt.s32.totalorder %v72, 32
    %vm75 = vcmp.lt.s32.totalorder %v47, 32
    %v76 = vld [vmem:[%s0] sm:$0xff]
    %v77 = vld [vmem:[%s0 + $0x8] sm:$0xff]
    %v78 = vld [vmem:[%s0 + $0x10] sm:$0xff]
    %v79 = vld [vmem:[%s0 + $0x18] sm:$0xff]
    %v80 = vld [vmem:[%s0 + $0x20] sm:$0xff]
    %v81 = vld [vmem:[%s0 + $0x28] sm:$0xff]
    %v82 = vld [vmem:[%s0 + $0x30] sm:$0xff]
    %v83 = vld [vmem:[%s0 + $0x38] sm:$0xff]
    %v84 = vld [vmem:[%s1] sm:$0xff]
    %v85 = vld [vmem:[%s1 + $0x8] sm:$0xff]
    %v86 = vld [vmem:[%s1 + $0x10] sm:$0xff]
    %v87 = vld [vmem:[%s1 + $0x18] sm:$0xff]
    %v88 = vld [vmem:[%s1 + $0x20] sm:$0xff]
    %v89 = vld [vmem:[%s1 + $0x28] sm:$0xff]
    %v90 = vld [vmem:[%s1 + $0x30] sm:$0xff]
    %v91 = vld [vmem:[%s1 + $0x38] sm:$0xff]
    %v92 = vld [vmem:[%s3] sm:$0x3]
    %v94 = vlaneseq
    %v95 = vshrl.u32 %v94, 7
    %v96 = vsub.s32 0, %v95
    %v97 = vrot.slane %v92, %v96
    %v98 = vlaneseq
    %v99 = vshrl.u32 %v98, 7
    %v100 = vsub.s32 1, %v99
    %v101 = vrot.slane %v92, %v100
    %vm104 = vcmask 261120
    %v106 = vsel %vm104, %v76, 0
    %v109 = vsel %vm104, %v77, 0
    %v112 = vsel %vm104, %v78, 0
    %v115 = vsel %vm104, %v79, 0
    %v118 = vsel %vm104, %v80, 0
    %v121 = vsel %vm104, %v81, 0
    %v124 = vsel %vm104, %v82, 0
    %v127 = vsel %vm104, %v83, 0
    %129 = vmatprep.subr.mxu0 %v85
    %130 = vmatpush1.msra.mxu0 %v84
    %131 = vmatprep.subr.mxu0 %v87
    %132 = vmatpush1.msra.mxu0 %v86
    %133 = vmatprep.subr.mxu0 %v89
    %134 = vmatpush1.msra.mxu0 %v88
    %135 = vmatprep.subr.mxu0 %v91
    %136 = vmatpush1.msra.mxu0 %v90
    %137 = vmatprep.subr.mxu0 0.0
    %138 = vmatpush1.msra.mxu0 0.0
    %139 = vmatprep.subr.mxu0 0.0
    %140 = vmatpush1.msra.mxu0 0.0
    %141 = vmatprep.subr.mxu0 0.0
    %142 = vmatpush1.msra.mxu0 0.0
    %143 = vmatprep.subr.mxu0 0.0
    %144 = vmatpush1.msra.mxu0 0.0
    %145 = vmatprep.subr.mxu0 0.0
    %146 = vmatpush1.msra.mxu0 0.0
    %147 = vmatprep.subr.mxu0 0.0
    %148 = vmatpush1.msra.mxu0 0.0
    %149 = vmatprep.subr.mxu0 0.0
    %150 = vmatpush1.msra.mxu0 0.0
    %151 = vmatprep.subr.mxu0 0.0
    %152 = vmatpush1.msra.mxu0 0.0
    %153 = vmatprep.subr.mxu0 0.0
    %154 = vmatpush1.msra.mxu0 0.0
    %155 = vmatprep.subr.mxu0 0.0
    %156 = vmatpush1.msra.mxu0 0.0
    %157 = vmatprep.subr.mxu0 0.0
    %158 = vmatpush1.msra.mxu0 0.0
    %159 = vmatprep.subr.mxu0 0.0
    %160 = vmatpush1.msra.mxu0 0.0
    %161 = vmatprep.subr.mxu0 0.0
    %162 = vmatpush1.msra.mxu0 0.0
    %163 = vmatprep.subr.mxu0 0.0
    %164 = vmatpush1.msra.mxu0 0.0
    %165 = vmatprep.subr.mxu0 0.0
    %166 = vmatpush1.msra.mxu0 0.0
    %167 = vmatprep.subr.mxu0 0.0
    %168 = vmatpush1.msra.mxu0 0.0
    %169 = vmatprep.subr.mxu0 0.0
    %170 = vmatpush1.msra.mxu0 0.0
    %171 = vmatprep.subr.mxu0 0.0
    %172 = vmatpush1.msra.mxu0 0.0
    %173 = vmatprep.subr.mxu0 0.0
    %174 = vmatpush1.msra.mxu0 0.0
    %175 = vmatprep.subr.mxu0 0.0
    %176 = vmatpush1.msra.mxu0 0.0
    %177 = vmatprep.subr.mxu0 0.0
    %178 = vmatpush1.msra.mxu0 0.0
    %179 = vmatprep.subr.mxu0 0.0
    %180 = vmatpush1.msra.mxu0 0.0
    %181 = vmatprep.subr.mxu0 0.0
    %182 = vmatpush1.msra.mxu0 0.0
    %183 = vmatprep.subr.mxu0 0.0
    %184 = vmatpush1.msra.mxu0 0.0
    %185 = vmatprep.subr.mxu0 0.0
    %186 = vmatpush1.msra.mxu0 0.0
    %187 = vmatprep.subr.mxu0 0.0
    %188 = vmatpush1.msra.mxu0 0.0
    %189 = vmatprep.subr.mxu0 0.0
    %190 = vmatpush1.msra.mxu0 0.0
    %191 = vmatprep.subr.mxu0 0.0
    %192 = vmatpush1.msra.mxu0 0.0
    %193 = vmatprep.mubr.f32.mxu0 0.0
    %194 = vmatmul.mubr.f32.gmra.mrb[0].mxu0 %v106
    %v195 = vpop.f32.mrb[0].mxu0
    %v196 = vadd.f32 %v97, %v195
    %v197 = vpop.f32.mrb[0].mxu0
    %v198 = vadd.f32 %v101, %v197
    %199 = vmatprep.mubr.f32.mxu0 0.0
    %200 = vmatmul.mubr.f32.gmra.mrb[0].mxu0 %v109
    %v201 = vpop.f32.mrb[0].mxu0
    %v202 = vadd.f32 %v97, %v201
    %v203 = vpop.f32.mrb[0].mxu0
    %v204 = vadd.f32 %v101, %v203
    %205 = vmatprep.mubr.f32.mxu0 0.0
    %206 = vmatmul.mubr.f32.gmra.mrb[0].mxu0 %v112
    %v207 = vpop.f32.mrb[0].mxu0
    %v208 = vadd.f32 %v97, %v207
    %v209 = vpop.f32.mrb[0].mxu0
    %v210 = vadd.f32 %v101, %v209
    %211 = vmatprep.mubr.f32.mxu0 0.0
    %212 = vmatmul.mubr.f32.gmra.mrb[0].mxu0 %v115
    %v213 = vpop.f32.mrb[0].mxu0
    %v214 = vadd.f32 %v97, %v213
    %v215 = vpop.f32.mrb[0].mxu0
    %v216 = vadd.f32 %v101, %v215
    %217 = vmatprep.mubr.f32.mxu0 0.0
    %218 = vmatmul.mubr.f32.gmra.mrb[0].mxu0 %v118
    %v219 = vpop.f32.mrb[0].mxu0
    %v220 = vadd.f32 %v97, %v219
    %v221 = vpop.f32.mrb[0].mxu0
    %v222 = vadd.f32 %v101, %v221
    %223 = vmatprep.mubr.f32.mxu0 0.0
    %224 = vmatmul.mubr.f32.gmra.mrb[0].mxu0 %v121
    %v225 = vpop.f32.mrb[0].mxu0
    %v226 = vadd.f32 %v97, %v225
    %v227 = vpop.f32.mrb[0].mxu0
    %v228 = vadd.f32 %v101, %v227
    %229 = vmatprep.mubr.f32.mxu0 0.0
    %230 = vmatmul.mubr.f32.gmra.mrb[0].mxu0 %v124
    %v231 = vpop.f32.mrb[0].mxu0
    %v232 = vadd.f32 %v97, %v231
    %v233 = vpop.f32.mrb[0].mxu0
    %v234 = vadd.f32 %v101, %v233
    %235 = vmatprep.mubr.f32.mxu0 0.0
    %236 = vmatmul.mubr.f32.gmra.mrb[0].mxu0 %v127
    %v237 = vpop.f32.mrb[0].mxu0
    %v238 = vadd.f32 %v97, %v237
    %v239 = vpop.f32.mrb[0].mxu0
    %v240 = vadd.f32 %v101, %v239
    %241 = vdwg.mxu0
    %v242 = vsel %vm73, 1, 0
    %v243 = vsel %vm74, 1, 0
    %vm244 = vcmp.eq.s32.totalorder %v242, 1
    %vm245 = vcmp.eq.s32.totalorder %v243, 1
    %v246 = vsel %vm244, %v196, %v238
    %v247 = vsel %vm245, %v198, %v240
    %248 = vst [vmem:[#allocation2] sm:$0xff] %v246
    %249 = vst [vmem:[#allocation2 + $0x8] sm:$0xff] %v247
    %v250 = vsel %vm244, %v202, %v232
    %v251 = vsel %vm245, %v204, %v234
    %252 = vst [vmem:[#allocation2 + $0x10] sm:$0xff] %v250
    %253 = vst [vmem:[#allocation2 + $0x18] sm:$0xff] %v251
    %v254 = vsel %vm244, %v208, %v226
    %v255 = vsel %vm245, %v210, %v228
    %256 = vst [vmem:[#allocation2 + $0x20] sm:$0xff] %v254
    %257 = vst [vmem:[#allocation2 + $0x28] sm:$0xff] %v255
    %v258 = vsel %vm244, %v214, %v220
    %v259 = vsel %vm245, %v216, %v222
    %260 = vst [vmem:[#allocation2 + $0x30] sm:$0xff] %v258
    %261 = vst [vmem:[#allocation2 + $0x38] sm:$0xff] %v259
    %v262 = vsel %vm244, %v220, %v214
    %v263 = vsel %vm245, %v222, %v216
    %264 = vst [vmem:[#allocation2 + $0x40] sm:$0xff] %v262
    %265 = vst [vmem:[#allocation2 + $0x48] sm:$0xff] %v263
    %v266 = vsel %vm244, %v226, %v208
    %v267 = vsel %vm245, %v228, %v210
    %268 = vst [vmem:[#allocation2 + $0x50] sm:$0xff] %v266
    %269 = vst [vmem:[#allocation2 + $0x58] sm:$0xff] %v267
    %v270 = vsel %vm244, %v232, %v202
    %v271 = vsel %vm245, %v234, %v204
    %272 = vst [vmem:[#allocation2 + $0x60] sm:$0xff] %v270
    %273 = vst [vmem:[#allocation2 + $0x68] sm:$0xff] %v271
    %v274 = vsel %vm244, %v238, %v196
    %v275 = vsel %vm245, %v240, %v198
    %276 = vst [vmem:[#allocation2 + $0x70] sm:$0xff] %v274
    %277 = vst [vmem:[#allocation2 + $0x78] sm:$0xff] %v275
    %v278 = vld [vmem:[%s2] sm:$0xff]
    %v279 = vld [vmem:[%s2 + $0x8] sm:$0xff]
    %v280 = vld [vmem:[%s2 + $0x10] sm:$0xff]
    %v281 = vld [vmem:[%s2 + $0x18] sm:$0xff]
    %v282 = vld [vmem:[%s2 + $0x20] sm:$0xff]
    %v283 = vld [vmem:[%s2 + $0x28] sm:$0xff]
    %v284 = vld [vmem:[%s2 + $0x30] sm:$0xff]
    %v285 = vld [vmem:[%s2 + $0x38] sm:$0xff]
    %v286 = vld [vmem:[%s2 + $0x40] sm:$0xff]
    %v287 = vld [vmem:[%s2 + $0x48] sm:$0xff]
    %v288 = vld [vmem:[%s2 + $0x50] sm:$0xff]
    %v289 = vld [vmem:[%s2 + $0x58] sm:$0xff]
    %v290 = vld [vmem:[%s2 + $0x60] sm:$0xff]
    %v291 = vld [vmem:[%s2 + $0x68] sm:$0xff]
    %v292 = vld [vmem:[%s2 + $0x70] sm:$0xff]
    %v293 = vld [vmem:[%s2 + $0x78] sm:$0xff]
    %v294 = vld [vmem:[#allocation2] sm:$0xff]
    %v295 = vld [vmem:[#allocation2 + $0x8] sm:$0xff]
    %vm296 = vcmask 523264
    %v298 = vsel %vm296, 0.0, 0
    %300 = vmatprep.subr.mxu0 %v279
    %301 = vmatpush1.msra.mxu0 %v278
    %302 = vmatprep.subr.mxu0 %v281
    %303 = vmatpush1.msra.mxu0 %v280
    %304 = vmatprep.subr.mxu0 %v283
    %305 = vmatpush1.msra.mxu0 %v282
    %306 = vmatprep.subr.mxu0 %v285
    %307 = vmatpush1.msra.mxu0 %v284
    %308 = vmatprep.subr.mxu0 %v287
    %309 = vmatpush1.msra.mxu0 %v286
    %310 = vmatprep.subr.mxu0 %v289
    %311 = vmatpush1.msra.mxu0 %v288
    %312 = vmatprep.subr.mxu0 %v291
    %313 = vmatpush1.msra.mxu0 %v290
    %314 = vmatprep.subr.mxu0 %v293
    %315 = vmatpush1.msra.mxu0 %v292
    %316 = vmatprep.subr.mxu0 0.0
    %317 = vmatpush1.msra.mxu0 0.0
    %318 = vmatprep.subr.mxu0 0.0
    %319 = vmatpush1.msra.mxu0 0.0
    %320 = vmatprep.subr.mxu0 0.0
    %321 = vmatpush1.msra.mxu0 0.0
    %322 = vmatprep.subr.mxu0 0.0
    %323 = vmatpush1.msra.mxu0 0.0
    %324 = vmatprep.subr.mxu0 0.0
    %325 = vmatpush1.msra.mxu0 0.0
    %326 = vmatprep.subr.mxu0 0.0
    %327 = vmatpush1.msra.mxu0 0.0
    %328 = vmatprep.subr.mxu0 0.0
    %329 = vmatpush1.msra.mxu0 0.0
    %330 = vmatprep.subr.mxu0 0.0
    %331 = vmatpush1.msra.mxu0 0.0
    %332 = vmatprep.subr.mxu0 0.0
    %333 = vmatpush1.msra.mxu0 0.0
    %334 = vmatprep.subr.mxu0 0.0
    %335 = vmatpush1.msra.mxu0 0.0
    %336 = vmatprep.subr.mxu0 0.0
    %337 = vmatpush1.msra.mxu0 0.0
    %338 = vmatprep.subr.mxu0 0.0
    %339 = vmatpush1.msra.mxu0 0.0
    %340 = vmatprep.subr.mxu0 0.0
    %341 = vmatpush1.msra.mxu0 0.0
    %342 = vmatprep.subr.mxu0 0.0
    %343 = vmatpush1.msra.mxu0 0.0
    %344 = vmatprep.subr.mxu0 0.0
    %345 = vmatpush1.msra.mxu0 0.0
    %346 = vmatprep.subr.mxu0 0.0
    %347 = vmatpush1.msra.mxu0 0.0
    %348 = vmatprep.subr.mxu0 0.0
    %349 = vmatpush1.msra.mxu0 0.0
    %350 = vmatprep.subr.mxu0 0.0
    %351 = vmatpush1.msra.mxu0 0.0
    %352 = vmatprep.subr.mxu0 0.0
    %353 = vmatpush1.msra.mxu0 0.0
    %354 = vmatprep.subr.mxu0 0.0
    %355 = vmatpush1.msra.mxu0 0.0
    %356 = vmatprep.subr.mxu0 0.0
    %357 = vmatpush1.msra.mxu0 0.0
    %358 = vmatprep.subr.mxu0 0.0
    %359 = vmatpush1.msra.mxu0 0.0
    %360 = vmatprep.subr.mxu0 0.0
    %361 = vmatpush1.msra.mxu0 0.0
    %362 = vmatprep.subr.mxu0 0.0
    %363 = vmatpush1.msra.mxu0 0.0
    %364 = vmatprep.mubr.f32.mxu0 0.0
    %365 = vmatmul.mubr.f32.gmra.mrb[0].mxu0 %v298
    %v366 = vpop.f32.mrb[0].mxu0
    %v367 = vadd.f32 0.0, %v366
    %v368 = vpop.f32.mrb[0].mxu0
    %v369 = vadd.f32 0.0, %v368
    %370 = vdwg.mxu0
    %v371 = vadd.f32 %v294, %v367
    %v372 = vadd.f32 %v295, %v369
    %v373 = vxor.u32 %v371, 2147483648
    %v374 = vmul.f32 %v373, 1.442695
    %v375 = vpow.pop %v374
    %v376 = vadd.f32 %v375, 1.0
    %v377 = vrcp.pop %v376
    %v378 = vmul.f32 1.0, %v377
    %v379 = vtanh.pop %v372
    %v380 = vxor.u32 %v372, 2147483648
    %v381 = vmul.f32 %v380, 1.442695
    %v382 = vpow.pop %v381
    %v383 = vadd.f32 %v382, 1.0
    %v384 = vrcp.pop %v383
    %v385 = vmul.f32 1.0, %v384
    %v386 = vmul.f32 %v378, 0.0
    %v387 = vmul.f32 %v378, %v379
    %389 = vrot.lane.b32.xlu0 %v387, 64
    %v390 = vpop.permute.xlu0 %389
    %v392 = vadd.f32 %v386, %v390
    %v393 = vtanh.pop %v392
    %v394 = vmul.f32 %v385, %v393
    %396 = vrot.lane.b32.xlu0 %v394, 64
    %v397 = vpop.permute.xlu0 %396
    %399 = vst.msk [vmem:[#allocation3] sm:$0xff] %vm104, %v397
    %vm400 = vcmask 523520
    %401 = vst.msk [vmem:[#allocation3 + $0x38] sm:$0xff] %vm400, %v397
    %v402 = vld [vmem:[#allocation2 + $0x10] sm:$0xff]
    %v403 = vld [vmem:[#allocation2 + $0x18] sm:$0xff]
    %v404 = vsel %vm296, %v397, 0
    %406 = vmatprep.subr.mxu0 %v279
    %407 = vmatpush1.msra.mxu0 %v278
    %408 = vmatprep.subr.mxu0 %v281
    %409 = vmatpush1.msra.mxu0 %v280
    %410 = vmatprep.subr.mxu0 %v283
    %411 = vmatpush1.msra.mxu0 %v282
    %412 = vmatprep.subr.mxu0 %v285
    %413 = vmatpush1.msra.mxu0 %v284
    %414 = vmatprep.subr.mxu0 %v287
    %415 = vmatpush1.msra.mxu0 %v286
    %416 = vmatprep.subr.mxu0 %v289
    %417 = vmatpush1.msra.mxu0 %v288
    %418 = vmatprep.subr.mxu0 %v291
    %419 = vmatpush1.msra.mxu0 %v290
    %420 = vmatprep.subr.mxu0 %v293
    %421 = vmatpush1.msra.mxu0 %v292
    %422 = vmatprep.subr.mxu0 0.0
    %423 = vmatpush1.msra.mxu0 0.0
    %424 = vmatprep.subr.mxu0 0.0
    %425 = vmatpush1.msra.mxu0 0.0
    %426 = vmatprep.subr.mxu0 0.0
    %427 = vmatpush1.msra.mxu0 0.0
    %428 = vmatprep.subr.mxu0 0.0
    %429 = vmatpush1.msra.mxu0 0.0
    %430 = vmatprep.subr.mxu0 0.0
    %431 = vmatpush1.msra.mxu0 0.0
    %432 = vmatprep.subr.mxu0 0.0
    %433 = vmatpush1.msra.mxu0 0.0
    %434 = vmatprep.subr.mxu0 0.0
    %435 = vmatpush1.msra.mxu0 0.0
    %436 = vmatprep.subr.mxu0 0.0
    %437 = vmatpush1.msra.mxu0 0.0
    %438 = vmatprep.subr.mxu0 0.0
    %439 = vmatpush1.msra.mxu0 0.0
    %440 = vmatprep.subr.mxu0 0.0
    %441 = vmatpush1.msra.mxu0 0.0
    %442 = vmatprep.subr.mxu0 0.0
    %443 = vmatpush1.msra.mxu0 0.0
    %444 = vmatprep.subr.mxu0 0.0
    %445 = vmatpush1.msra.mxu0 0.0
    %446 = vmatprep.subr.mxu0 0.0
    %447 = vmatpush1.msra.mxu0 0.0
    %448 = vmatprep.subr.mxu0 0.0
    %449 = vmatpush1.msra.mxu0 0.0
    %450 = vmatprep.subr.mxu0 0.0
    %451 = vmatpush1.msra.mxu0 0.0
    %452 = vmatprep.subr.mxu0 0.0
    %453 = vmatpush1.msra.mxu0 0.0
    %454 = vmatprep.subr.mxu0 0.0
    %455 = vmatpush1.msra.mxu0 0.0
    %456 = vmatprep.subr.mxu0 0.0
    %457 = vmatpush1.msra.mxu0 0.0
    %458 = vmatprep.subr.mxu0 0.0
    %459 = vmatpush1.msra.mxu0 0.0
    %460 = vmatprep.subr.mxu0 0.0
    %461 = vmatpush1.msra.mxu0 0.0
    %462 = vmatprep.subr.mxu0 0.0
    %463 = vmatpush1.msra.mxu0 0.0
    %464 = vmatprep.subr.mxu0 0.0
    %465 = vmatpush1.msra.mxu0 0.0
    %466 = vmatprep.subr.mxu0 0.0
    %467 = vmatpush1.msra.mxu0 0.0
    %468 = vmatprep.subr.mxu0 0.0
    %469 = vmatpush1.msra.mxu0 0.0
    %470 = vmatprep.mubr.f32.mxu0 0.0
    %471 = vmatmul.mubr.f32.gmra.mrb[0].mxu0 %v404
    %v472 = vpop.f32.mrb[0].mxu0
    %v473 = vadd.f32 0.0, %v472
    %v474 = vpop.f32.mrb[0].mxu0
    %v475 = vadd.f32 0.0, %v474
    %476 = vdwg.mxu0
    %v477 = vadd.f32 %v402, %v473
    %v478 = vadd.f32 %v403, %v475
    %v479 = vxor.u32 %v477, 2147483648
    %v480 = vmul.f32 %v479, 1.442695
    %v481 = vpow.pop %v480
    %v482 = vadd.f32 %v481, 1.0
    %v483 = vrcp.pop %v482
    %v484 = vmul.f32 1.0, %v483
    %v485 = vtanh.pop %v478
    %v486 = vxor.u32 %v478, 2147483648
    %v487 = vmul.f32 %v486, 1.442695
    %v488 = vpow.pop %v487
    %v489 = vadd.f32 %v488, 1.0
    %v490 = vrcp.pop %v489
    %v491 = vmul.f32 1.0, %v490
    %v492 = vmul.f32 %v484, %v392
    %v493 = vmul.f32 %v484, %v485
    %495 = vrot.lane.b32.xlu0 %v493, 64
    %v496 = vpop.permute.xlu0 %495
    %v498 = vadd.f32 %v492, %v496
    %v499 = vtanh.pop %v498
    %v500 = vmul.f32 %v491, %v499
    %502 = vrot.lane.b32.xlu0 %v500, 64
    %v503 = vpop.permute.xlu0 %502
    %505 = vst.msk [vmem:[#allocation3 + $0x8] sm:$0xff] %vm104, %v503
    %506 = vst.msk [vmem:[#allocation3 + $0x30] sm:$0xff] %vm400, %v503
    %v507 = vld [vmem:[#allocation2 + $0x20] sm:$0xff]
    %v508 = vld [vmem:[#allocation2 + $0x28] sm:$0xff]
    %v509 = vsel %vm296, %v503, 0
    %511 = vmatprep.subr.mxu0 %v279
    %512 = vmatpush1.msra.mxu0 %v278
    %513 = vmatprep.subr.mxu0 %v281
    %514 = vmatpush1.msra.mxu0 %v280
    %515 = vmatprep.subr.mxu0 %v283
    %516 = vmatpush1.msra.mxu0 %v282
    %517 = vmatprep.subr.mxu0 %v285
    %518 = vmatpush1.msra.mxu0 %v284
    %519 = vmatprep.subr.mxu0 %v287
    %520 = vmatpush1.msra.mxu0 %v286
    %521 = vmatprep.subr.mxu0 %v289
    %522 = vmatpush1.msra.mxu0 %v288
    %523 = vmatprep.subr.mxu0 %v291
    %524 = vmatpush1.msra.mxu0 %v290
    %525 = vmatprep.subr.mxu0 %v293
    %526 = vmatpush1.msra.mxu0 %v292
    %527 = vmatprep.subr.mxu0 0.0
    %528 = vmatpush1.msra.mxu0 0.0
    %529 = vmatprep.subr.mxu0 0.0
    %530 = vmatpush1.msra.mxu0 0.0
    %531 = vmatprep.subr.mxu0 0.0
    %532 = vmatpush1.msra.mxu0 0.0
    %533 = vmatprep.subr.mxu0 0.0
    %534 = vmatpush1.msra.mxu0 0.0
    %535 = vmatprep.subr.mxu0 0.0
    %536 = vmatpush1.msra.mxu0 0.0
    %537 = vmatprep.subr.mxu0 0.0
    %538 = vmatpush1.msra.mxu0 0.0
    %539 = vmatprep.subr.mxu0 0.0
    %540 = vmatpush1.msra.mxu0 0.0
    %541 = vmatprep.subr.mxu0 0.0
    %542 = vmatpush1.msra.mxu0 0.0
    %543 = vmatprep.subr.mxu0 0.0
    %544 = vmatpush1.msra.mxu0 0.0
    %545 = vmatprep.subr.mxu0 0.0
    %546 = vmatpush1.msra.mxu0 0.0
    %547 = vmatprep.subr.mxu0 0.0
    %548 = vmatpush1.msra.mxu0 0.0
    %549 = vmatprep.subr.mxu0 0.0
    %550 = vmatpush1.msra.mxu0 0.0
    %551 = vmatprep.subr.mxu0 0.0
    %552 = vmatpush1.msra.mxu0 0.0
    %553 = vmatprep.subr.mxu0 0.0
    %554 = vmatpush1.msra.mxu0 0.0
    %555 = vmatprep.subr.mxu0 0.0
    %556 = vmatpush1.msra.mxu0 0.0
    %557 = vmatprep.subr.mxu0 0.0
    %558 = vmatpush1.msra.mxu0 0.0
    %559 = vmatprep.subr.mxu0 0.0
    %560 = vmatpush1.msra.mxu0 0.0
    %561 = vmatprep.subr.mxu0 0.0
    %562 = vmatpush1.msra.mxu0 0.0
    %563 = vmatprep.subr.mxu0 0.0
    %564 = vmatpush1.msra.mxu0 0.0
    %565 = vmatprep.subr.mxu0 0.0
    %566 = vmatpush1.msra.mxu0 0.0
    %567 = vmatprep.subr.mxu0 0.0
    %568 = vmatpush1.msra.mxu0 0.0
    %569 = vmatprep.subr.mxu0 0.0
    %570 = vmatpush1.msra.mxu0 0.0
    %571 = vmatprep.subr.mxu0 0.0
    %572 = vmatpush1.msra.mxu0 0.0
    %573 = vmatprep.subr.mxu0 0.0
    %574 = vmatpush1.msra.mxu0 0.0
    %575 = vmatprep.mubr.f32.mxu0 0.0
    %576 = vmatmul.mubr.f32.gmra.mrb[0].mxu0 %v509
    %v577 = vpop.f32.mrb[0].mxu0
    %v578 = vadd.f32 0.0, %v577
    %v579 = vpop.f32.mrb[0].mxu0
    %v580 = vadd.f32 0.0, %v579
    %581 = vdwg.mxu0
    %v582 = vadd.f32 %v507, %v578
    %v583 = vadd.f32 %v508, %v580
    %v584 = vxor.u32 %v582, 2147483648
    %v585 = vmul.f32 %v584, 1.442695
    %v586 = vpow.pop %v585
    %v587 = vadd.f32 %v586, 1.0
    %v588 = vrcp.pop %v587
    %v589 = vmul.f32 1.0, %v588
    %v590 = vtanh.pop %v583
    %v591 = vxor.u32 %v583, 2147483648
    %v592 = vmul.f32 %v591, 1.442695
    %v593 = vpow.pop %v592
    %v594 = vadd.f32 %v593, 1.0
    %v595 = vrcp.pop %v594
    %v596 = vmul.f32 1.0, %v595
    %v597 = vmul.f32 %v589, %v498
    %v598 = vmul.f32 %v589, %v590
    %600 = vrot.lane.b32.xlu0 %v598, 64
    %v601 = vpop.permute.xlu0 %600
    %v603 = vadd.f32 %v597, %v601
    %v604 = vtanh.pop %v603
    %v605 = vmul.f32 %v596, %v604
    %607 = vrot.lane.b32.xlu0 %v605, 64
    %v608 = vpop.permute.xlu0 %607
    %610 = vst.msk [vmem:[#allocation3 + $0x10] sm:$0xff] %vm104, %v608
    %611 = vst.msk [vmem:[#allocation3 + $0x28] sm:$0xff] %vm400, %v608
    %v612 = vld [vmem:[#allocation2 + $0x30] sm:$0xff]
    %v613 = vld [vmem:[#allocation2 + $0x38] sm:$0xff]
    %v614 = vsel %vm296, %v608, 0
    %616 = vmatprep.subr.mxu0 %v279
    %617 = vmatpush1.msra.mxu0 %v278
    %618 = vmatprep.subr.mxu0 %v281
    %619 = vmatpush1.msra.mxu0 %v280
    %620 = vmatprep.subr.mxu0 %v283
    %621 = vmatpush1.msra.mxu0 %v282
    %622 = vmatprep.subr.mxu0 %v285
    %623 = vmatpush1.msra.mxu0 %v284
    %624 = vmatprep.subr.mxu0 %v287
    %625 = vmatpush1.msra.mxu0 %v286
    %626 = vmatprep.subr.mxu0 %v289
    %627 = vmatpush1.msra.mxu0 %v288
    %628 = vmatprep.subr.mxu0 %v291
    %629 = vmatpush1.msra.mxu0 %v290
    %630 = vmatprep.subr.mxu0 %v293
    %631 = vmatpush1.msra.mxu0 %v292
    %632 = vmatprep.subr.mxu0 0.0
    %633 = vmatpush1.msra.mxu0 0.0
    %634 = vmatprep.subr.mxu0 0.0
    %635 = vmatpush1.msra.mxu0 0.0
    %636 = vmatprep.subr.mxu0 0.0
    %637 = vmatpush1.msra.mxu0 0.0
    %638 = vmatprep.subr.mxu0 0.0
    %639 = vmatpush1.msra.mxu0 0.0
    %640 = vmatprep.subr.mxu0 0.0
    %641 = vmatpush1.msra.mxu0 0.0
    %642 = vmatprep.subr.mxu0 0.0
    %643 = vmatpush1.msra.mxu0 0.0
    %644 = vmatprep.subr.mxu0 0.0
    %645 = vmatpush1.msra.mxu0 0.0
    %646 = vmatprep.subr.mxu0 0.0
    %647 = vmatpush1.msra.mxu0 0.0
    %648 = vmatprep.subr.mxu0 0.0
    %649 = vmatpush1.msra.mxu0 0.0
    %650 = vmatprep.subr.mxu0 0.0
    %651 = vmatpush1.msra.mxu0 0.0
    %652 = vmatprep.subr.mxu0 0.0
    %653 = vmatpush1.msra.mxu0 0.0
    %654 = vmatprep.subr.mxu0 0.0
    %655 = vmatpush1.msra.mxu0 0.0
    %656 = vmatprep.subr.mxu0 0.0
    %657 = vmatpush1.msra.mxu0 0.0
    %658 = vmatprep.subr.mxu0 0.0
    %659 = vmatpush1.msra.mxu0 0.0
    %660 = vmatprep.subr.mxu0 0.0
    %661 = vmatpush1.msra.mxu0 0.0
    %662 = vmatprep.subr.mxu0 0.0
    %663 = vmatpush1.msra.mxu0 0.0
    %664 = vmatprep.subr.mxu0 0.0
    %665 = vmatpush1.msra.mxu0 0.0
    %666 = vmatprep.subr.mxu0 0.0
    %667 = vmatpush1.msra.mxu0 0.0
    %668 = vmatprep.subr.mxu0 0.0
    %669 = vmatpush1.msra.mxu0 0.0
    %670 = vmatprep.subr.mxu0 0.0
    %671 = vmatpush1.msra.mxu0 0.0
    %672 = vmatprep.subr.mxu0 0.0
    %673 = vmatpush1.msra.mxu0 0.0
    %674 = vmatprep.subr.mxu0 0.0
    %675 = vmatpush1.msra.mxu0 0.0
    %676 = vmatprep.subr.mxu0 0.0
    %677 = vmatpush1.msra.mxu0 0.0
    %678 = vmatprep.subr.mxu0 0.0
    %679 = vmatpush1.msra.mxu0 0.0
    %680 = vmatprep.mubr.f32.mxu0 0.0
    %681 = vmatmul.mubr.f32.gmra.mrb[0].mxu0 %v614
    %v682 = vpop.f32.mrb[0].mxu0
    %v683 = vadd.f32 0.0, %v682
    %v684 = vpop.f32.mrb[0].mxu0
    %v685 = vadd.f32 0.0, %v684
    %686 = vdwg.mxu0
    %v687 = vadd.f32 %v612, %v683
    %v688 = vadd.f32 %v613, %v685
    %v689 = vxor.u32 %v687, 2147483648
    %v690 = vmul.f32 %v689, 1.442695
    %v691 = vpow.pop %v690
    %v692 = vadd.f32 %v691, 1.0
    %v693 = vrcp.pop %v692
    %v694 = vmul.f32 1.0, %v693
    %v695 = vtanh.pop %v688
    %v696 = vxor.u32 %v688, 2147483648
    %v697 = vmul.f32 %v696, 1.442695
    %v698 = vpow.pop %v697
    %v699 = vadd.f32 %v698, 1.0
    %v700 = vrcp.pop %v699
    %v701 = vmul.f32 1.0, %v700
    %v702 = vmul.f32 %v694, %v603
    %v703 = vmul.f32 %v694, %v695
    %705 = vrot.lane.b32.xlu0 %v703, 64
    %v706 = vpop.permute.xlu0 %705
    %v708 = vadd.f32 %v702, %v706
    %v709 = vtanh.pop %v708
    %v710 = vmul.f32 %v701, %v709
    %712 = vrot.lane.b32.xlu0 %v710, 64
    %v713 = vpop.permute.xlu0 %712
    %715 = vst.msk [vmem:[#allocation3 + $0x18] sm:$0xff] %vm104, %v713
    %716 = vst.msk [vmem:[#allocation3 + $0x20] sm:$0xff] %vm400, %v713
    %v717 = vld [vmem:[#allocation2 + $0x40] sm:$0xff]
    %v718 = vld [vmem:[#allocation2 + $0x48] sm:$0xff]
    %v719 = vsel %vm296, %v713, 0
    %721 = vmatprep.subr.mxu0 %v279
    %722 = vmatpush1.msra.mxu0 %v278
    %723 = vmatprep.subr.mxu0 %v281
    %724 = vmatpush1.msra.mxu0 %v280
    %725 = vmatprep.subr.mxu0 %v283
    %726 = vmatpush1.msra.mxu0 %v282
    %727 = vmatprep.subr.mxu0 %v285
    %728 = vmatpush1.msra.mxu0 %v284
    %729 = vmatprep.subr.mxu0 %v287
    %730 = vmatpush1.msra.mxu0 %v286
    %731 = vmatprep.subr.mxu0 %v289
    %732 = vmatpush1.msra.mxu0 %v288
    %733 = vmatprep.subr.mxu0 %v291
    %734 = vmatpush1.msra.mxu0 %v290
    %735 = vmatprep.subr.mxu0 %v293
    %736 = vmatpush1.msra.mxu0 %v292
    %737 = vmatprep.subr.mxu0 0.0
    %738 = vmatpush1.msra.mxu0 0.0
    %739 = vmatprep.subr.mxu0 0.0
    %740 = vmatpush1.msra.mxu0 0.0
    %741 = vmatprep.subr.mxu0 0.0
    %742 = vmatpush1.msra.mxu0 0.0
    %743 = vmatprep.subr.mxu0 0.0
    %744 = vmatpush1.msra.mxu0 0.0
    %745 = vmatprep.subr.mxu0 0.0
    %746 = vmatpush1.msra.mxu0 0.0
    %747 = vmatprep.subr.mxu0 0.0
    %748 = vmatpush1.msra.mxu0 0.0
    %749 = vmatprep.subr.mxu0 0.0
    %750 = vmatpush1.msra.mxu0 0.0
    %751 = vmatprep.subr.mxu0 0.0
    %752 = vmatpush1.msra.mxu0 0.0
    %753 = vmatprep.subr.mxu0 0.0
    %754 = vmatpush1.msra.mxu0 0.0
    %755 = vmatprep.subr.mxu0 0.0
    %756 = vmatpush1.msra.mxu0 0.0
    %757 = vmatprep.subr.mxu0 0.0
    %758 = vmatpush1.msra.mxu0 0.0
    %759 = vmatprep.subr.mxu0 0.0
    %760 = vmatpush1.msra.mxu0 0.0
    %761 = vmatprep.subr.mxu0 0.0
    %762 = vmatpush1.msra.mxu0 0.0
    %763 = vmatprep.subr.mxu0 0.0
    %764 = vmatpush1.msra.mxu0 0.0
    %765 = vmatprep.subr.mxu0 0.0
    %766 = vmatpush1.msra.mxu0 0.0
    %767 = vmatprep.subr.mxu0 0.0
    %768 = vmatpush1.msra.mxu0 0.0
    %769 = vmatprep.subr.mxu0 0.0
    %770 = vmatpush1.msra.mxu0 0.0
    %771 = vmatprep.subr.mxu0 0.0
    %772 = vmatpush1.msra.mxu0 0.0
    %773 = vmatprep.subr.mxu0 0.0
    %774 = vmatpush1.msra.mxu0 0.0
    %775 = vmatprep.subr.mxu0 0.0
    %776 = vmatpush1.msra.mxu0 0.0
    %777 = vmatprep.subr.mxu0 0.0
    %778 = vmatpush1.msra.mxu0 0.0
    %779 = vmatprep.subr.mxu0 0.0
    %780 = vmatpush1.msra.mxu0 0.0
    %781 = vmatprep.subr.mxu0 0.0
    %782 = vmatpush1.msra.mxu0 0.0
    %783 = vmatprep.subr.mxu0 0.0
    %784 = vmatpush1.msra.mxu0 0.0
    %785 = vmatprep.mubr.f32.mxu0 0.0
    %786 = vmatmul.mubr.f32.gmra.mrb[0].mxu0 %v719
    %v787 = vpop.f32.mrb[0].mxu0
    %v788 = vadd.f32 0.0, %v787
    %v789 = vpop.f32.mrb[0].mxu0
    %v790 = vadd.f32 0.0, %v789
    %791 = vdwg.mxu0
    %v792 = vadd.f32 %v717, %v788
    %v793 = vadd.f32 %v718, %v790
    %v794 = vxor.u32 %v792, 2147483648
    %v795 = vmul.f32 %v794, 1.442695
    %v796 = vpow.pop %v795
    %v797 = vadd.f32 %v796, 1.0
    %v798 = vrcp.pop %v797
    %v799 = vmul.f32 1.0, %v798
    %v800 = vtanh.pop %v793
    %v801 = vxor.u32 %v793, 2147483648
    %v802 = vmul.f32 %v801, 1.442695
    %v803 = vpow.pop %v802
    %v804 = vadd.f32 %v803, 1.0
    %v805 = vrcp.pop %v804
    %v806 = vmul.f32 1.0, %v805
    %v807 = vmul.f32 %v799, %v708
    %v808 = vmul.f32 %v799, %v800
    %810 = vrot.lane.b32.xlu0 %v808, 64
    %v811 = vpop.permute.xlu0 %810
    %v813 = vadd.f32 %v807, %v811
    %v814 = vtanh.pop %v813
    %v815 = vmul.f32 %v806, %v814
    %817 = vrot.lane.b32.xlu0 %v815, 64
    %v818 = vpop.permute.xlu0 %817
    %820 = vst.msk [vmem:[#allocation3 + $0x20] sm:$0xff] %vm104, %v818
    %821 = vst.msk [vmem:[#allocation3 + $0x18] sm:$0xff] %vm400, %v818
    %v822 = vld [vmem:[#allocation2 + $0x50] sm:$0xff]
    %v823 = vld [vmem:[#allocation2 + $0x58] sm:$0xff]
    %v824 = vsel %vm296, %v818, 0
    %826 = vmatprep.subr.mxu0 %v279
    %827 = vmatpush1.msra.mxu0 %v278
    %828 = vmatprep.subr.mxu0 %v281
    %829 = vmatpush1.msra.mxu0 %v280
    %830 = vmatprep.subr.mxu0 %v283
    %831 = vmatpush1.msra.mxu0 %v282
    %832 = vmatprep.subr.mxu0 %v285
    %833 = vmatpush1.msra.mxu0 %v284
    %834 = vmatprep.subr.mxu0 %v287
    %835 = vmatpush1.msra.mxu0 %v286
    %836 = vmatprep.subr.mxu0 %v289
    %837 = vmatpush1.msra.mxu0 %v288
    %838 = vmatprep.subr.mxu0 %v291
    %839 = vmatpush1.msra.mxu0 %v290
    %840 = vmatprep.subr.mxu0 %v293
    %841 = vmatpush1.msra.mxu0 %v292
    %842 = vmatprep.subr.mxu0 0.0
    %843 = vmatpush1.msra.mxu0 0.0
    %844 = vmatprep.subr.mxu0 0.0
    %845 = vmatpush1.msra.mxu0 0.0
    %846 = vmatprep.subr.mxu0 0.0
    %847 = vmatpush1.msra.mxu0 0.0
    %848 = vmatprep.subr.mxu0 0.0
    %849 = vmatpush1.msra.mxu0 0.0
    %850 = vmatprep.subr.mxu0 0.0
    %851 = vmatpush1.msra.mxu0 0.0
    %852 = vmatprep.subr.mxu0 0.0
    %853 = vmatpush1.msra.mxu0 0.0
    %854 = vmatprep.subr.mxu0 0.0
    %855 = vmatpush1.msra.mxu0 0.0
    %856 = vmatprep.subr.mxu0 0.0
    %857 = vmatpush1.msra.mxu0 0.0
    %858 = vmatprep.subr.mxu0 0.0
    %859 = vmatpush1.msra.mxu0 0.0
    %860 = vmatprep.subr.mxu0 0.0
    %861 = vmatpush1.msra.mxu0 0.0
    %862 = vmatprep.subr.mxu0 0.0
    %863 = vmatpush1.msra.mxu0 0.0
    %864 = vmatprep.subr.mxu0 0.0
    %865 = vmatpush1.msra.mxu0 0.0
    %866 = vmatprep.subr.mxu0 0.0
    %867 = vmatpush1.msra.mxu0 0.0
    %868 = vmatprep.subr.mxu0 0.0
    %869 = vmatpush1.msra.mxu0 0.0
    %870 = vmatprep.subr.mxu0 0.0
    %871 = vmatpush1.msra.mxu0 0.0
    %872 = vmatprep.subr.mxu0 0.0
    %873 = vmatpush1.msra.mxu0 0.0
    %874 = vmatprep.subr.mxu0 0.0
    %875 = vmatpush1.msra.mxu0 0.0
    %876 = vmatprep.subr.mxu0 0.0
    %877 = vmatpush1.msra.mxu0 0.0
    %878 = vmatprep.subr.mxu0 0.0
    %879 = vmatpush1.msra.mxu0 0.0
    %880 = vmatprep.subr.mxu0 0.0
    %881 = vmatpush1.msra.mxu0 0.0
    %882 = vmatprep.subr.mxu0 0.0
    %883 = vmatpush1.msra.mxu0 0.0
    %884 = vmatprep.subr.mxu0 0.0
    %885 = vmatpush1.msra.mxu0 0.0
    %886 = vmatprep.subr.mxu0 0.0
    %887 = vmatpush1.msra.mxu0 0.0
    %888 = vmatprep.subr.mxu0 0.0
    %889 = vmatpush1.msra.mxu0 0.0
    %890 = vmatprep.mubr.f32.mxu0 0.0
    %891 = vmatmul.mubr.f32.gmra.mrb[0].mxu0 %v824
    %v892 = vpop.f32.mrb[0].mxu0
    %v893 = vadd.f32 0.0, %v892
    %v894 = vpop.f32.mrb[0].mxu0
    %v895 = vadd.f32 0.0, %v894
    %896 = vdwg.mxu0
    %v897 = vadd.f32 %v822, %v893
    %v898 = vadd.f32 %v823, %v895
    %v899 = vxor.u32 %v897, 2147483648
    %v900 = vmul.f32 %v899, 1.442695
    %v901 = vpow.pop %v900
    %v902 = vadd.f32 %v901, 1.0
    %v903 = vrcp.pop %v902
    %v904 = vmul.f32 1.0, %v903
    %v905 = vtanh.pop %v898
    %v906 = vxor.u32 %v898, 2147483648
    %v907 = vmul.f32 %v906, 1.442695
    %v908 = vpow.pop %v907
    %v909 = vadd.f32 %v908, 1.0
    %v910 = vrcp.pop %v909
    %v911 = vmul.f32 1.0, %v910
    %v912 = vmul.f32 %v904, %v813
    %v913 = vmul.f32 %v904, %v905
    %915 = vrot.lane.b32.xlu0 %v913, 64
    %v916 = vpop.permute.xlu0 %915
    %v918 = vadd.f32 %v912, %v916
    %v919 = vtanh.pop %v918
    %v920 = vmul.f32 %v911, %v919
    %922 = vrot.lane.b32.xlu0 %v920, 64
    %v923 = vpop.permute.xlu0 %922
    %925 = vst.msk [vmem:[#allocation3 + $0x28] sm:$0xff] %vm104, %v923
    %926 = vst.msk [vmem:[#allocation3 + $0x10] sm:$0xff] %vm400, %v923
    %v927 = vld [vmem:[#allocation2 + $0x60] sm:$0xff]
    %v928 = vld [vmem:[#allocation2 + $0x68] sm:$0xff]
    %v929 = vsel %vm296, %v923, 0
    %931 = vmatprep.subr.mxu0 %v279
    %932 = vmatpush1.msra.mxu0 %v278
    %933 = vmatprep.subr.mxu0 %v281
    %934 = vmatpush1.msra.mxu0 %v280
    %935 = vmatprep.subr.mxu0 %v283
    %936 = vmatpush1.msra.mxu0 %v282
    %937 = vmatprep.subr.mxu0 %v285
    %938 = vmatpush1.msra.mxu0 %v284
    %939 = vmatprep.subr.mxu0 %v287
    %940 = vmatpush1.msra.mxu0 %v286
    %941 = vmatprep.subr.mxu0 %v289
    %942 = vmatpush1.msra.mxu0 %v288
    %943 = vmatprep.subr.mxu0 %v291
    %944 = vmatpush1.msra.mxu0 %v290
    %945 = vmatprep.subr.mxu0 %v293
    %946 = vmatpush1.msra.mxu0 %v292
    %947 = vmatprep.subr.mxu0 0.0
    %948 = vmatpush1.msra.mxu0 0.0
    %949 = vmatprep.subr.mxu0 0.0
    %950 = vmatpush1.msra.mxu0 0.0
    %951 = vmatprep.subr.mxu0 0.0
    %952 = vmatpush1.msra.mxu0 0.0
    %953 = vmatprep.subr.mxu0 0.0
    %954 = vmatpush1.msra.mxu0 0.0
    %955 = vmatprep.subr.mxu0 0.0
    %956 = vmatpush1.msra.mxu0 0.0
    %957 = vmatprep.subr.mxu0 0.0
    %958 = vmatpush1.msra.mxu0 0.0
    %959 = vmatprep.subr.mxu0 0.0
    %960 = vmatpush1.msra.mxu0 0.0
    %961 = vmatprep.subr.mxu0 0.0
    %962 = vmatpush1.msra.mxu0 0.0
    %963 = vmatprep.subr.mxu0 0.0
    %964 = vmatpush1.msra.mxu0 0.0
    %965 = vmatprep.subr.mxu0 0.0
    %966 = vmatpush1.msra.mxu0 0.0
    %967 = vmatprep.subr.mxu0 0.0
    %968 = vmatpush1.msra.mxu0 0.0
    %969 = vmatprep.subr.mxu0 0.0
    %970 = vmatpush1.msra.mxu0 0.0
    %971 = vmatprep.subr.mxu0 0.0
    %972 = vmatpush1.msra.mxu0 0.0
    %973 = vmatprep.subr.mxu0 0.0
    %974 = vmatpush1.msra.mxu0 0.0
    %975 = vmatprep.subr.mxu0 0.0
    %976 = vmatpush1.msra.mxu0 0.0
    %977 = vmatprep.subr.mxu0 0.0
    %978 = vmatpush1.msra.mxu0 0.0
    %979 = vmatprep.subr.mxu0 0.0
    %980 = vmatpush1.msra.mxu0 0.0
    %981 = vmatprep.subr.mxu0 0.0
    %982 = vmatpush1.msra.mxu0 0.0
    %983 = vmatprep.subr.mxu0 0.0
    %984 = vmatpush1.msra.mxu0 0.0
    %985 = vmatprep.subr.mxu0 0.0
    %986 = vmatpush1.msra.mxu0 0.0
    %987 = vmatprep.subr.mxu0 0.0
    %988 = vmatpush1.msra.mxu0 0.0
    %989 = vmatprep.subr.mxu0 0.0
    %990 = vmatpush1.msra.mxu0 0.0
    %991 = vmatprep.subr.mxu0 0.0
    %992 = vmatpush1.msra.mxu0 0.0
    %993 = vmatprep.subr.mxu0 0.0
    %994 = vmatpush1.msra.mxu0 0.0
    %995 = vmatprep.mubr.f32.mxu0 0.0
    %996 = vmatmul.mubr.f32.gmra.mrb[0].mxu0 %v929
    %v997 = vpop.f32.mrb[0].mxu0
    %v998 = vadd.f32 0.0, %v997
    %v999 = vpop.f32.mrb[0].mxu0
    %v1000 = vadd.f32 0.0, %v999
    %1001 = vdwg.mxu0
    %v1002 = vadd.f32 %v927, %v998
    %v1003 = vadd.f32 %v928, %v1000
    %v1004 = vxor.u32 %v1002, 2147483648
    %v1005 = vmul.f32 %v1004, 1.442695
    %v1006 = vpow.pop %v1005
    %v1007 = vadd.f32 %v1006, 1.0
    %v1008 = vrcp.pop %v1007
    %v1009 = vmul.f32 1.0, %v1008
    %v1010 = vtanh.pop %v1003
    %v1011 = vxor.u32 %v1003, 2147483648
    %v1012 = vmul.f32 %v1011, 1.442695
    %v1013 = vpow.pop %v1012
    %v1014 = vadd.f32 %v1013, 1.0
    %v1015 = vrcp.pop %v1014
    %v1016 = vmul.f32 1.0, %v1015
    %v1017 = vmul.f32 %v1009, %v918
    %v1018 = vmul.f32 %v1009, %v1010
    %1020 = vrot.lane.b32.xlu0 %v1018, 64
    %v1021 = vpop.permute.xlu0 %1020
    %v1023 = vadd.f32 %v1017, %v1021
    %v1024 = vtanh.pop %v1023
    %v1025 = vmul.f32 %v1016, %v1024
    %1027 = vrot.lane.b32.xlu0 %v1025, 64
    %v1028 = vpop.permute.xlu0 %1027
    %1030 = vst.msk [vmem:[#allocation3 + $0x30] sm:$0xff] %vm104, %v1028
    %1031 = vst.msk [vmem:[#allocation3 + $0x8] sm:$0xff] %vm400, %v1028
    %v1032 = vld [vmem:[#allocation2 + $0x70] sm:$0xff]
    %v1033 = vld [vmem:[#allocation2 + $0x78] sm:$0xff]
    %v1034 = vsel %vm296, %v1028, 0
    %1036 = vmatprep.subr.mxu0 %v279
    %1037 = vmatpush1.msra.mxu0 %v278
    %1038 = vmatprep.subr.mxu0 %v281
    %1039 = vmatpush1.msra.mxu0 %v280
    %1040 = vmatprep.subr.mxu0 %v283
    %1041 = vmatpush1.msra.mxu0 %v282
    %1042 = vmatprep.subr.mxu0 %v285
    %1043 = vmatpush1.msra.mxu0 %v284
    %1044 = vmatprep.subr.mxu0 %v287
    %1045 = vmatpush1.msra.mxu0 %v286
    %1046 = vmatprep.subr.mxu0 %v289
    %1047 = vmatpush1.msra.mxu0 %v288
    %1048 = vmatprep.subr.mxu0 %v291
    %1049 = vmatpush1.msra.mxu0 %v290
    %1050 = vmatprep.subr.mxu0 %v293
    %1051 = vmatpush1.msra.mxu0 %v292
    %1052 = vmatprep.subr.mxu0 0.0
    %1053 = vmatpush1.msra.mxu0 0.0
    %1054 = vmatprep.subr.mxu0 0.0
    %1055 = vmatpush1.msra.mxu0 0.0
    %1056 = vmatprep.subr.mxu0 0.0
    %1057 = vmatpush1.msra.mxu0 0.0
    %1058 = vmatprep.subr.mxu0 0.0
    %1059 = vmatpush1.msra.mxu0 0.0
    %1060 = vmatprep.subr.mxu0 0.0
    %1061 = vmatpush1.msra.mxu0 0.0
    %1062 = vmatprep.subr.mxu0 0.0
    %1063 = vmatpush1.msra.mxu0 0.0
    %1064 = vmatprep.subr.mxu0 0.0
    %1065 = vmatpush1.msra.mxu0 0.0
    %1066 = vmatprep.subr.mxu0 0.0
    %1067 = vmatpush1.msra.mxu0 0.0
    %1068 = vmatprep.subr.mxu0 0.0
    %1069 = vmatpush1.msra.mxu0 0.0
    %1070 = vmatprep.subr.mxu0 0.0
    %1071 = vmatpush1.msra.mxu0 0.0
    %1072 = vmatprep.subr.mxu0 0.0
    %1073 = vmatpush1.msra.mxu0 0.0
    %1074 = vmatprep.subr.mxu0 0.0
    %1075 = vmatpush1.msra.mxu0 0.0
    %1076 = vmatprep.subr.mxu0 0.0
    %1077 = vmatpush1.msra.mxu0 0.0
    %1078 = vmatprep.subr.mxu0 0.0
    %1079 = vmatpush1.msra.mxu0 0.0
    %1080 = vmatprep.subr.mxu0 0.0
    %1081 = vmatpush1.msra.mxu0 0.0
    %1082 = vmatprep.subr.mxu0 0.0
    %1083 = vmatpush1.msra.mxu0 0.0
    %1084 = vmatprep.subr.mxu0 0.0
    %1085 = vmatpush1.msra.mxu0 0.0
    %1086 = vmatprep.subr.mxu0 0.0
    %1087 = vmatpush1.msra.mxu0 0.0
    %1088 = vmatprep.subr.mxu0 0.0
    %1089 = vmatpush1.msra.mxu0 0.0
    %1090 = vmatprep.subr.mxu0 0.0
    %1091 = vmatpush1.msra.mxu0 0.0
    %1092 = vmatprep.subr.mxu0 0.0
    %1093 = vmatpush1.msra.mxu0 0.0
    %1094 = vmatprep.subr.mxu0 0.0
    %1095 = vmatpush1.msra.mxu0 0.0
    %1096 = vmatprep.subr.mxu0 0.0
    %1097 = vmatpush1.msra.mxu0 0.0
    %1098 = vmatprep.subr.mxu0 0.0
    %1099 = vmatpush1.msra.mxu0 0.0
    %1100 = vmatprep.mubr.f32.mxu0 0.0
    %1101 = vmatmul.mubr.f32.gmra.mrb[0].mxu0 %v1034
    %v1102 = vpop.f32.mrb[0].mxu0
    %v1103 = vadd.f32 0.0, %v1102
    %v1104 = vpop.f32.mrb[0].mxu0
    %v1105 = vadd.f32 0.0, %v1104
    %1106 = vdwg.mxu0
    %v1107 = vadd.f32 %v1032, %v1103
    %v1108 = vadd.f32 %v1033, %v1105
    %v1109 = vxor.u32 %v1107, 2147483648
    %v1110 = vmul.f32 %v1109, 1.442695
    %v1111 = vpow.pop %v1110
    %v1112 = vadd.f32 %v1111, 1.0
    %v1113 = vrcp.pop %v1112
    %v1114 = vmul.f32 1.0, %v1113
    %v1115 = vtanh.pop %v1108
    %v1116 = vxor.u32 %v1108, 2147483648
    %v1117 = vmul.f32 %v1116, 1.442695
    %v1118 = vpow.pop %v1117
    %v1119 = vadd.f32 %v1118, 1.0
    %v1120 = vrcp.pop %v1119
    %v1121 = vmul.f32 1.0, %v1120
    %v1122 = vmul.f32 %v1114, %v1023
    %v1123 = vmul.f32 %v1114, %v1115
    %1125 = vrot.lane.b32.xlu0 %v1123, 64
    %v1126 = vpop.permute.xlu0 %1125
    %v1128 = vadd.f32 %v1122, %v1126
    %v1129 = vtanh.pop %v1128
    %v1130 = vmul.f32 %v1121, %v1129
    %1132 = vrot.lane.b32.xlu0 %v1130, 64
    %v1133 = vpop.permute.xlu0 %1132
    %1135 = vst.msk [vmem:[#allocation3 + $0x38] sm:$0xff] %vm104, %v1133
    %1136 = vst.msk [vmem:[#allocation3] sm:$0xff] %vm400, %v1133
    %v1137 = vld [vmem:[#allocation3] sm:$0xff]
    %v1138 = vld [vmem:[#allocation3 + $0x8] sm:$0xff]
    %v1139 = vld [vmem:[#allocation3 + $0x10] sm:$0xff]
    %v1140 = vld [vmem:[#allocation3 + $0x18] sm:$0xff]
    %v1141 = vld [vmem:[#allocation3 + $0x20] sm:$0xff]
    %v1142 = vld [vmem:[#allocation3 + $0x28] sm:$0xff]
    %v1143 = vld [vmem:[#allocation3 + $0x30] sm:$0xff]
    %v1144 = vld [vmem:[#allocation3 + $0x38] sm:$0xff]
    %v1145 = vld [vmem:[%s4] sm:$0xff]
    %v1146 = vld [vmem:[%s4 + $0x8] sm:$0xff]
    %v1147 = vld [vmem:[%s4 + $0x10] sm:$0xff]
    %v1148 = vld [vmem:[%s4 + $0x18] sm:$0xff]
    %v1149 = vld [vmem:[%s4 + $0x20] sm:$0xff]
    %v1150 = vld [vmem:[%s4 + $0x28] sm:$0xff]
    %v1151 = vld [vmem:[%s4 + $0x30] sm:$0xff]
    %v1152 = vld [vmem:[%s4 + $0x38] sm:$0xff]
    %v1153 = vld [vmem:[%s4 + $0x40] sm:$0xff]
    %v1154 = vld [vmem:[%s4 + $0x48] sm:$0xff]
    %v1155 = vld [vmem:[%s4 + $0x50] sm:$0xff]
    %v1156 = vld [vmem:[%s4 + $0x58] sm:$0xff]
    %v1157 = vld [vmem:[%s4 + $0x60] sm:$0xff]
    %v1158 = vld [vmem:[%s4 + $0x68] sm:$0xff]
    %v1159 = vld [vmem:[%s4 + $0x70] sm:$0xff]
    %v1160 = vld [vmem:[%s4 + $0x78] sm:$0xff]
    %v1161 = vld [vmem:[%s6] sm:$0x3]
    %v1163 = vlaneseq
    %v1164 = vshrl.u32 %v1163, 7
    %v1165 = vsub.s32 0, %v1164
    %v1166 = vrot.slane %v1161, %v1165
    %v1167 = vlaneseq
    %v1168 = vshrl.u32 %v1167, 7
    %v1169 = vsub.s32 1, %v1168
    %v1170 = vrot.slane %v1161, %v1169
    %v1174 = vsel %vm296, %v1137, 0
    %v1177 = vsel %vm296, %v1138, 0
    %v1180 = vsel %vm296, %v1139, 0
    %v1183 = vsel %vm296, %v1140, 0
    %v1186 = vsel %vm296, %v1141, 0
    %v1189 = vsel %vm296, %v1142, 0
    %v1192 = vsel %vm296, %v1143, 0
    %v1195 = vsel %vm296, %v1144, 0
    %1197 = vmatprep.subr.mxu0 %v1146
    %1198 = vmatpush1.msra.mxu0 %v1145
    %1199 = vmatprep.subr.mxu0 %v1148
    %1200 = vmatpush1.msra.mxu0 %v1147
    %1201 = vmatprep.subr.mxu0 %v1150
    %1202 = vmatpush1.msra.mxu0 %v1149
    %1203 = vmatprep.subr.mxu0 %v1152
    %1204 = vmatpush1.msra.mxu0 %v1151
    %1205 = vmatprep.subr.mxu0 %v1154
    %1206 = vmatpush1.msra.mxu0 %v1153
    %1207 = vmatprep.subr.mxu0 %v1156
    %1208 = vmatpush1.msra.mxu0 %v1155
    %1209 = vmatprep.subr.mxu0 %v1158
    %1210 = vmatpush1.msra.mxu0 %v1157
    %1211 = vmatprep.subr.mxu0 %v1160
    %1212 = vmatpush1.msra.mxu0 %v1159
    %1213 = vmatprep.subr.mxu0 0.0
    %1214 = vmatpush1.msra.mxu0 0.0
    %1215 = vmatprep.subr.mxu0 0.0
    %1216 = vmatpush1.msra.mxu0 0.0
    %1217 = vmatprep.subr.mxu0 0.0
    %1218 = vmatpush1.msra.mxu0 0.0
    %1219 = vmatprep.subr.mxu0 0.0
    %1220 = vmatpush1.msra.mxu0 0.0
    %1221 = vmatprep.subr.mxu0 0.0
    %1222 = vmatpush1.msra.mxu0 0.0
    %1223 = vmatprep.subr.mxu0 0.0
    %1224 = vmatpush1.msra.mxu0 0.0
    %1225 = vmatprep.subr.mxu0 0.0
    %1226 = vmatpush1.msra.mxu0 0.0
    %1227 = vmatprep.subr.mxu0 0.0
    %1228 = vmatpush1.msra.mxu0 0.0
    %1229 = vmatprep.subr.mxu0 0.0
    %1230 = vmatpush1.msra.mxu0 0.0
    %1231 = vmatprep.subr.mxu0 0.0
    %1232 = vmatpush1.msra.mxu0 0.0
    %1233 = vmatprep.subr.mxu0 0.0
    %1234 = vmatpush1.msra.mxu0 0.0
    %1235 = vmatprep.subr.mxu0 0.0
    %1236 = vmatpush1.msra.mxu0 0.0
    %1237 = vmatprep.subr.mxu0 0.0
    %1238 = vmatpush1.msra.mxu0 0.0
    %1239 = vmatprep.subr.mxu0 0.0
    %1240 = vmatpush1.msra.mxu0 0.0
    %1241 = vmatprep.subr.mxu0 0.0
    %1242 = vmatpush1.msra.mxu0 0.0
    %1243 = vmatprep.subr.mxu0 0.0
    %1244 = vmatpush1.msra.mxu0 0.0
    %1245 = vmatprep.subr.mxu0 0.0
    %1246 = vmatpush1.msra.mxu0 0.0
    %1247 = vmatprep.subr.mxu0 0.0
    %1248 = vmatpush1.msra.mxu0 0.0
    %1249 = vmatprep.subr.mxu0 0.0
    %1250 = vmatpush1.msra.mxu0 0.0
    %1251 = vmatprep.subr.mxu0 0.0
    %1252 = vmatpush1.msra.mxu0 0.0
    %1253 = vmatprep.subr.mxu0 0.0
    %1254 = vmatpush1.msra.mxu0 0.0
    %1255 = vmatprep.subr.mxu0 0.0
    %1256 = vmatpush1.msra.mxu0 0.0
    %1257 = vmatprep.subr.mxu0 0.0
    %1258 = vmatpush1.msra.mxu0 0.0
    %1259 = vmatprep.subr.mxu0 0.0
    %1260 = vmatpush1.msra.mxu0 0.0
    %1261 = vmatprep.mubr.f32.mxu0 0.0
    %1262 = vmatmul.mubr.f32.gmra.mrb[0].mxu0 %v1174
    %v1263 = vpop.f32.mrb[0].mxu0
    %v1264 = vadd.f32 %v1166, %v1263
    %v1265 = vpop.f32.mrb[0].mxu0
    %v1266 = vadd.f32 %v1170, %v1265
    %1267 = vmatprep.mubr.f32.mxu0 0.0
    %1268 = vmatmul.mubr.f32.gmra.mrb[0].mxu0 %v1177
    %v1269 = vpop.f32.mrb[0].mxu0
    %v1270 = vadd.f32 %v1166, %v1269
    %v1271 = vpop.f32.mrb[0].mxu0
    %v1272 = vadd.f32 %v1170, %v1271
    %1273 = vmatprep.mubr.f32.mxu0 0.0
    %1274 = vmatmul.mubr.f32.gmra.mrb[0].mxu0 %v1180
    %v1275 = vpop.f32.mrb[0].mxu0
    %v1276 = vadd.f32 %v1166, %v1275
    %v1277 = vpop.f32.mrb[0].mxu0
    %v1278 = vadd.f32 %v1170, %v1277
    %1279 = vmatprep.mubr.f32.mxu0 0.0
    %1280 = vmatmul.mubr.f32.gmra.mrb[0].mxu0 %v1183
    %v1281 = vpop.f32.mrb[0].mxu0
    %v1282 = vadd.f32 %v1166, %v1281
    %v1283 = vpop.f32.mrb[0].mxu0
    %v1284 = vadd.f32 %v1170, %v1283
    %1285 = vmatprep.mubr.f32.mxu0 0.0
    %1286 = vmatmul.mubr.f32.gmra.mrb[0].mxu0 %v1186
    %v1287 = vpop.f32.mrb[0].mxu0
    %v1288 = vadd.f32 %v1166, %v1287
    %v1289 = vpop.f32.mrb[0].mxu0
    %v1290 = vadd.f32 %v1170, %v1289
    %1291 = vmatprep.mubr.f32.mxu0 0.0
    %1292 = vmatmul.mubr.f32.gmra.mrb[0].mxu0 %v1189
    %v1293 = vpop.f32.mrb[0].mxu0
    %v1294 = vadd.f32 %v1166, %v1293
    %v1295 = vpop.f32.mrb[0].mxu0
    %v1296 = vadd.f32 %v1170, %v1295
    %1297 = vmatprep.mubr.f32.mxu0 0.0
    %1298 = vmatmul.mubr.f32.gmra.mrb[0].mxu0 %v1192
    %v1299 = vpop.f32.mrb[0].mxu0
    %v1300 = vadd.f32 %v1166, %v1299
    %v1301 = vpop.f32.mrb[0].mxu0
    %v1302 = vadd.f32 %v1170, %v1301
    %1303 = vmatprep.mubr.f32.mxu0 0.0
    %1304 = vmatmul.mubr.f32.gmra.mrb[0].mxu0 %v1195
    %v1305 = vpop.f32.mrb[0].mxu0
    %v1306 = vadd.f32 %v1166, %v1305
    %v1307 = vpop.f32.mrb[0].mxu0
    %v1308 = vadd.f32 %v1170, %v1307
    %1309 = vdwg.mxu0
    %v1310 = vsel %vm244, %v1264, %v1306
    %v1311 = vsel %vm245, %v1266, %v1308
    %1312 = vst [vmem:[#allocation2] sm:$0xff] %v1310
    %1313 = vst [vmem:[#allocation2 + $0x8] sm:$0xff] %v1311
    %v1314 = vsel %vm244, %v1270, %v1300
    %v1315 = vsel %vm245, %v1272, %v1302
    %1316 = vst [vmem:[#allocation2 + $0x10] sm:$0xff] %v1314
    %1317 = vst [vmem:[#allocation2 + $0x18] sm:$0xff] %v1315
    %v1318 = vsel %vm244, %v1276, %v1294
    %v1319 = vsel %vm245, %v1278, %v1296
    %1320 = vst [vmem:[#allocation2 + $0x20] sm:$0xff] %v1318
    %1321 = vst [vmem:[#allocation2 + $0x28] sm:$0xff] %v1319
    %v1322 = vsel %vm244, %v1282, %v1288
    %v1323 = vsel %vm245, %v1284, %v1290
    %1324 = vst [vmem:[#allocation2 + $0x30] sm:$0xff] %v1322
    %1325 = vst [vmem:[#allocation2 + $0x38] sm:$0xff] %v1323
    %v1326 = vsel %vm244, %v1288, %v1282
    %v1327 = vsel %vm245, %v1290, %v1284
    %1328 = vst [vmem:[#allocation2 + $0x40] sm:$0xff] %v1326
    %1329 = vst [vmem:[#allocation2 + $0x48] sm:$0xff] %v1327
    %v1330 = vsel %vm244, %v1294, %v1276
    %v1331 = vsel %vm245, %v1296, %v1278
    %1332 = vst [vmem:[#allocation2 + $0x50] sm:$0xff] %v1330
    %1333 = vst [vmem:[#allocation2 + $0x58] sm:$0xff] %v1331
    %v1334 = vsel %vm244, %v1300, %v1270
    %v1335 = vsel %vm245, %v1302, %v1272
    %1336 = vst [vmem:[#allocation2 + $0x60] sm:$0xff] %v1334
    %1337 = vst [vmem:[#allocation2 + $0x68] sm:$0xff] %v1335
    %v1338 = vsel %vm244, %v1306, %v1264
    %v1339 = vsel %vm245, %v1308, %v1266
    %1340 = vst [vmem:[#allocation2 + $0x70] sm:$0xff] %v1338
    %1341 = vst [vmem:[#allocation2 + $0x78] sm:$0xff] %v1339
    %v1342 = vld [vmem:[%s5] sm:$0xff]
    %v1343 = vld [vmem:[%s5 + $0x8] sm:$0xff]
    %v1344 = vld [vmem:[%s5 + $0x10] sm:$0xff]
    %v1345 = vld [vmem:[%s5 + $0x18] sm:$0xff]
    %v1346 = vld [vmem:[%s5 + $0x20] sm:$0xff]
    %v1347 = vld [vmem:[%s5 + $0x28] sm:$0xff]
    %v1348 = vld [vmem:[%s5 + $0x30] sm:$0xff]
    %v1349 = vld [vmem:[%s5 + $0x38] sm:$0xff]
    %v1350 = vld [vmem:[%s5 + $0x40] sm:$0xff]
    %v1351 = vld [vmem:[%s5 + $0x48] sm:$0xff]
    %v1352 = vld [vmem:[%s5 + $0x50] sm:$0xff]
    %v1353 = vld [vmem:[%s5 + $0x58] sm:$0xff]
    %v1354 = vld [vmem:[%s5 + $0x60] sm:$0xff]
    %v1355 = vld [vmem:[%s5 + $0x68] sm:$0xff]
    %v1356 = vld [vmem:[%s5 + $0x70] sm:$0xff]
    %v1357 = vld [vmem:[%s5 + $0x78] sm:$0xff]
    %v1358 = vld [vmem:[#allocation2] sm:$0xff]
    %v1359 = vld [vmem:[#allocation2 + $0x8] sm:$0xff]
    %1360 = vmatprep.subr.mxu0 %v1343
    %1361 = vmatpush1.msra.mxu0 %v1342
    %1362 = vmatprep.subr.mxu0 %v1345
    %1363 = vmatpush1.msra.mxu0 %v1344
    %1364 = vmatprep.subr.mxu0 %v1347
    %1365 = vmatpush1.msra.mxu0 %v1346
    %1366 = vmatprep.subr.mxu0 %v1349
    %1367 = vmatpush1.msra.mxu0 %v1348
    %1368 = vmatprep.subr.mxu0 %v1351
    %1369 = vmatpush1.msra.mxu0 %v1350
    %1370 = vmatprep.subr.mxu0 %v1353
    %1371 = vmatpush1.msra.mxu0 %v1352
    %1372 = vmatprep.subr.mxu0 %v1355
    %1373 = vmatpush1.msra.mxu0 %v1354
    %1374 = vmatprep.subr.mxu0 %v1357
    %1375 = vmatpush1.msra.mxu0 %v1356
    %1376 = vmatprep.subr.mxu0 0.0
    %1377 = vmatpush1.msra.mxu0 0.0
    %1378 = vmatprep.subr.mxu0 0.0
    %1379 = vmatpush1.msra.mxu0 0.0
    %1380 = vmatprep.subr.mxu0 0.0
    %1381 = vmatpush1.msra.mxu0 0.0
    %1382 = vmatprep.subr.mxu0 0.0
    %1383 = vmatpush1.msra.mxu0 0.0
    %1384 = vmatprep.subr.mxu0 0.0
    %1385 = vmatpush1.msra.mxu0 0.0
    %1386 = vmatprep.subr.mxu0 0.0
    %1387 = vmatpush1.msra.mxu0 0.0
    %1388 = vmatprep.subr.mxu0 0.0
    %1389 = vmatpush1.msra.mxu0 0.0
    %1390 = vmatprep.subr.mxu0 0.0
    %1391 = vmatpush1.msra.mxu0 0.0
    %1392 = vmatprep.subr.mxu0 0.0
    %1393 = vmatpush1.msra.mxu0 0.0
    %1394 = vmatprep.subr.mxu0 0.0
    %1395 = vmatpush1.msra.mxu0 0.0
    %1396 = vmatprep.subr.mxu0 0.0
    %1397 = vmatpush1.msra.mxu0 0.0
    %1398 = vmatprep.subr.mxu0 0.0
    %1399 = vmatpush1.msra.mxu0 0.0
    %1400 = vmatprep.subr.mxu0 0.0
    %1401 = vmatpush1.msra.mxu0 0.0
    %1402 = vmatprep.subr.mxu0 0.0
    %1403 = vmatpush1.msra.mxu0 0.0
    %1404 = vmatprep.subr.mxu0 0.0
    %1405 = vmatpush1.msra.mxu0 0.0
    %1406 = vmatprep.subr.mxu0 0.0
    %1407 = vmatpush1.msra.mxu0 0.0
    %1408 = vmatprep.subr.mxu0 0.0
    %1409 = vmatpush1.msra.mxu0 0.0
    %1410 = vmatprep.subr.mxu0 0.0
    %1411 = vmatpush1.msra.mxu0 0.0
    %1412 = vmatprep.subr.mxu0 0.0
    %1413 = vmatpush1.msra.mxu0 0.0
    %1414 = vmatprep.subr.mxu0 0.0
    %1415 = vmatpush1.msra.mxu0 0.0
    %1416 = vmatprep.subr.mxu0 0.0
    %1417 = vmatpush1.msra.mxu0 0.0
    %1418 = vmatprep.subr.mxu0 0.0
    %1419 = vmatpush1.msra.mxu0 0.0
    %1420 = vmatprep.subr.mxu0 0.0
    %1421 = vmatpush1.msra.mxu0 0.0
    %1422 = vmatprep.subr.mxu0 0.0
    %1423 = vmatpush1.msra.mxu0 0.0
    %1424 = vmatprep.mubr.f32.mxu0 0.0
    %1425 = vmatmul.mubr.f32.gmra.mrb[0].mxu0 %v298
    %v1426 = vpop.f32.mrb[0].mxu0
    %v1427 = vadd.f32 0.0, %v1426
    %v1428 = vpop.f32.mrb[0].mxu0
    %v1429 = vadd.f32 0.0, %v1428
    %1430 = vdwg.mxu0
    %v1431 = vadd.f32 %v1358, %v1427
    %v1432 = vadd.f32 %v1359, %v1429
    %v1433 = vxor.u32 %v1431, 2147483648
    %v1434 = vmul.f32 %v1433, 1.442695
    %v1435 = vpow.pop %v1434
    %v1436 = vadd.f32 %v1435, 1.0
    %v1437 = vrcp.pop %v1436
    %v1438 = vmul.f32 1.0, %v1437
    %v1439 = vtanh.pop %v1432
    %v1440 = vxor.u32 %v1432, 2147483648
    %v1441 = vmul.f32 %v1440, 1.442695
    %v1442 = vpow.pop %v1441
    %v1443 = vadd.f32 %v1442, 1.0
    %v1444 = vrcp.pop %v1443
    %v1445 = vmul.f32 1.0, %v1444
    %v1446 = vmul.f32 %v1438, 0.0
    %v1447 = vmul.f32 %v1438, %v1439
    %1449 = vrot.lane.b32.xlu0 %v1447, 64
    %v1450 = vpop.permute.xlu0 %1449
    %v1452 = vadd.f32 %v1446, %v1450
    %v1453 = vtanh.pop %v1452
    %v1454 = vmul.f32 %v1445, %v1453
    %v1455 = vld [vmem:[#allocation2 + $0x10] sm:$0xff]
    %v1456 = vld [vmem:[#allocation2 + $0x18] sm:$0xff]
    %1458 = vrot.lane.b32.xlu0 %v1454, 64
    %v1459 = vpop.permute.xlu0 %1458
    %v1460 = vsel %vm296, %v1459, 0
    %1462 = vmatprep.subr.mxu0 %v1343
    %1463 = vmatpush1.msra.mxu0 %v1342
    %1464 = vmatprep.subr.mxu0 %v1345
    %1465 = vmatpush1.msra.mxu0 %v1344
    %1466 = vmatprep.subr.mxu0 %v1347
    %1467 = vmatpush1.msra.mxu0 %v1346
    %1468 = vmatprep.subr.mxu0 %v1349
    %1469 = vmatpush1.msra.mxu0 %v1348
    %1470 = vmatprep.subr.mxu0 %v1351
    %1471 = vmatpush1.msra.mxu0 %v1350
    %1472 = vmatprep.subr.mxu0 %v1353
    %1473 = vmatpush1.msra.mxu0 %v1352
    %1474 = vmatprep.subr.mxu0 %v1355
    %1475 = vmatpush1.msra.mxu0 %v1354
    %1476 = vmatprep.subr.mxu0 %v1357
    %1477 = vmatpush1.msra.mxu0 %v1356
    %1478 = vmatprep.subr.mxu0 0.0
    %1479 = vmatpush1.msra.mxu0 0.0
    %1480 = vmatprep.subr.mxu0 0.0
    %1481 = vmatpush1.msra.mxu0 0.0
    %1482 = vmatprep.subr.mxu0 0.0
    %1483 = vmatpush1.msra.mxu0 0.0
    %1484 = vmatprep.subr.mxu0 0.0
    %1485 = vmatpush1.msra.mxu0 0.0
    %1486 = vmatprep.subr.mxu0 0.0
    %1487 = vmatpush1.msra.mxu0 0.0
    %1488 = vmatprep.subr.mxu0 0.0
    %1489 = vmatpush1.msra.mxu0 0.0
    %1490 = vmatprep.subr.mxu0 0.0
    %1491 = vmatpush1.msra.mxu0 0.0
    %1492 = vmatprep.subr.mxu0 0.0
    %1493 = vmatpush1.msra.mxu0 0.0
    %1494 = vmatprep.subr.mxu0 0.0
    %1495 = vmatpush1.msra.mxu0 0.0
    %1496 = vmatprep.subr.mxu0 0.0
    %1497 = vmatpush1.msra.mxu0 0.0
    %1498 = vmatprep.subr.mxu0 0.0
    %1499 = vmatpush1.msra.mxu0 0.0
    %1500 = vmatprep.subr.mxu0 0.0
    %1501 = vmatpush1.msra.mxu0 0.0
    %1502 = vmatprep.subr.mxu0 0.0
    %1503 = vmatpush1.msra.mxu0 0.0
    %1504 = vmatprep.subr.mxu0 0.0
    %1505 = vmatpush1.msra.mxu0 0.0
    %1506 = vmatprep.subr.mxu0 0.0
    %1507 = vmatpush1.msra.mxu0 0.0
    %1508 = vmatprep.subr.mxu0 0.0
    %1509 = vmatpush1.msra.mxu0 0.0
    %1510 = vmatprep.subr.mxu0 0.0
    %1511 = vmatpush1.msra.mxu0 0.0
    %1512 = vmatprep.subr.mxu0 0.0
    %1513 = vmatpush1.msra.mxu0 0.0
    %1514 = vmatprep.subr.mxu0 0.0
    %1515 = vmatpush1.msra.mxu0 0.0
    %1516 = vmatprep.subr.mxu0 0.0
    %1517 = vmatpush1.msra.mxu0 0.0
    %1518 = vmatprep.subr.mxu0 0.0
    %1519 = vmatpush1.msra.mxu0 0.0
    %1520 = vmatprep.subr.mxu0 0.0
    %1521 = vmatpush1.msra.mxu0 0.0
    %1522 = vmatprep.subr.mxu0 0.0
    %1523 = vmatpush1.msra.mxu0 0.0
    %1524 = vmatprep.subr.mxu0 0.0
    %1525 = vmatpush1.msra.mxu0 0.0
    %1526 = vmatprep.mubr.f32.mxu0 0.0
    %1527 = vmatmul.mubr.f32.gmra.mrb[0].mxu0 %v1460
    %v1528 = vpop.f32.mrb[0].mxu0
    %v1529 = vadd.f32 0.0, %v1528
    %v1530 = vpop.f32.mrb[0].mxu0
    %v1531 = vadd.f32 0.0, %v1530
    %1532 = vdwg.mxu0
    %v1533 = vadd.f32 %v1455, %v1529
    %v1534 = vadd.f32 %v1456, %v1531
    %v1535 = vxor.u32 %v1533, 2147483648
    %v1536 = vmul.f32 %v1535, 1.442695
    %v1537 = vpow.pop %v1536
    %v1538 = vadd.f32 %v1537, 1.0
    %v1539 = vrcp.pop %v1538
    %v1540 = vmul.f32 1.0, %v1539
    %v1541 = vtanh.pop %v1534
    %v1542 = vxor.u32 %v1534, 2147483648
    %v1543 = vmul.f32 %v1542, 1.442695
    %v1544 = vpow.pop %v1543
    %v1545 = vadd.f32 %v1544, 1.0
    %v1546 = vrcp.pop %v1545
    %v1547 = vmul.f32 1.0, %v1546
    %v1548 = vmul.f32 %v1540, %v1452
    %v1549 = vmul.f32 %v1540, %v1541
    %1551 = vrot.lane.b32.xlu0 %v1549, 64
    %v1552 = vpop.permute.xlu0 %1551
    %v1554 = vadd.f32 %v1548, %v1552
    %v1555 = vtanh.pop %v1554
    %v1556 = vmul.f32 %v1547, %v1555
    %v1557 = vld [vmem:[#allocation2 + $0x20] sm:$0xff]
    %v1558 = vld [vmem:[#allocation2 + $0x28] sm:$0xff]
    %1560 = vrot.lane.b32.xlu0 %v1556, 64
    %v1561 = vpop.permute.xlu0 %1560
    %v1562 = vsel %vm296, %v1561, 0
    %1564 = vmatprep.subr.mxu0 %v1343
    %1565 = vmatpush1.msra.mxu0 %v1342
    %1566 = vmatprep.subr.mxu0 %v1345
    %1567 = vmatpush1.msra.mxu0 %v1344
    %1568 = vmatprep.subr.mxu0 %v1347
    %1569 = vmatpush1.msra.mxu0 %v1346
    %1570 = vmatprep.subr.mxu0 %v1349
    %1571 = vmatpush1.msra.mxu0 %v1348
    %1572 = vmatprep.subr.mxu0 %v1351
    %1573 = vmatpush1.msra.mxu0 %v1350
    %1574 = vmatprep.subr.mxu0 %v1353
    %1575 = vmatpush1.msra.mxu0 %v1352
    %1576 = vmatprep.subr.mxu0 %v1355
    %1577 = vmatpush1.msra.mxu0 %v1354
    %1578 = vmatprep.subr.mxu0 %v1357
    %1579 = vmatpush1.msra.mxu0 %v1356
    %1580 = vmatprep.subr.mxu0 0.0
    %1581 = vmatpush1.msra.mxu0 0.0
    %1582 = vmatprep.subr.mxu0 0.0
    %1583 = vmatpush1.msra.mxu0 0.0
    %1584 = vmatprep.subr.mxu0 0.0
    %1585 = vmatpush1.msra.mxu0 0.0
    %1586 = vmatprep.subr.mxu0 0.0
    %1587 = vmatpush1.msra.mxu0 0.0
    %1588 = vmatprep.subr.mxu0 0.0
    %1589 = vmatpush1.msra.mxu0 0.0
    %1590 = vmatprep.subr.mxu0 0.0
    %1591 = vmatpush1.msra.mxu0 0.0
    %1592 = vmatprep.subr.mxu0 0.0
    %1593 = vmatpush1.msra.mxu0 0.0
    %1594 = vmatprep.subr.mxu0 0.0
    %1595 = vmatpush1.msra.mxu0 0.0
    %1596 = vmatprep.subr.mxu0 0.0
    %1597 = vmatpush1.msra.mxu0 0.0
    %1598 = vmatprep.subr.mxu0 0.0
    %1599 = vmatpush1.msra.mxu0 0.0
    %1600 = vmatprep.subr.mxu0 0.0
    %1601 = vmatpush1.msra.mxu0 0.0
    %1602 = vmatprep.subr.mxu0 0.0
    %1603 = vmatpush1.msra.mxu0 0.0
    %1604 = vmatprep.subr.mxu0 0.0
    %1605 = vmatpush1.msra.mxu0 0.0
    %1606 = vmatprep.subr.mxu0 0.0
    %1607 = vmatpush1.msra.mxu0 0.0
    %1608 = vmatprep.subr.mxu0 0.0
    %1609 = vmatpush1.msra.mxu0 0.0
    %1610 = vmatprep.subr.mxu0 0.0
    %1611 = vmatpush1.msra.mxu0 0.0
    %1612 = vmatprep.subr.mxu0 0.0
    %1613 = vmatpush1.msra.mxu0 0.0
    %1614 = vmatprep.subr.mxu0 0.0
    %1615 = vmatpush1.msra.mxu0 0.0
    %1616 = vmatprep.subr.mxu0 0.0
    %1617 = vmatpush1.msra.mxu0 0.0
    %1618 = vmatprep.subr.mxu0 0.0
    %1619 = vmatpush1.msra.mxu0 0.0
    %1620 = vmatprep.subr.mxu0 0.0
    %1621 = vmatpush1.msra.mxu0 0.0
    %1622 = vmatprep.subr.mxu0 0.0
    %1623 = vmatpush1.msra.mxu0 0.0
    %1624 = vmatprep.subr.mxu0 0.0
    %1625 = vmatpush1.msra.mxu0 0.0
    %1626 = vmatprep.subr.mxu0 0.0
    %1627 = vmatpush1.msra.mxu0 0.0
    %1628 = vmatprep.mubr.f32.mxu0 0.0
    %1629 = vmatmul.mubr.f32.gmra.mrb[0].mxu0 %v1562
    %v1630 = vpop.f32.mrb[0].mxu0
    %v1631 = vadd.f32 0.0, %v1630
    %v1632 = vpop.f32.mrb[0].mxu0
    %v1633 = vadd.f32 0.0, %v1632
    %1634 = vdwg.mxu0
    %v1635 = vadd.f32 %v1557, %v1631
    %v1636 = vadd.f32 %v1558, %v1633
    %v1637 = vxor.u32 %v1635, 2147483648
    %v1638 = vmul.f32 %v1637, 1.442695
    %v1639 = vpow.pop %v1638
    %v1640 = vadd.f32 %v1639, 1.0
    %v1641 = vrcp.pop %v1640
    %v1642 = vmul.f32 1.0, %v1641
    %v1643 = vtanh.pop %v1636
    %v1644 = vxor.u32 %v1636, 2147483648
    %v1645 = vmul.f32 %v1644, 1.442695
    %v1646 = vpow.pop %v1645
    %v1647 = vadd.f32 %v1646, 1.0
    %v1648 = vrcp.pop %v1647
    %v1649 = vmul.f32 1.0, %v1648
    %v1650 = vmul.f32 %v1642, %v1554
    %v1651 = vmul.f32 %v1642, %v1643
    %1653 = vrot.lane.b32.xlu0 %v1651, 64
    %v1654 = vpop.permute.xlu0 %1653
    %v1656 = vadd.f32 %v1650, %v1654
    %v1657 = vtanh.pop %v1656
    %v1658 = vmul.f32 %v1649, %v1657
    %v1659 = vld [vmem:[#allocation2 + $0x30] sm:$0xff]
    %v1660 = vld [vmem:[#allocation2 + $0x38] sm:$0xff]
    %1662 = vrot.lane.b32.xlu0 %v1658, 64
    %v1663 = vpop.permute.xlu0 %1662
    %v1664 = vsel %vm296, %v1663, 0
    %1666 = vmatprep.subr.mxu0 %v1343
    %1667 = vmatpush1.msra.mxu0 %v1342
    %1668 = vmatprep.subr.mxu0 %v1345
    %1669 = vmatpush1.msra.mxu0 %v1344
    %1670 = vmatprep.subr.mxu0 %v1347
    %1671 = vmatpush1.msra.mxu0 %v1346
    %1672 = vmatprep.subr.mxu0 %v1349
    %1673 = vmatpush1.msra.mxu0 %v1348
    %1674 = vmatprep.subr.mxu0 %v1351
    %1675 = vmatpush1.msra.mxu0 %v1350
    %1676 = vmatprep.subr.mxu0 %v1353
    %1677 = vmatpush1.msra.mxu0 %v1352
    %1678 = vmatprep.subr.mxu0 %v1355
    %1679 = vmatpush1.msra.mxu0 %v1354
    %1680 = vmatprep.subr.mxu0 %v1357
    %1681 = vmatpush1.msra.mxu0 %v1356
    %1682 = vmatprep.subr.mxu0 0.0
    %1683 = vmatpush1.msra.mxu0 0.0
    %1684 = vmatprep.subr.mxu0 0.0
    %1685 = vmatpush1.msra.mxu0 0.0
    %1686 = vmatprep.subr.mxu0 0.0
    %1687 = vmatpush1.msra.mxu0 0.0
    %1688 = vmatprep.subr.mxu0 0.0
    %1689 = vmatpush1.msra.mxu0 0.0
    %1690 = vmatprep.subr.mxu0 0.0
    %1691 = vmatpush1.msra.mxu0 0.0
    %1692 = vmatprep.subr.mxu0 0.0
    %1693 = vmatpush1.msra.mxu0 0.0
    %1694 = vmatprep.subr.mxu0 0.0
    %1695 = vmatpush1.msra.mxu0 0.0
    %1696 = vmatprep.subr.mxu0 0.0
    %1697 = vmatpush1.msra.mxu0 0.0
    %1698 = vmatprep.subr.mxu0 0.0
    %1699 = vmatpush1.msra.mxu0 0.0
    %1700 = vmatprep.subr.mxu0 0.0
    %1701 = vmatpush1.msra.mxu0 0.0
    %1702 = vmatprep.subr.mxu0 0.0
    %1703 = vmatpush1.msra.mxu0 0.0
    %1704 = vmatprep.subr.mxu0 0.0
    %1705 = vmatpush1.msra.mxu0 0.0
    %1706 = vmatprep.subr.mxu0 0.0
    %1707 = vmatpush1.msra.mxu0 0.0
    %1708 = vmatprep.subr.mxu0 0.0
    %1709 = vmatpush1.msra.mxu0 0.0
    %1710 = vmatprep.subr.mxu0 0.0
    %1711 = vmatpush1.msra.mxu0 0.0
    %1712 = vmatprep.subr.mxu0 0.0
    %1713 = vmatpush1.msra.mxu0 0.0
    %1714 = vmatprep.subr.mxu0 0.0
    %1715 = vmatpush1.msra.mxu0 0.0
    %1716 = vmatprep.subr.mxu0 0.0
    %1717 = vmatpush1.msra.mxu0 0.0
    %1718 = vmatprep.subr.mxu0 0.0
    %1719 = vmatpush1.msra.mxu0 0.0
    %1720 = vmatprep.subr.mxu0 0.0
    %1721 = vmatpush1.msra.mxu0 0.0
    %1722 = vmatprep.subr.mxu0 0.0
    %1723 = vmatpush1.msra.mxu0 0.0
    %1724 = vmatprep.subr.mxu0 0.0
    %1725 = vmatpush1.msra.mxu0 0.0
    %1726 = vmatprep.subr.mxu0 0.0
    %1727 = vmatpush1.msra.mxu0 0.0
    %1728 = vmatprep.subr.mxu0 0.0
    %1729 = vmatpush1.msra.mxu0 0.0
    %1730 = vmatprep.mubr.f32.mxu0 0.0
    %1731 = vmatmul.mubr.f32.gmra.mrb[0].mxu0 %v1664
    %v1732 = vpop.f32.mrb[0].mxu0
    %v1733 = vadd.f32 0.0, %v1732
    %v1734 = vpop.f32.mrb[0].mxu0
    %v1735 = vadd.f32 0.0, %v1734
    %1736 = vdwg.mxu0
    %v1737 = vadd.f32 %v1659, %v1733
    %v1738 = vadd.f32 %v1660, %v1735
    %v1739 = vxor.u32 %v1737, 2147483648
    %v1740 = vmul.f32 %v1739, 1.442695
    %v1741 = vpow.pop %v1740
    %v1742 = vadd.f32 %v1741, 1.0
    %v1743 = vrcp.pop %v1742
    %v1744 = vmul.f32 1.0, %v1743
    %v1745 = vtanh.pop %v1738
    %v1746 = vxor.u32 %v1738, 2147483648
    %v1747 = vmul.f32 %v1746, 1.442695
    %v1748 = vpow.pop %v1747
    %v1749 = vadd.f32 %v1748, 1.0
    %v1750 = vrcp.pop %v1749
    %v1751 = vmul.f32 1.0, %v1750
    %v1752 = vmul.f32 %v1744, %v1656
    %v1753 = vmul.f32 %v1744, %v1745
    %1755 = vrot.lane.b32.xlu0 %v1753, 64
    %v1756 = vpop.permute.xlu0 %1755
    %v1758 = vadd.f32 %v1752, %v1756
    %v1759 = vtanh.pop %v1758
    %v1760 = vmul.f32 %v1751, %v1759
    %v1761 = vld [vmem:[#allocation2 + $0x40] sm:$0xff]
    %v1762 = vld [vmem:[#allocation2 + $0x48] sm:$0xff]
    %1764 = vrot.lane.b32.xlu0 %v1760, 64
    %v1765 = vpop.permute.xlu0 %1764
    %v1766 = vsel %vm296, %v1765, 0
    %1768 = vmatprep.subr.mxu0 %v1343
    %1769 = vmatpush1.msra.mxu0 %v1342
    %1770 = vmatprep.subr.mxu0 %v1345
    %1771 = vmatpush1.msra.mxu0 %v1344
    %1772 = vmatprep.subr.mxu0 %v1347
    %1773 = vmatpush1.msra.mxu0 %v1346
    %1774 = vmatprep.subr.mxu0 %v1349
    %1775 = vmatpush1.msra.mxu0 %v1348
    %1776 = vmatprep.subr.mxu0 %v1351
    %1777 = vmatpush1.msra.mxu0 %v1350
    %1778 = vmatprep.subr.mxu0 %v1353
    %1779 = vmatpush1.msra.mxu0 %v1352
    %1780 = vmatprep.subr.mxu0 %v1355
    %1781 = vmatpush1.msra.mxu0 %v1354
    %1782 = vmatprep.subr.mxu0 %v1357
    %1783 = vmatpush1.msra.mxu0 %v1356
    %1784 = vmatprep.subr.mxu0 0.0
    %1785 = vmatpush1.msra.mxu0 0.0
    %1786 = vmatprep.subr.mxu0 0.0
    %1787 = vmatpush1.msra.mxu0 0.0
    %1788 = vmatprep.subr.mxu0 0.0
    %1789 = vmatpush1.msra.mxu0 0.0
    %1790 = vmatprep.subr.mxu0 0.0
    %1791 = vmatpush1.msra.mxu0 0.0
    %1792 = vmatprep.subr.mxu0 0.0
    %1793 = vmatpush1.msra.mxu0 0.0
    %1794 = vmatprep.subr.mxu0 0.0
    %1795 = vmatpush1.msra.mxu0 0.0
    %1796 = vmatprep.subr.mxu0 0.0
    %1797 = vmatpush1.msra.mxu0 0.0
    %1798 = vmatprep.subr.mxu0 0.0
    %1799 = vmatpush1.msra.mxu0 0.0
    %1800 = vmatprep.subr.mxu0 0.0
    %1801 = vmatpush1.msra.mxu0 0.0
    %1802 = vmatprep.subr.mxu0 0.0
    %1803 = vmatpush1.msra.mxu0 0.0
    %1804 = vmatprep.subr.mxu0 0.0
    %1805 = vmatpush1.msra.mxu0 0.0
    %1806 = vmatprep.subr.mxu0 0.0
    %1807 = vmatpush1.msra.mxu0 0.0
    %1808 = vmatprep.subr.mxu0 0.0
    %1809 = vmatpush1.msra.mxu0 0.0
    %1810 = vmatprep.subr.mxu0 0.0
    %1811 = vmatpush1.msra.mxu0 0.0
    %1812 = vmatprep.subr.mxu0 0.0
    %1813 = vmatpush1.msra.mxu0 0.0
    %1814 = vmatprep.subr.mxu0 0.0
    %1815 = vmatpush1.msra.mxu0 0.0
    %1816 = vmatprep.subr.mxu0 0.0
    %1817 = vmatpush1.msra.mxu0 0.0
    %1818 = vmatprep.subr.mxu0 0.0
    %1819 = vmatpush1.msra.mxu0 0.0
    %1820 = vmatprep.subr.mxu0 0.0
    %1821 = vmatpush1.msra.mxu0 0.0
    %1822 = vmatprep.subr.mxu0 0.0
    %1823 = vmatpush1.msra.mxu0 0.0
    %1824 = vmatprep.subr.mxu0 0.0
    %1825 = vmatpush1.msra.mxu0 0.0
    %1826 = vmatprep.subr.mxu0 0.0
    %1827 = vmatpush1.msra.mxu0 0.0
    %1828 = vmatprep.subr.mxu0 0.0
    %1829 = vmatpush1.msra.mxu0 0.0
    %1830 = vmatprep.subr.mxu0 0.0
    %1831 = vmatpush1.msra.mxu0 0.0
    %1832 = vmatprep.mubr.f32.mxu0 0.0
    %1833 = vmatmul.mubr.f32.gmra.mrb[0].mxu0 %v1766
    %v1834 = vpop.f32.mrb[0].mxu0
    %v1835 = vadd.f32 0.0, %v1834
    %v1836 = vpop.f32.mrb[0].mxu0
    %v1837 = vadd.f32 0.0, %v1836
    %1838 = vdwg.mxu0
    %v1839 = vadd.f32 %v1761, %v1835
    %v1840 = vadd.f32 %v1762, %v1837
    %v1841 = vxor.u32 %v1839, 2147483648
    %v1842 = vmul.f32 %v1841, 1.442695
    %v1843 = vpow.pop %v1842
    %v1844 = vadd.f32 %v1843, 1.0
    %v1845 = vrcp.pop %v1844
    %v1846 = vmul.f32 1.0, %v1845
    %v1847 = vtanh.pop %v1840
    %v1848 = vxor.u32 %v1840, 2147483648
    %v1849 = vmul.f32 %v1848, 1.442695
    %v1850 = vpow.pop %v1849
    %v1851 = vadd.f32 %v1850, 1.0
    %v1852 = vrcp.pop %v1851
    %v1853 = vmul.f32 1.0, %v1852
    %v1854 = vmul.f32 %v1846, %v1758
    %v1855 = vmul.f32 %v1846, %v1847
    %1857 = vrot.lane.b32.xlu0 %v1855, 64
    %v1858 = vpop.permute.xlu0 %1857
    %v1860 = vadd.f32 %v1854, %v1858
    %v1861 = vtanh.pop %v1860
    %v1862 = vmul.f32 %v1853, %v1861
    %v1863 = vld [vmem:[#allocation2 + $0x50] sm:$0xff]
    %v1864 = vld [vmem:[#allocation2 + $0x58] sm:$0xff]
    %1866 = vrot.lane.b32.xlu0 %v1862, 64
    %v1867 = vpop.permute.xlu0 %1866
    %v1868 = vsel %vm296, %v1867, 0
    %1870 = vmatprep.subr.mxu0 %v1343
    %1871 = vmatpush1.msra.mxu0 %v1342
    %1872 = vmatprep.subr.mxu0 %v1345
    %1873 = vmatpush1.msra.mxu0 %v1344
    %1874 = vmatprep.subr.mxu0 %v1347
    %1875 = vmatpush1.msra.mxu0 %v1346
    %1876 = vmatprep.subr.mxu0 %v1349
    %1877 = vmatpush1.msra.mxu0 %v1348
    %1878 = vmatprep.subr.mxu0 %v1351
    %1879 = vmatpush1.msra.mxu0 %v1350
    %1880 = vmatprep.subr.mxu0 %v1353
    %1881 = vmatpush1.msra.mxu0 %v1352
    %1882 = vmatprep.subr.mxu0 %v1355
    %1883 = vmatpush1.msra.mxu0 %v1354
    %1884 = vmatprep.subr.mxu0 %v1357
    %1885 = vmatpush1.msra.mxu0 %v1356
    %1886 = vmatprep.subr.mxu0 0.0
    %1887 = vmatpush1.msra.mxu0 0.0
    %1888 = vmatprep.subr.mxu0 0.0
    %1889 = vmatpush1.msra.mxu0 0.0
    %1890 = vmatprep.subr.mxu0 0.0
    %1891 = vmatpush1.msra.mxu0 0.0
    %1892 = vmatprep.subr.mxu0 0.0
    %1893 = vmatpush1.msra.mxu0 0.0
    %1894 = vmatprep.subr.mxu0 0.0
    %1895 = vmatpush1.msra.mxu0 0.0
    %1896 = vmatprep.subr.mxu0 0.0
    %1897 = vmatpush1.msra.mxu0 0.0
    %1898 = vmatprep.subr.mxu0 0.0
    %1899 = vmatpush1.msra.mxu0 0.0
    %1900 = vmatprep.subr.mxu0 0.0
    %1901 = vmatpush1.msra.mxu0 0.0
    %1902 = vmatprep.subr.mxu0 0.0
    %1903 = vmatpush1.msra.mxu0 0.0
    %1904 = vmatprep.subr.mxu0 0.0
    %1905 = vmatpush1.msra.mxu0 0.0
    %1906 = vmatprep.subr.mxu0 0.0
    %1907 = vmatpush1.msra.mxu0 0.0
    %1908 = vmatprep.subr.mxu0 0.0
    %1909 = vmatpush1.msra.mxu0 0.0
    %1910 = vmatprep.subr.mxu0 0.0
    %1911 = vmatpush1.msra.mxu0 0.0
    %1912 = vmatprep.subr.mxu0 0.0
    %1913 = vmatpush1.msra.mxu0 0.0
    %1914 = vmatprep.subr.mxu0 0.0
    %1915 = vmatpush1.msra.mxu0 0.0
    %1916 = vmatprep.subr.mxu0 0.0
    %1917 = vmatpush1.msra.mxu0 0.0
    %1918 = vmatprep.subr.mxu0 0.0
    %1919 = vmatpush1.msra.mxu0 0.0
    %1920 = vmatprep.subr.mxu0 0.0
    %1921 = vmatpush1.msra.mxu0 0.0
    %1922 = vmatprep.subr.mxu0 0.0
    %1923 = vmatpush1.msra.mxu0 0.0
    %1924 = vmatprep.subr.mxu0 0.0
    %1925 = vmatpush1.msra.mxu0 0.0
    %1926 = vmatprep.subr.mxu0 0.0
    %1927 = vmatpush1.msra.mxu0 0.0
    %1928 = vmatprep.subr.mxu0 0.0
    %1929 = vmatpush1.msra.mxu0 0.0
    %1930 = vmatprep.subr.mxu0 0.0
    %1931 = vmatpush1.msra.mxu0 0.0
    %1932 = vmatprep.subr.mxu0 0.0
    %1933 = vmatpush1.msra.mxu0 0.0
    %1934 = vmatprep.mubr.f32.mxu0 0.0
    %1935 = vmatmul.mubr.f32.gmra.mrb[0].mxu0 %v1868
    %v1936 = vpop.f32.mrb[0].mxu0
    %v1937 = vadd.f32 0.0, %v1936
    %v1938 = vpop.f32.mrb[0].mxu0
    %v1939 = vadd.f32 0.0, %v1938
    %1940 = vdwg.mxu0
    %v1941 = vadd.f32 %v1863, %v1937
    %v1942 = vadd.f32 %v1864, %v1939
    %v1943 = vxor.u32 %v1941, 2147483648
    %v1944 = vmul.f32 %v1943, 1.442695
    %v1945 = vpow.pop %v1944
    %v1946 = vadd.f32 %v1945, 1.0
    %v1947 = vrcp.pop %v1946
    %v1948 = vmul.f32 1.0, %v1947
    %v1949 = vtanh.pop %v1942
    %v1950 = vxor.u32 %v1942, 2147483648
    %v1951 = vmul.f32 %v1950, 1.442695
    %v1952 = vpow.pop %v1951
    %v1953 = vadd.f32 %v1952, 1.0
    %v1954 = vrcp.pop %v1953
    %v1955 = vmul.f32 1.0, %v1954
    %v1956 = vmul.f32 %v1948, %v1860
    %v1957 = vmul.f32 %v1948, %v1949
    %1959 = vrot.lane.b32.xlu0 %v1957, 64
    %v1960 = vpop.permute.xlu0 %1959
    %v1962 = vadd.f32 %v1956, %v1960
    %v1963 = vtanh.pop %v1962
    %v1964 = vmul.f32 %v1955, %v1963
    %v1965 = vld [vmem:[#allocation2 + $0x60] sm:$0xff]
    %v1966 = vld [vmem:[#allocation2 + $0x68] sm:$0xff]
    %1968 = vrot.lane.b32.xlu0 %v1964, 64
    %v1969 = vpop.permute.xlu0 %1968
    %v1970 = vsel %vm296, %v1969, 0
    %1972 = vmatprep.subr.mxu0 %v1343
    %1973 = vmatpush1.msra.mxu0 %v1342
    %1974 = vmatprep.subr.mxu0 %v1345
    %1975 = vmatpush1.msra.mxu0 %v1344
    %1976 = vmatprep.subr.mxu0 %v1347
    %1977 = vmatpush1.msra.mxu0 %v1346
    %1978 = vmatprep.subr.mxu0 %v1349
    %1979 = vmatpush1.msra.mxu0 %v1348
    %1980 = vmatprep.subr.mxu0 %v1351
    %1981 = vmatpush1.msra.mxu0 %v1350
    %1982 = vmatprep.subr.mxu0 %v1353
    %1983 = vmatpush1.msra.mxu0 %v1352
    %1984 = vmatprep.subr.mxu0 %v1355
    %1985 = vmatpush1.msra.mxu0 %v1354
    %1986 = vmatprep.subr.mxu0 %v1357
    %1987 = vmatpush1.msra.mxu0 %v1356
    %1988 = vmatprep.subr.mxu0 0.0
    %1989 = vmatpush1.msra.mxu0 0.0
    %1990 = vmatprep.subr.mxu0 0.0
    %1991 = vmatpush1.msra.mxu0 0.0
    %1992 = vmatprep.subr.mxu0 0.0
    %1993 = vmatpush1.msra.mxu0 0.0
    %1994 = vmatprep.subr.mxu0 0.0
    %1995 = vmatpush1.msra.mxu0 0.0
    %1996 = vmatprep.subr.mxu0 0.0
    %1997 = vmatpush1.msra.mxu0 0.0
    %1998 = vmatprep.subr.mxu0 0.0
    %1999 = vmatpush1.msra.mxu0 0.0
    %2000 = vmatprep.subr.mxu0 0.0
    %2001 = vmatpush1.msra.mxu0 0.0
    %2002 = vmatprep.subr.mxu0 0.0
    %2003 = vmatpush1.msra.mxu0 0.0
    %2004 = vmatprep.subr.mxu0 0.0
    %2005 = vmatpush1.msra.mxu0 0.0
    %2006 = vmatprep.subr.mxu0 0.0
    %2007 = vmatpush1.msra.mxu0 0.0
    %2008 = vmatprep.subr.mxu0 0.0
    %2009 = vmatpush1.msra.mxu0 0.0
    %2010 = vmatprep.subr.mxu0 0.0
    %2011 = vmatpush1.msra.mxu0 0.0
    %2012 = vmatprep.subr.mxu0 0.0
    %2013 = vmatpush1.msra.mxu0 0.0
    %2014 = vmatprep.subr.mxu0 0.0
    %2015 = vmatpush1.msra.mxu0 0.0
    %2016 = vmatprep.subr.mxu0 0.0
    %2017 = vmatpush1.msra.mxu0 0.0
    %2018 = vmatprep.subr.mxu0 0.0
    %2019 = vmatpush1.msra.mxu0 0.0
    %2020 = vmatprep.subr.mxu0 0.0
    %2021 = vmatpush1.msra.mxu0 0.0
    %2022 = vmatprep.subr.mxu0 0.0
    %2023 = vmatpush1.msra.mxu0 0.0
    %2024 = vmatprep.subr.mxu0 0.0
    %2025 = vmatpush1.msra.mxu0 0.0
    %2026 = vmatprep.subr.mxu0 0.0
    %2027 = vmatpush1.msra.mxu0 0.0
    %2028 = vmatprep.subr.mxu0 0.0
    %2029 = vmatpush1.msra.mxu0 0.0
    %2030 = vmatprep.subr.mxu0 0.0
    %2031 = vmatpush1.msra.mxu0 0.0
    %2032 = vmatprep.subr.mxu0 0.0
    %2033 = vmatpush1.msra.mxu0 0.0
    %2034 = vmatprep.subr.mxu0 0.0
    %2035 = vmatpush1.msra.mxu0 0.0
    %2036 = vmatprep.mubr.f32.mxu0 0.0
    %2037 = vmatmul.mubr.f32.gmra.mrb[0].mxu0 %v1970
    %v2038 = vpop.f32.mrb[0].mxu0
    %v2039 = vadd.f32 0.0, %v2038
    %v2040 = vpop.f32.mrb[0].mxu0
    %v2041 = vadd.f32 0.0, %v2040
    %2042 = vdwg.mxu0
    %v2043 = vadd.f32 %v1965, %v2039
    %v2044 = vadd.f32 %v1966, %v2041
    %v2045 = vxor.u32 %v2043, 2147483648
    %v2046 = vmul.f32 %v2045, 1.442695
    %v2047 = vpow.pop %v2046
    %v2048 = vadd.f32 %v2047, 1.0
    %v2049 = vrcp.pop %v2048
    %v2050 = vmul.f32 1.0, %v2049
    %v2051 = vtanh.pop %v2044
    %v2052 = vxor.u32 %v2044, 2147483648
    %v2053 = vmul.f32 %v2052, 1.442695
    %v2054 = vpow.pop %v2053
    %v2055 = vadd.f32 %v2054, 1.0
    %v2056 = vrcp.pop %v2055
    %v2057 = vmul.f32 1.0, %v2056
    %v2058 = vmul.f32 %v2050, %v1962
    %v2059 = vmul.f32 %v2050, %v2051
    %2061 = vrot.lane.b32.xlu0 %v2059, 64
    %v2062 = vpop.permute.xlu0 %2061
    %v2064 = vadd.f32 %v2058, %v2062
    %v2065 = vtanh.pop %v2064
    %v2066 = vmul.f32 %v2057, %v2065
    %v2067 = vld [vmem:[#allocation2 + $0x70] sm:$0xff]
    %v2068 = vld [vmem:[#allocation2 + $0x78] sm:$0xff]
    %2070 = vrot.lane.b32.xlu0 %v2066, 64
    %v2071 = vpop.permute.xlu0 %2070
    %v2072 = vsel %vm296, %v2071, 0
    %2074 = vmatprep.subr.mxu0 %v1343
    %2075 = vmatpush1.msra.mxu0 %v1342
    %2076 = vmatprep.subr.mxu0 %v1345
    %2077 = vmatpush1.msra.mxu0 %v1344
    %2078 = vmatprep.subr.mxu0 %v1347
    %2079 = vmatpush1.msra.mxu0 %v1346
    %2080 = vmatprep.subr.mxu0 %v1349
    %2081 = vmatpush1.msra.mxu0 %v1348
    %2082 = vmatprep.subr.mxu0 %v1351
    %2083 = vmatpush1.msra.mxu0 %v1350
    %2084 = vmatprep.subr.mxu0 %v1353
    %2085 = vmatpush1.msra.mxu0 %v1352
    %2086 = vmatprep.subr.mxu0 %v1355
    %2087 = vmatpush1.msra.mxu0 %v1354
    %2088 = vmatprep.subr.mxu0 %v1357
    %2089 = vmatpush1.msra.mxu0 %v1356
    %2090 = vmatprep.subr.mxu0 0.0
    %2091 = vmatpush1.msra.mxu0 0.0
    %2092 = vmatprep.subr.mxu0 0.0
    %2093 = vmatpush1.msra.mxu0 0.0
    %2094 = vmatprep.subr.mxu0 0.0
    %2095 = vmatpush1.msra.mxu0 0.0
    %2096 = vmatprep.subr.mxu0 0.0
    %2097 = vmatpush1.msra.mxu0 0.0
    %2098 = vmatprep.subr.mxu0 0.0
    %2099 = vmatpush1.msra.mxu0 0.0
    %2100 = vmatprep.subr.mxu0 0.0
    %2101 = vmatpush1.msra.mxu0 0.0
    %2102 = vmatprep.subr.mxu0 0.0
    %2103 = vmatpush1.msra.mxu0 0.0
    %2104 = vmatprep.subr.mxu0 0.0
    %2105 = vmatpush1.msra.mxu0 0.0
    %2106 = vmatprep.subr.mxu0 0.0
    %2107 = vmatpush1.msra.mxu0 0.0
    %2108 = vmatprep.subr.mxu0 0.0
    %2109 = vmatpush1.msra.mxu0 0.0
    %2110 = vmatprep.subr.mxu0 0.0
    %2111 = vmatpush1.msra.mxu0 0.0
    %2112 = vmatprep.subr.mxu0 0.0
    %2113 = vmatpush1.msra.mxu0 0.0
    %2114 = vmatprep.subr.mxu0 0.0
    %2115 = vmatpush1.msra.mxu0 0.0
    %2116 = vmatprep.subr.mxu0 0.0
    %2117 = vmatpush1.msra.mxu0 0.0
    %2118 = vmatprep.subr.mxu0 0.0
    %2119 = vmatpush1.msra.mxu0 0.0
    %2120 = vmatprep.subr.mxu0 0.0
    %2121 = vmatpush1.msra.mxu0 0.0
    %2122 = vmatprep.subr.mxu0 0.0
    %2123 = vmatpush1.msra.mxu0 0.0
    %2124 = vmatprep.subr.mxu0 0.0
    %2125 = vmatpush1.msra.mxu0 0.0
    %2126 = vmatprep.subr.mxu0 0.0
    %2127 = vmatpush1.msra.mxu0 0.0
    %2128 = vmatprep.subr.mxu0 0.0
    %2129 = vmatpush1.msra.mxu0 0.0
    %2130 = vmatprep.subr.mxu0 0.0
    %2131 = vmatpush1.msra.mxu0 0.0
    %2132 = vmatprep.subr.mxu0 0.0
    %2133 = vmatpush1.msra.mxu0 0.0
    %2134 = vmatprep.subr.mxu0 0.0
    %2135 = vmatpush1.msra.mxu0 0.0
    %2136 = vmatprep.subr.mxu0 0.0
    %2137 = vmatpush1.msra.mxu0 0.0
    %2138 = vmatprep.mubr.f32.mxu0 0.0
    %2139 = vmatmul.mubr.f32.gmra.mrb[0].mxu0 %v2072
    %v2140 = vpop.f32.mrb[0].mxu0
    %v2141 = vadd.f32 0.0, %v2140
    %v2142 = vpop.f32.mrb[0].mxu0
    %v2143 = vadd.f32 0.0, %v2142
    %2144 = vdwg.mxu0
    %v2145 = vadd.f32 %v2067, %v2141
    %v2146 = vadd.f32 %v2068, %v2143
    %v2147 = vxor.u32 %v2145, 2147483648
    %v2148 = vmul.f32 %v2147, 1.442695
    %v2149 = vpow.pop %v2148
    %v2150 = vadd.f32 %v2149, 1.0
    %v2151 = vrcp.pop %v2150
    %v2152 = vmul.f32 1.0, %v2151
    %v2153 = vtanh.pop %v2146
    %v2154 = vxor.u32 %v2146, 2147483648
    %v2155 = vmul.f32 %v2154, 1.442695
    %v2156 = vpow.pop %v2155
    %v2157 = vadd.f32 %v2156, 1.0
    %v2158 = vrcp.pop %v2157
    %v2159 = vmul.f32 1.0, %v2158
    %v2160 = vmul.f32 %v2152, %v2064
    %v2161 = vmul.f32 %v2152, %v2153
    %2163 = vrot.lane.b32.xlu0 %v2161, 64
    %v2164 = vpop.permute.xlu0 %2163
    %v2166 = vadd.f32 %v2160, %v2164
    %v2167 = vtanh.pop %v2166
    %v2168 = vmul.f32 %v2159, %v2167
    %v2169 = vsel %vm75, 1, 0
    %vm2170 = vcmp.eq.s32.totalorder %v2169, 1
    %2172 = vrot.lane.b32.xlu0 %v2168, 64
    %v2173 = vpop.permute.xlu0 %2172
    %v2176 = vsel %vm2170, %v2173, %v1459
    %v2177 = vld [vmem:[#allocation4] sm:$0xff]
    %v2178 = vld [vmem:[#allocation4 + $0x8] sm:$0xff]
    %v2179 = vld [vmem:[#allocation4 + $0x10] sm:$0xff]
    %v2180 = vld [vmem:[#allocation4 + $0x18] sm:$0xff]
    %v2181 = vld [vmem:[#allocation4 + $0x20] sm:$0xff]
    %v2182 = vld [vmem:[#allocation4 + $0x28] sm:$0xff]
    %v2183 = vld [vmem:[#allocation4 + $0x30] sm:$0xff]
    %v2184 = vld [vmem:[#allocation4 + $0x38] sm:$0xff]
    %v2185 = vld [vmem:[%s8] sm:$0x1]
    %v2187 = vlaneseq
    %v2188 = vshrl.u32 %v2187, 7
    %v2189 = vsub.s32 0, %v2188
    %v2190 = vrot.slane %v2185, %v2189
    %v2193 = vsel %vm296, %v2176, 0
    %2195 = vmatprep.subr.mxu0 0.0
    %2196 = vmatpush1.msra.mxu0 %v2177
    %2197 = vmatprep.subr.mxu0 0.0
    %2198 = vmatpush1.msra.mxu0 %v2178
    %2199 = vmatprep.subr.mxu0 0.0
    %2200 = vmatpush1.msra.mxu0 %v2179
    %2201 = vmatprep.subr.mxu0 0.0
    %2202 = vmatpush1.msra.mxu0 %v2180
    %2203 = vmatprep.subr.mxu0 0.0
    %2204 = vmatpush1.msra.mxu0 %v2181
    %2205 = vmatprep.subr.mxu0 0.0
    %2206 = vmatpush1.msra.mxu0 %v2182
    %2207 = vmatprep.subr.mxu0 0.0
    %2208 = vmatpush1.msra.mxu0 %v2183
    %2209 = vmatprep.subr.mxu0 0.0
    %2210 = vmatpush1.msra.mxu0 %v2184
    %2211 = vmatprep.subr.mxu0 0.0
    %2212 = vmatpush1.msra.mxu0 0.0
    %2213 = vmatprep.subr.mxu0 0.0
    %2214 = vmatpush1.msra.mxu0 0.0
    %2215 = vmatprep.subr.mxu0 0.0
    %2216 = vmatpush1.msra.mxu0 0.0
    %2217 = vmatprep.subr.mxu0 0.0
    %2218 = vmatpush1.msra.mxu0 0.0
    %2219 = vmatprep.subr.mxu0 0.0
    %2220 = vmatpush1.msra.mxu0 0.0
    %2221 = vmatprep.subr.mxu0 0.0
    %2222 = vmatpush1.msra.mxu0 0.0
    %2223 = vmatprep.subr.mxu0 0.0
    %2224 = vmatpush1.msra.mxu0 0.0
    %2225 = vmatprep.subr.mxu0 0.0
    %2226 = vmatpush1.msra.mxu0 0.0
    %2227 = vmatprep.subr.mxu0 0.0
    %2228 = vmatpush1.msra.mxu0 0.0
    %2229 = vmatprep.subr.mxu0 0.0
    %2230 = vmatpush1.msra.mxu0 0.0
    %2231 = vmatprep.subr.mxu0 0.0
    %2232 = vmatpush1.msra.mxu0 0.0
    %2233 = vmatprep.subr.mxu0 0.0
    %2234 = vmatpush1.msra.mxu0 0.0
    %2235 = vmatprep.subr.mxu0 0.0
    %2236 = vmatpush1.msra.mxu0 0.0
    %2237 = vmatprep.subr.mxu0 0.0
    %2238 = vmatpush1.msra.mxu0 0.0
    %2239 = vmatprep.subr.mxu0 0.0
    %2240 = vmatpush1.msra.mxu0 0.0
    %2241 = vmatprep.subr.mxu0 0.0
    %2242 = vmatpush1.msra.mxu0 0.0
    %2243 = vmatprep.subr.mxu0 0.0
    %2244 = vmatpush1.msra.mxu0 0.0
    %2245 = vmatprep.subr.mxu0 0.0
    %2246 = vmatpush1.msra.mxu0 0.0
    %2247 = vmatprep.subr.mxu0 0.0
    %2248 = vmatpush1.msra.mxu0 0.0
    %2249 = vmatprep.subr.mxu0 0.0
    %2250 = vmatpush1.msra.mxu0 0.0
    %2251 = vmatprep.subr.mxu0 0.0
    %2252 = vmatpush1.msra.mxu0 0.0
    %2253 = vmatprep.subr.mxu0 0.0
    %2254 = vmatpush1.msra.mxu0 0.0
    %2255 = vmatprep.subr.mxu0 0.0
    %2256 = vmatpush1.msra.mxu0 0.0
    %2257 = vmatprep.subr.mxu0 0.0
    %2258 = vmatpush1.msra.mxu0 0.0
    %2259 = vmatprep.mubr.f32.mxu0 0.0
    %2260 = vmatmul.mubr.f32.gmra.mrb[0].mxu0 %v2193
    %v2261 = vpop.f32.mrb[0].mxu0
    %v2262 = vadd.f32 %v2190, %v2261
    %v2263 = vpop.f32.mrb[0].mxu0
    %2264 = vdwg.mxu0
    %2265 = vst [vmem:[%s9] sm:$0xff] %v2262
    // Predicated region
    $region42: #{birnn_forward.1} parent=1 // pred_check
      _
    $region43: #{birnn_forward.1} parent=1 // pred_check_branch
      %2267 = sbr.rel (0) target = $region45
    $region44: #{birnn_forward.1} parent=1 // pred_region
      _
    $region45: #{birnn_forward.1} parent=1 // pred_fallthru
      _
    // Predicated region
    $region46: #{birnn_forward.1} parent=1 // pred_check
      _
    $region47: #{birnn_forward.1} parent=1 // pred_check_branch
      %2269 = sbr.rel (0) target = $region49
    $region48: #{birnn_forward.1} parent=1 // pred_region
      _
    $region49: #{birnn_forward.1} parent=1 // pred_fallthru
      _
    %2270 = vsyncpa [#allocation5], 1

</llo_original>
